<compile_context>
chip_gen: v7x
topology: tpu7x:2x2x1
jax: 0.10.0
libtpu: 0.0.40
codegen_flags: <defaults>
</compile_context>

<pallas_src>
import functools

import jax
import jax.numpy as jnp
from jax.experimental import pallas as pl
from jax.experimental.pallas import tpu as pltpu


def _round_up(x, m):
    return (x + m - 1) // m * m


def _row_tiling(m):
    """Pad rows to the sublane grain; split into two tiles when big enough so the
    'parallel' grid axis can shard across both TensorCores on v7x."""
    if m >= 32:
        mp = _round_up(m, 16)
        return mp, mp // 2          # grid = 2
    mp = _round_up(m, 8)
    return mp, mp                   # grid = 1


# ----------------------------- Pallas kernels ------------------------------

def _mm_bias_kernel(x_ref, w_ref, b_ref, o_ref, *, act):
    y = jnp.dot(x_ref[...], w_ref[...], preferred_element_type=jnp.float32)
    y = y + b_ref[...]
    if act == "relu":
        y = jnp.maximum(y, 0.0)
    o_ref[...] = y.astype(o_ref.dtype)


def matmul_bias(x, w, b, act="none"):
    """y = act(x @ w + b).  bf16 operands, f32 accumulation, M-tiled parallel grid."""
    M, K = x.shape
    N = w.shape[1]
    Mp, tm = _row_tiling(M)
    xb = x.astype(jnp.bfloat16)
    if Mp != M:
        xb = jnp.pad(xb, ((0, Mp - M), (0, 0)))
    out = pl.pallas_call(
        functools.partial(_mm_bias_kernel, act=act),
        grid=(Mp // tm,),
        in_specs=[pl.BlockSpec((tm, K), lambda i: (i, 0)),
                  pl.BlockSpec((K, N), lambda i: (0, 0)),
                  pl.BlockSpec((1, N), lambda i: (0, 0))],
        out_specs=pl.BlockSpec((tm, N), lambda i: (i, 0)),
        out_shape=jax.ShapeDtypeStruct((Mp, N), jnp.float32),
        compiler_params=pltpu.CompilerParams(dimension_semantics=("parallel",)),
    )(xb, w.astype(jnp.bfloat16), b.astype(jnp.float32).reshape(1, N))
    return out[:M] if Mp != M else out


def _mixprop_pair_kernel(x2_ref, ak_ref, we_ref, b_ref, o_ref, *, gdep, alpha):
    """Fused gconv1+gconv2 mixprop on a (rows, 2*N*C) slab.
    x2 = [x | x]; ak = blockdiag(norm(A) kron I_C, norm(A^T) kron I_C);
    we[d] = [kron(I_N, W1_d^T); kron(I_N, W2_d^T)] so one matmul per depth serves both."""
    x2 = x2_ref[...].astype(jnp.float32)
    acc = jnp.dot(x2_ref[...], we_ref[0], preferred_element_type=jnp.float32)
    ak = ak_ref[...]
    h = x2
    for d in range(1, gdep + 1):
        h = alpha * x2 + (1.0 - alpha) * jnp.dot(
            h.astype(jnp.bfloat16), ak, preferred_element_type=jnp.float32)
        acc = acc + jnp.dot(h.astype(jnp.bfloat16), we_ref[d],
                            preferred_element_type=jnp.float32)
    o_ref[...] = (acc + b_ref[...]).astype(o_ref.dtype)


def mixprop_pair(xf, akblk, weall, bcomb, gdep, alpha):
    S, NC = xf.shape
    NG = weall.shape[-1]
    Sp, ts = _row_tiling(S)
    x2 = jnp.tile(xf.astype(jnp.bfloat16), (1, 2))          # [x | x], 128 dense lanes
    if Sp != S:
        x2 = jnp.pad(x2, ((0, Sp - S), (0, 0)))
    out = pl.pallas_call(
        functools.partial(_mixprop_pair_kernel, gdep=gdep, alpha=float(alpha)),
        grid=(Sp // ts,),
        in_specs=[pl.BlockSpec((ts, 2 * NC), lambda i: (i, 0)),
                  pl.BlockSpec((2 * NC, 2 * NC), lambda i: (0, 0)),
                  pl.BlockSpec((gdep + 1, 2 * NC, NG), lambda i: (0, 0, 0)),
                  pl.BlockSpec((1, NG), lambda i: (0, 0))],
        out_specs=pl.BlockSpec((ts, NG), lambda i: (i, 0)),
        out_shape=jax.ShapeDtypeStruct((Sp, NG), jnp.float32),
        compiler_params=pltpu.CompilerParams(dimension_semantics=("parallel",)),
    )(x2, akblk.astype(jnp.bfloat16), weall.astype(jnp.bfloat16),
      bcomb.astype(jnp.float32).reshape(1, NG))
    return out[:S] if Sp != S else out


# ------------------------------- glue (JAX) --------------------------------

def conv1xk_nodes(x, w, b, stride=1):
    """Conv2d with kernel (1, K), stride (1, stride), no padding; channels-last input
    x:(B,L,N,Cin), torch weight (Cout,Cin,1,K).  The node axis is folded into the lane
    axis (kron with I_N) so the Pallas matmul writes N*Cout (>=32) dense output lanes."""
    B, L, Nn, Cin = x.shape
    Cout, _, _, K = w.shape
    Lout = (L - K) // stride + 1
    if K == 1:
        xu = x[:, 0:stride * (Lout - 1) + 1:stride]
    else:
        taps = [x[:, k:k + stride * (Lout - 1) + 1:stride] for k in range(K)]
        xu = jnp.concatenate(taps, axis=-1)                  # (B,Lout,N,K*Cin), k-major
    wm = jnp.transpose(w[:, :, 0, :], (2, 1, 0)).reshape(K * Cin, Cout)
    wk = jnp.kron(jnp.eye(Nn, dtype=jnp.float32), wm.astype(jnp.float32))
    bk = jnp.tile(b, Nn)
    y = matmul_bias(xu.reshape(B * Lout, Nn * K * Cin), wk, bk)
    return y.reshape(B, Lout, Nn, Cout)


def layer_block_fwd(x, p):
    # x: (B, L, N, C)
    co = conv1xk_nodes(x, p["w_co"], p["b_co"], stride=2)    # 1x1, stride (1,2)
    c1 = conv1xk_nodes(x, p["w_c1"], p["b_c1"], stride=1)    # 1xK
    L1 = c1.shape[1]
    Lp = (L1 - 3) // 2 + 1
    p0 = c1[:, 0:2 * (Lp - 1) + 1:2]
    p1 = c1[:, 1:1 + 2 * (Lp - 1) + 1:2]
    p2 = c1[:, 2:2 + 2 * (Lp - 1) + 1:2]
    pooled = jnp.maximum(jnp.maximum(p0, p1), p2)            # MaxPool2d((1,3), stride (1,2))
    resid = co[:, -Lp:]
    return jnp.maximum(pooled + resid, 0.0)                  # relu; XLA fuses this


def multi_scale_block_fwd(x, p):
    # start 1x1 conv has Cin=1 (K=1 outer product) -> VPU broadcast in XLA, no launch.
    st = x * p["start_w"][:, 0, 0, 0] + p["start_b"]         # (B,L,N,1)->(B,L,N,C)
    s0 = conv1xk_nodes(st, p["scale0_w"], p["scale0_b"])     # kernel (1, k0)
    s1 = layer_block_fwd(s0, p["lb"])                        # layer_block(k1)
    return [s0, s1]


def topk_mask(adj0, k):
    _, t1 = jax.lax.top_k(adj0, k)                           # per-row top-k (dim=1)
    rows = jnp.arange(adj0.shape[0])[:, None]
    mask = jnp.zeros_like(adj0).at[rows, t1].set(1.0)
    return adj0 * mask


def build_adj_set(gc, scale_set, k, layers, alpha=3.0):
    # 8x8 dots: keep in plain XLA (a Pallas launch here costs more than the compute).
    # NOTE: nodevec1/nodevec2 are chained across layers, exactly as in the torch code.
    nv1, nv2 = gc["emb1"], gc["emb2"]
    adjs = []
    for i in range(layers):
        s = scale_set[i]
        nv1 = jnp.tanh(alpha * ((nv1 * s) @ gc["lin1_w"][i].T + gc["lin1_b"][i]))
        nv2 = jnp.tanh(alpha * ((nv2 * s) @ gc["lin2_w"][i].T + gc["lin2_b"][i]))
        a = nv1 @ nv2.T - nv2 @ nv1.T
        adj0 = jnp.maximum(jnp.tanh(alpha * a), 0.0)
        adjs.append(topk_mask(adj0, k))
    return adjs


def norm_adj(adj):
    a = adj + jnp.eye(adj.shape[0], dtype=adj.dtype)
    return a / a.sum(axis=1, keepdims=True)


def expand_mlp_weight(w, Nn, C, gdep):
    """torch 1x1-conv weight (G, (gdep+1)*C, 1, 1) -> (gdep+1, N*C, N*G) kron expansion."""
    w2 = w[:, :, 0, 0]
    eye_n = jnp.eye(Nn, dtype=jnp.float32)
    return jnp.stack([jnp.kron(eye_n, w2[:, d * C:(d + 1) * C].T)
                      for d in range(gdep + 1)], axis=0)


def prep_mixprop(adj, w1, b1, w2, b2, Nn, C, gdep):
    """Block-diagonal fusion of the two mixprop branches (XLA-side weight prep)."""
    eye_c = jnp.eye(C, dtype=jnp.float32)
    a1 = jnp.kron(norm_adj(adj), eye_c)                      # (NC, NC)
    a2 = jnp.kron(norm_adj(adj.T), eye_c)
    z = jnp.zeros_like(a1)
    akblk = jnp.concatenate([jnp.concatenate([a1, z], axis=1),
                             jnp.concatenate([z, a2], axis=1)], axis=0)   # (2NC, 2NC)
    we1 = expand_mlp_weight(w1, Nn, C, gdep)
    we2 = expand_mlp_weight(w2, Nn, C, gdep)
    weall = jnp.concatenate([we1, we2], axis=1)              # (gdep+1, 2NC, NG)
    bcomb = jnp.tile(b1 + b2, Nn)                            # (N*G,)
    return akblk, weall, bcomb


def magnn_forward(params, inp, cfg):
    # inp: (B, T, N) -> channels-last (B, L=T, N, C=1); matches torch permute+unsqueeze.
    x = inp[..., None].astype(jnp.float32)
    assert x.shape[1] == cfg["seq_length"]
    B, T, Nn, _ = x.shape

    scale = multi_scale_block_fwd(x, params["msb"])
    scale_set = (1.0, 0.8, 0.6, 0.5)
    adj_set = build_adj_set(params["gc"], scale_set, cfg["subgraph_size"], cfg["layers"])

    # TODO(synk): F.dropout on the scale0 input is stochastic; eval-mode identity here.
    # scale0 conv has Cin=1 (tiny (B*N, T)x(T, SC) contraction) -> plain XLA einsum.
    w0 = params["scale0_w"][:, 0, 0, :]                      # (SC, T)
    o0 = jnp.einsum("btn,st->bns", x[..., 0], w0) + params["scale0_b"]
    out = [o0[:, None, :, :]]                                # (B, 1, N, SC)

    G = cfg["gnn_channels"]
    gdep, alpha = cfg["gcn_depth"], cfg["propalpha"]
    for i in range(cfg["layers"]):
        xi = scale[i]                                        # (B, Li, N, C)
        Bi, Li, _, C = xi.shape
        akblk, weall, bcomb = prep_mixprop(
            adj_set[i], params["gconv1_w"][i], params["gconv1_b"][i],
            params["gconv2_w"][i], params["gconv2_b"][i], Nn, C, gdep)
        of = mixprop_pair(xi.reshape(Bi * Li, Nn * C), akblk, weall, bcomb, gdep, alpha)
        oi = of.reshape(Bi, Li, Nn, G)                       # gconv1 + gconv2 output
        out.append(conv1xk_nodes(oi, params["sconv_w"][i], params["sconv_b"][i]))  # 1x3

    outputs = jnp.concatenate(out, axis=1)                   # (B, Lt, N, SC)
    Lt, SC = outputs.shape[1], outputs.shape[3]
    assert Lt == params["pool_w"].shape[1]

    # Fused head: end_conv_1 -> end_conv_2 (only the last out_dim channel survives
    # x[:, -1]) -> out_pool.  All affine, no nonlinearity between -> fold exactly.
    # Tiny (B*N=16, 144, 4) matmul -> plain XLA, no Pallas launch.
    w1m = params["end1_w"][:, :, 0, 0]                       # (E, SC)
    w2_last = params["end2_w"][-1, :, 0, 0]                  # (E,)
    wf = w2_last @ w1m                                       # (SC,)
    bf = jnp.dot(w2_last, params["end1_b"]) + params["end2_b"][-1]
    pw, pb = params["pool_w"], params["pool_b"]              # (out_len, Lt), (out_len,)
    w_head = (pw.T[:, None, :] * wf[None, :, None]).reshape(Lt * SC, -1)
    b_head = bf * pw.sum(axis=1) + pb
    xo = jnp.transpose(outputs, (0, 2, 1, 3)).reshape(B * Nn, Lt * SC)
    y = xo @ w_head + b_head                                 # (B*N, out_len)
    return jnp.transpose(y.reshape(B, Nn, -1), (0, 2, 1))    # (B, out_len, N)


# ----------------------------- parameter init ------------------------------

def _randn(key, shape, scale=0.1):
    return scale * jax.random.normal(key, shape, dtype=jnp.float32)


def init_params(key, cfg):
    keys = iter(jax.random.split(key, 64))
    nk = lambda: next(keys)
    C, SC, G = cfg["conv_channels"], cfg["scale_channels"], cfg["gnn_channels"]
    N, D, T = cfg["num_nodes"], cfg["node_dim"], cfg["seq_length"]
    L, gdep = cfg["layers"], cfg["gcn_depth"]
    k0, k1 = cfg["kernel_set"]
    p = {}
    p["gc"] = dict(
        emb1=_randn(nk(), (N, D)), emb2=_randn(nk(), (N, D)),
        lin1_w=[_randn(nk(), (D, D)) for _ in range(L)],
        lin1_b=[_randn(nk(), (D,)) for _ in range(L)],
        lin2_w=[_randn(nk(), (D, D)) for _ in range(L)],
        lin2_b=[_randn(nk(), (D,)) for _ in range(L)],
    )
    p["msb"] = dict(
        start_w=_randn(nk(), (C, cfg["in_dim"], 1, 1)), start_b=_randn(nk(), (C,)),
        scale0_w=_randn(nk(), (C, C, 1, k0)), scale0_b=_randn(nk(), (C,)),
        lb=dict(w_co=_randn(nk(), (C, C, 1, 1)), b_co=_randn(nk(), (C,)),
                w_c1=_randn(nk(), (C, C, 1, k1)), b_c1=_randn(nk(), (C,))),
    )
    p["scale0_w"] = _randn(nk(), (SC, cfg["in_dim"], 1, T))
    p["scale0_b"] = _randn(nk(), (SC,))
    p["gconv1_w"] = [_randn(nk(), (G, (gdep + 1) * C, 1, 1)) for _ in range(L)]
    p["gconv1_b"] = [_randn(nk(), (G,)) for _ in range(L)]
    p["gconv2_w"] = [_randn(nk(), (G, (gdep + 1) * C, 1, 1)) for _ in range(L)]
    p["gconv2_b"] = [_randn(nk(), (G,)) for _ in range(L)]
    p["sconv_w"] = [_randn(nk(), (SC, G, 1, 3)) for _ in range(L)]
    p["sconv_b"] = [_randn(nk(), (SC,)) for _ in range(L)]
    p["end1_w"] = _randn(nk(), (cfg["end_channels"], SC, 1, 1))
    p["end1_b"] = _randn(nk(), (cfg["end_channels"],))
    p["end2_w"] = _randn(nk(), (cfg["out_dim"], cfg["end_channels"], 1, 1))
    p["end2_b"] = _randn(nk(), (cfg["out_dim"],))
    p["pool_w"] = _randn(nk(), (cfg["out_len"], cfg["in_feature"]))
    p["pool_b"] = _randn(nk(), (cfg["out_len"],))
    return p


# ----------------------------------- main -----------------------------------

if __name__ == "__main__":
    # seq_length must be 30 so that out_pool in_feature (= 1 + 26 + 9 = 36) matches.
    cfg = dict(batch=2, num_nodes=8, seq_length=30, in_dim=1,
               conv_channels=8, scale_channels=4, gnn_channels=8,
               gcn_depth=2, node_dim=8, subgraph_size=4,
               out_dim=2, out_len=4, layers=2, propalpha=0.05,
               end_channels=16, in_feature=36, kernel_set=(3, 5))

    key = jax.random.PRNGKey(0)
    pkey, xkey = jax.random.split(key)
    params = init_params(pkey, cfg)

    # input: (batch, input_len, num_nodes) — matches PyTorch forward's permute(0,2,1)
    x = jax.random.normal(xkey, (cfg["batch"], cfg["seq_length"], cfg["num_nodes"]),
                          dtype=jnp.float32)

    fwd = jax.jit(lambda p, a: magnn_forward(p, a, cfg))
    y = jax.block_until_ready(fwd(params, x))
    assert y.shape == (cfg["batch"], cfg["out_len"], cfg["num_nodes"])
    assert bool(jnp.all(jnp.isfinite(y)))
    print("KERNEL_OK")
</pallas_src>

<mosaic_0001>
module attributes {stable_mosaic.version = 11 : i64} {
  func.func @_mm_bias_kernel(%arg0: i32, %arg1: memref<32x192xbf16, #tpu.memory_space<vmem>>, %arg2: memref<192x64xbf16, #tpu.memory_space<vmem>>, %arg3: memref<1x64xf32, #tpu.memory_space<vmem>>, %arg4: memref<32x64xf32, #tpu.memory_space<vmem>>) attributes {dimension_semantics = [#tpu.dimension_semantics<parallel>], iteration_bounds = array<i64: 2>, scalar_prefetch = 0 : i64, scratch_operands = 0 : i64, tpu.core_type = #tpu.core_type<tc>, window_params = [{transform_indices = @transform_0, window_bounds = array<i64: 32, 192>}, {pipeline_mode = #tpu.pipeline_mode<synchronous>, transform_indices = @transform_1, window_bounds = array<i64: 192, 64>}, {pipeline_mode = #tpu.pipeline_mode<synchronous>, transform_indices = @transform_2, window_bounds = array<i64: 1, 64>}, {transform_indices = @transform_3, window_bounds = array<i64: 32, 64>}]} {
    %c0 = arith.constant 0 : index
    %c0_0 = arith.constant 0 : index
    %0 = vector.load %arg1[%c0, %c0_0] : memref<32x192xbf16, #tpu.memory_space<vmem>>, vector<32x192xbf16>
    %c0_1 = arith.constant 0 : index
    %c0_2 = arith.constant 0 : index
    %1 = vector.load %arg2[%c0_1, %c0_2] : memref<192x64xbf16, #tpu.memory_space<vmem>>, vector<192x64xbf16>
    %cst = arith.constant dense<0.000000e+00> : vector<32x64xf32>
    %2 = tpu.matmul %0, %1, %cst {dimension_numbers = #tpu.dot_dimension_numbers<[1], [0], [0], [1], [0, 0, 1, 1], [], []>} : vector<32x192xbf16>, vector<192x64xbf16>, vector<32x64xf32> -> vector<32x64xf32>
    %c0_3 = arith.constant 0 : index
    %c0_4 = arith.constant 0 : index
    %3 = vector.load %arg3[%c0_3, %c0_4] : memref<1x64xf32, #tpu.memory_space<vmem>>, vector<1x64xf32>
    %4 = vector.broadcast %3 : vector<1x64xf32> to vector<32x64xf32>
    %5 = arith.addf %2, %4 : vector<32x64xf32>
    %c0_5 = arith.constant 0 : index
    %c0_6 = arith.constant 0 : index
    %6 = vector.load %arg4[%c0_5, %c0_6] : memref<32x64xf32, #tpu.memory_space<vmem>>, vector<32x64xf32>
    tpu.vector_store %arg4[%c0_5, %c0_6], %5 {strides = array<i32>} : memref<32x64xf32, #tpu.memory_space<vmem>>, vector<32x64xf32>,
    return
  }
  func.func @transform_0(%arg0: i32) -> (i32, i32) {
    %c0_i32 = arith.constant 0 : i32
    %c0_i32_0 = arith.constant 0 : i32
    return %arg0, %c0_i32 : i32, i32
  }
  func.func @transform_1(%arg0: i32) -> (i32, i32) {
    %c0_i32 = arith.constant 0 : i32
    %c0_i32_0 = arith.constant 0 : i32
    %c0_i32_1 = arith.constant 0 : i32
    return %c0_i32, %c0_i32_0 : i32, i32
  }
  func.func @transform_2(%arg0: i32) -> (i32, i32) {
    %c0_i32 = arith.constant 0 : i32
    %c0_i32_0 = arith.constant 0 : i32
    %c0_i32_1 = arith.constant 0 : i32
    return %c0_i32, %c0_i32_0 : i32, i32
  }
  func.func @transform_3(%arg0: i32) -> (i32, i32) {
    %c0_i32 = arith.constant 0 : i32
    %c0_i32_0 = arith.constant 0 : i32
    return %arg0, %c0_i32 : i32, i32
  }
}

module attributes {stable_mosaic.version = 11 : i64} {
  func.func @_mixprop_pair_kernel(%arg0: i32, %arg1: memref<32x128xbf16, #tpu.memory_space<vmem>>, %arg2: memref<128x128xbf16, #tpu.memory_space<vmem>>, %arg3: memref<3x128x64xbf16, #tpu.memory_space<vmem>>, %arg4: memref<1x64xf32, #tpu.memory_space<vmem>>, %arg5: memref<32x64xf32, #tpu.memory_space<vmem>>) attributes {dimension_semantics = [#tpu.dimension_semantics<parallel>], iteration_bounds = array<i64: 2>, scalar_prefetch = 0 : i64, scratch_operands = 0 : i64, tpu.core_type = #tpu.core_type<tc>, window_params = [{transform_indices = @transform_0, window_bounds = array<i64: 32, 128>}, {pipeline_mode = #tpu.pipeline_mode<synchronous>, transform_indices = @transform_1, window_bounds = array<i64: 128, 128>}, {pipeline_mode = #tpu.pipeline_mode<synchronous>, transform_indices = @transform_2, window_bounds = array<i64: 3, 128, 64>}, {pipeline_mode = #tpu.pipeline_mode<synchronous>, transform_indices = @transform_3, window_bounds = array<i64: 1, 64>}, {transform_indices = @transform_4, window_bounds = array<i64: 32, 64>}]} {
    %c0 = arith.constant 0 : index
    %c0_0 = arith.constant 0 : index
    %0 = vector.load %arg1[%c0, %c0_0] : memref<32x128xbf16, #tpu.memory_space<vmem>>, vector<32x128xbf16>
    %1 = arith.extf %0 : vector<32x128xbf16> to vector<32x128xf32>
    %c0_1 = arith.constant 0 : index
    %c0_2 = arith.constant 0 : index
    %2 = vector.load %arg1[%c0_1, %c0_2] : memref<32x128xbf16, #tpu.memory_space<vmem>>, vector<32x128xbf16>
    %c0_3 = arith.constant 0 : index
    %c0_4 = arith.constant 0 : index
    %c0_5 = arith.constant 0 : index
    %3 = vector.load %arg3[%c0_3, %c0_4, %c0_5] : memref<3x128x64xbf16, #tpu.memory_space<vmem>>, vector<1x128x64xbf16>
    %4 = vector.shape_cast %3 : vector<1x128x64xbf16> to vector<128x64xbf16>
    %cst = arith.constant dense<0.000000e+00> : vector<32x64xf32>
    %5 = tpu.matmul %2, %4, %cst {dimension_numbers = #tpu.dot_dimension_numbers<[1], [0], [0], [1], [0, 0, 1, 1], [], []>} : vector<32x128xbf16>, vector<128x64xbf16>, vector<32x64xf32> -> vector<32x64xf32>
    %c0_6 = arith.constant 0 : index
    %c0_7 = arith.constant 0 : index
    %6 = vector.load %arg2[%c0_6, %c0_7] : memref<128x128xbf16, #tpu.memory_space<vmem>>, vector<128x128xbf16>
    %cst_8 = arith.constant 5.000000e-02 : f32
    %7 = vector.broadcast %cst_8 : f32 to vector<32x128xf32>
    %8 = arith.mulf %7, %1 : vector<32x128xf32>
    %9 = arith.truncf %1 : vector<32x128xf32> to vector<32x128xbf16>
    %cst_9 = arith.constant dense<0.000000e+00> : vector<32x128xf32>
    %10 = tpu.matmul %9, %6, %cst_9 {dimension_numbers = #tpu.dot_dimension_numbers<[1], [0], [0], [1], [0, 0, 1, 1], [], []>} : vector<32x128xbf16>, vector<128x128xbf16>, vector<32x128xf32> -> vector<32x128xf32>
    %cst_10 = arith.constant 0.949999988 : f32
    %11 = vector.broadcast %cst_10 : f32 to vector<32x128xf32>
    %12 = arith.mulf %11, %10 : vector<32x128xf32>
    %13 = arith.addf %8, %12 : vector<32x128xf32>
    %14 = arith.truncf %13 : vector<32x128xf32> to vector<32x128xbf16>
    %c1 = arith.constant 1 : index
    %c0_11 = arith.constant 0 : index
    %c0_12 = arith.constant 0 : index
    %15 = vector.load %arg3[%c1, %c0_11, %c0_12] : memref<3x128x64xbf16, #tpu.memory_space<vmem>>, vector<1x128x64xbf16>
    %16 = vector.shape_cast %15 : vector<1x128x64xbf16> to vector<128x64xbf16>
    %cst_13 = arith.constant dense<0.000000e+00> : vector<32x64xf32>
    %17 = tpu.matmul %14, %16, %cst_13 {dimension_numbers = #tpu.dot_dimension_numbers<[1], [0], [0], [1], [0, 0, 1, 1], [], []>} : vector<32x128xbf16>, vector<128x64xbf16>, vector<32x64xf32> -> vector<32x64xf32>
    %18 = arith.addf %5, %17 : vector<32x64xf32>
    %cst_14 = arith.constant 5.000000e-02 : f32
    %19 = vector.broadcast %cst_14 : f32 to vector<32x128xf32>
    %20 = arith.mulf %19, %1 : vector<32x128xf32>
    %21 = arith.truncf %13 : vector<32x128xf32> to vector<32x128xbf16>
    %cst_15 = arith.constant dense<0.000000e+00> : vector<32x128xf32>
    %22 = tpu.matmul %21, %6, %cst_15 {dimension_numbers = #tpu.dot_dimension_numbers<[1], [0], [0], [1], [0, 0, 1, 1], [], []>} : vector<32x128xbf16>, vector<128x128xbf16>, vector<32x128xf32> -> vector<32x128xf32>
    %cst_16 = arith.constant 0.949999988 : f32
    %23 = vector.broadcast %cst_16 : f32 to vector<32x128xf32>
    %24 = arith.mulf %23, %22 : vector<32x128xf32>
    %25 = arith.addf %20, %24 : vector<32x128xf32>
    %26 = arith.truncf %25 : vector<32x128xf32> to vector<32x128xbf16>
    %c2 = arith.constant 2 : index
    %c0_17 = arith.constant 0 : index
    %c0_18 = arith.constant 0 : index
    %27 = vector.load %arg3[%c2, %c0_17, %c0_18] : memref<3x128x64xbf16, #tpu.memory_space<vmem>>, vector<1x128x64xbf16>
    %28 = vector.shape_cast %27 : vector<1x128x64xbf16> to vector<128x64xbf16>
    %cst_19 = arith.constant dense<0.000000e+00> : vector<32x64xf32>
    %29 = tpu.matmul %26, %28, %cst_19 {dimension_numbers = #tpu.dot_dimension_numbers<[1], [0], [0], [1], [0, 0, 1, 1], [], []>} : vector<32x128xbf16>, vector<128x64xbf16>, vector<32x64xf32> -> vector<32x64xf32>
    %30 = arith.addf %18, %29 : vector<32x64xf32>
    %c0_20 = arith.constant 0 : index
    %c0_21 = arith.constant 0 : index
    %31 = vector.load %arg4[%c0_20, %c0_21] : memref<1x64xf32, #tpu.memory_space<vmem>>, vector<1x64xf32>
    %32 = vector.broadcast %31 : vector<1x64xf32> to vector<32x64xf32>
    %33 = arith.addf %30, %32 : vector<32x64xf32>
    %c0_22 = arith.constant 0 : index
    %c0_23 = arith.constant 0 : index
    %34 = vector.load %arg5[%c0_22, %c0_23] : memref<32x64xf32, #tpu.memory_space<vmem>>, vector<32x64xf32>
    tpu.vector_store %arg5[%c0_22, %c0_23], %33 {strides = array<i32>} : memref<32x64xf32, #tpu.memory_space<vmem>>, vector<32x64xf32>,
    return
  }
  func.func @transform_0(%arg0: i32) -> (i32, i32) {
    %c0_i32 = arith.constant 0 : i32
    %c0_i32_0 = arith.constant 0 : i32
    return %arg0, %c0_i32 : i32, i32
  }
  func.func @transform_1(%arg0: i32) -> (i32, i32) {
    %c0_i32 = arith.constant 0 : i32
    %c0_i32_0 = arith.constant 0 : i32
    %c0_i32_1 = arith.constant 0 : i32
    return %c0_i32, %c0_i32_0 : i32, i32
  }
  func.func @transform_2(%arg0: i32) -> (i32, i32, i32) {
    %c0_i32 = arith.constant 0 : i32
    %c0_i32_0 = arith.constant 0 : i32
    %c0_i32_1 = arith.constant 0 : i32
    %c0_i32_2 = arith.constant 0 : i32
    return %c0_i32, %c0_i32_0, %c0_i32_1 : i32, i32, i32
  }
  func.func @transform_3(%arg0: i32) -> (i32, i32) {
    %c0_i32 = arith.constant 0 : i32
    %c0_i32_0 = arith.constant 0 : i32
    %c0_i32_1 = arith.constant 0 : i32
    return %c0_i32, %c0_i32_0 : i32, i32
  }
  func.func @transform_4(%arg0: i32) -> (i32, i32) {
    %c0_i32 = arith.constant 0 : i32
    %c0_i32_0 = arith.constant 0 : i32
    return %arg0, %c0_i32 : i32, i32
  }
}

module attributes {stable_mosaic.version = 11 : i64} {
  func.func @_mm_bias_kernel(%arg0: i32, %arg1: memref<32x192xbf16, #tpu.memory_space<vmem>>, %arg2: memref<192x32xbf16, #tpu.memory_space<vmem>>, %arg3: memref<1x32xf32, #tpu.memory_space<vmem>>, %arg4: memref<32x32xf32, #tpu.memory_space<vmem>>) attributes {dimension_semantics = [#tpu.dimension_semantics<parallel>], iteration_bounds = array<i64: 2>, scalar_prefetch = 0 : i64, scratch_operands = 0 : i64, tpu.core_type = #tpu.core_type<tc>, window_params = [{transform_indices = @transform_0, window_bounds = array<i64: 32, 192>}, {pipeline_mode = #tpu.pipeline_mode<synchronous>, transform_indices = @transform_1, window_bounds = array<i64: 192, 32>}, {pipeline_mode = #tpu.pipeline_mode<synchronous>, transform_indices = @transform_2, window_bounds = array<i64: 1, 32>}, {transform_indices = @transform_3, window_bounds = array<i64: 32, 32>}]} {
    %c0 = arith.constant 0 : index
    %c0_0 = arith.constant 0 : index
    %0 = vector.load %arg1[%c0, %c0_0] : memref<32x192xbf16, #tpu.memory_space<vmem>>, vector<32x192xbf16>
    %c0_1 = arith.constant 0 : index
    %c0_2 = arith.constant 0 : index
    %1 = vector.load %arg2[%c0_1, %c0_2] : memref<192x32xbf16, #tpu.memory_space<vmem>>, vector<192x32xbf16>
    %cst = arith.constant dense<0.000000e+00> : vector<32x32xf32>
    %2 = tpu.matmul %0, %1, %cst {dimension_numbers = #tpu.dot_dimension_numbers<[1], [0], [0], [1], [0, 0, 1, 1], [], []>} : vector<32x192xbf16>, vector<192x32xbf16>, vector<32x32xf32> -> vector<32x32xf32>
    %c0_3 = arith.constant 0 : index
    %c0_4 = arith.constant 0 : index
    %3 = vector.load %arg3[%c0_3, %c0_4] : memref<1x32xf32, #tpu.memory_space<vmem>>, vector<1x32xf32>
    %4 = vector.broadcast %3 : vector<1x32xf32> to vector<32x32xf32>
    %5 = arith.addf %2, %4 : vector<32x32xf32>
    %c0_5 = arith.constant 0 : index
    %c0_6 = arith.constant 0 : index
    %6 = vector.load %arg4[%c0_5, %c0_6] : memref<32x32xf32, #tpu.memory_space<vmem>>, vector<32x32xf32>
    tpu.vector_store %arg4[%c0_5, %c0_6], %5 {strides = array<i32>} : memref<32x32xf32, #tpu.memory_space<vmem>>, vector<32x32xf32>,
    return
  }
  func.func @transform_0(%arg0: i32) -> (i32, i32) {
    %c0_i32 = arith.constant 0 : i32
    %c0_i32_0 = arith.constant 0 : i32
    return %arg0, %c0_i32 : i32, i32
  }
  func.func @transform_1(%arg0: i32) -> (i32, i32) {
    %c0_i32 = arith.constant 0 : i32
    %c0_i32_0 = arith.constant 0 : i32
    %c0_i32_1 = arith.constant 0 : i32
    return %c0_i32, %c0_i32_0 : i32, i32
  }
  func.func @transform_2(%arg0: i32) -> (i32, i32) {
    %c0_i32 = arith.constant 0 : i32
    %c0_i32_0 = arith.constant 0 : i32
    %c0_i32_1 = arith.constant 0 : i32
    return %c0_i32, %c0_i32_0 : i32, i32
  }
  func.func @transform_3(%arg0: i32) -> (i32, i32) {
    %c0_i32 = arith.constant 0 : i32
    %c0_i32_0 = arith.constant 0 : i32
    return %arg0, %c0_i32 : i32, i32
  }
}

module attributes {stable_mosaic.version = 11 : i64} {
  func.func @_mm_bias_kernel(%arg0: i32, %arg1: memref<32x64xbf16, #tpu.memory_space<vmem>>, %arg2: memref<64x64xbf16, #tpu.memory_space<vmem>>, %arg3: memref<1x64xf32, #tpu.memory_space<vmem>>, %arg4: memref<32x64xf32, #tpu.memory_space<vmem>>) attributes {dimension_semantics = [#tpu.dimension_semantics<parallel>], iteration_bounds = array<i64: 1>, scalar_prefetch = 0 : i64, scratch_operands = 0 : i64, tpu.core_type = #tpu.core_type<tc>, window_params = [{transform_indices = @transform_0, window_bounds = array<i64: 32, 64>}, {pipeline_mode = #tpu.pipeline_mode<synchronous>, transform_indices = @transform_1, window_bounds = array<i64: 64, 64>}, {pipeline_mode = #tpu.pipeline_mode<synchronous>, transform_indices = @transform_2, window_bounds = array<i64: 1, 64>}, {transform_indices = @transform_3, window_bounds = array<i64: 32, 64>}]} {
    %c0 = arith.constant 0 : index
    %c0_0 = arith.constant 0 : index
    %0 = vector.load %arg1[%c0, %c0_0] : memref<32x64xbf16, #tpu.memory_space<vmem>>, vector<32x64xbf16>
    %c0_1 = arith.constant 0 : index
    %c0_2 = arith.constant 0 : index
    %1 = vector.load %arg2[%c0_1, %c0_2] : memref<64x64xbf16, #tpu.memory_space<vmem>>, vector<64x64xbf16>
    %cst = arith.constant dense<0.000000e+00> : vector<32x64xf32>
    %2 = tpu.matmul %0, %1, %cst {dimension_numbers = #tpu.dot_dimension_numbers<[1], [0], [0], [1], [0, 0, 1, 1], [], []>} : vector<32x64xbf16>, vector<64x64xbf16>, vector<32x64xf32> -> vector<32x64xf32>
    %c0_3 = arith.constant 0 : index
    %c0_4 = arith.constant 0 : index
    %3 = vector.load %arg3[%c0_3, %c0_4] : memref<1x64xf32, #tpu.memory_space<vmem>>, vector<1x64xf32>
    %4 = vector.broadcast %3 : vector<1x64xf32> to vector<32x64xf32>
    %5 = arith.addf %2, %4 : vector<32x64xf32>
    %c0_5 = arith.constant 0 : index
    %c0_6 = arith.constant 0 : index
    %6 = vector.load %arg4[%c0_5, %c0_6] : memref<32x64xf32, #tpu.memory_space<vmem>>, vector<32x64xf32>
    tpu.vector_store %arg4[%c0_5, %c0_6], %5 {strides = array<i32>} : memref<32x64xf32, #tpu.memory_space<vmem>>, vector<32x64xf32>,
    return
  }
  func.func @transform_0(%arg0: i32) -> (i32, i32) {
    %c0_i32 = arith.constant 0 : i32
    %c0_i32_0 = arith.constant 0 : i32
    return %arg0, %c0_i32 : i32, i32
  }
  func.func @transform_1(%arg0: i32) -> (i32, i32) {
    %c0_i32 = arith.constant 0 : i32
    %c0_i32_0 = arith.constant 0 : i32
    %c0_i32_1 = arith.constant 0 : i32
    return %c0_i32, %c0_i32_0 : i32, i32
  }
  func.func @transform_2(%arg0: i32) -> (i32, i32) {
    %c0_i32 = arith.constant 0 : i32
    %c0_i32_0 = arith.constant 0 : i32
    %c0_i32_1 = arith.constant 0 : i32
    return %c0_i32, %c0_i32_0 : i32, i32
  }
  func.func @transform_3(%arg0: i32) -> (i32, i32) {
    %c0_i32 = arith.constant 0 : i32
    %c0_i32_0 = arith.constant 0 : i32
    return %arg0, %c0_i32 : i32, i32
  }
}

module attributes {stable_mosaic.version = 11 : i64} {
  func.func @_mm_bias_kernel(%arg0: i32, %arg1: memref<24x320xbf16, #tpu.memory_space<vmem>>, %arg2: memref<320x64xbf16, #tpu.memory_space<vmem>>, %arg3: memref<1x64xf32, #tpu.memory_space<vmem>>, %arg4: memref<24x64xf32, #tpu.memory_space<vmem>>) attributes {dimension_semantics = [#tpu.dimension_semantics<parallel>], iteration_bounds = array<i64: 2>, scalar_prefetch = 0 : i64, scratch_operands = 0 : i64, tpu.core_type = #tpu.core_type<tc>, window_params = [{transform_indices = @transform_0, window_bounds = array<i64: 24, 320>}, {pipeline_mode = #tpu.pipeline_mode<synchronous>, transform_indices = @transform_1, window_bounds = array<i64: 320, 64>}, {pipeline_mode = #tpu.pipeline_mode<synchronous>, transform_indices = @transform_2, window_bounds = array<i64: 1, 64>}, {transform_indices = @transform_3, window_bounds = array<i64: 24, 64>}]} {
    %c0 = arith.constant 0 : index
    %c0_0 = arith.constant 0 : index
    %0 = vector.load %arg1[%c0, %c0_0] : memref<24x320xbf16, #tpu.memory_space<vmem>>, vector<24x320xbf16>
    %c0_1 = arith.constant 0 : index
    %c0_2 = arith.constant 0 : index
    %1 = vector.load %arg2[%c0_1, %c0_2] : memref<320x64xbf16, #tpu.memory_space<vmem>>, vector<320x64xbf16>
    %cst = arith.constant dense<0.000000e+00> : vector<24x64xf32>
    %2 = tpu.matmul %0, %1, %cst {dimension_numbers = #tpu.dot_dimension_numbers<[1], [0], [0], [1], [0, 0, 1, 1], [], []>} : vector<24x320xbf16>, vector<320x64xbf16>, vector<24x64xf32> -> vector<24x64xf32>
    %c0_3 = arith.constant 0 : index
    %c0_4 = arith.constant 0 : index
    %3 = vector.load %arg3[%c0_3, %c0_4] : memref<1x64xf32, #tpu.memory_space<vmem>>, vector<1x64xf32>
    %4 = vector.broadcast %3 : vector<1x64xf32> to vector<24x64xf32>
    %5 = arith.addf %2, %4 : vector<24x64xf32>
    %c0_5 = arith.constant 0 : index
    %c0_6 = arith.constant 0 : index
    %6 = vector.load %arg4[%c0_5, %c0_6] : memref<24x64xf32, #tpu.memory_space<vmem>>, vector<24x64xf32>
    tpu.vector_store %arg4[%c0_5, %c0_6], %5 {strides = array<i32>} : memref<24x64xf32, #tpu.memory_space<vmem>>, vector<24x64xf32>,
    return
  }
  func.func @transform_0(%arg0: i32) -> (i32, i32) {
    %c0_i32 = arith.constant 0 : i32
    %c0_i32_0 = arith.constant 0 : i32
    return %arg0, %c0_i32 : i32, i32
  }
  func.func @transform_1(%arg0: i32) -> (i32, i32) {
    %c0_i32 = arith.constant 0 : i32
    %c0_i32_0 = arith.constant 0 : i32
    %c0_i32_1 = arith.constant 0 : i32
    return %c0_i32, %c0_i32_0 : i32, i32
  }
  func.func @transform_2(%arg0: i32) -> (i32, i32) {
    %c0_i32 = arith.constant 0 : i32
    %c0_i32_0 = arith.constant 0 : i32
    %c0_i32_1 = arith.constant 0 : i32
    return %c0_i32, %c0_i32_0 : i32, i32
  }
  func.func @transform_3(%arg0: i32) -> (i32, i32) {
    %c0_i32 = arith.constant 0 : i32
    %c0_i32_0 = arith.constant 0 : i32
    return %arg0, %c0_i32 : i32, i32
  }
}

module attributes {stable_mosaic.version = 11 : i64} {
  func.func @_mixprop_pair_kernel(%arg0: i32, %arg1: memref<24x128xbf16, #tpu.memory_space<vmem>>, %arg2: memref<128x128xbf16, #tpu.memory_space<vmem>>, %arg3: memref<3x128x64xbf16, #tpu.memory_space<vmem>>, %arg4: memref<1x64xf32, #tpu.memory_space<vmem>>, %arg5: memref<24x64xf32, #tpu.memory_space<vmem>>) attributes {dimension_semantics = [#tpu.dimension_semantics<parallel>], iteration_bounds = array<i64: 1>, scalar_prefetch = 0 : i64, scratch_operands = 0 : i64, tpu.core_type = #tpu.core_type<tc>, window_params = [{transform_indices = @transform_0, window_bounds = array<i64: 24, 128>}, {pipeline_mode = #tpu.pipeline_mode<synchronous>, transform_indices = @transform_1, window_bounds = array<i64: 128, 128>}, {pipeline_mode = #tpu.pipeline_mode<synchronous>, transform_indices = @transform_2, window_bounds = array<i64: 3, 128, 64>}, {pipeline_mode = #tpu.pipeline_mode<synchronous>, transform_indices = @transform_3, window_bounds = array<i64: 1, 64>}, {transform_indices = @transform_4, window_bounds = array<i64: 24, 64>}]} {
    %c0 = arith.constant 0 : index
    %c0_0 = arith.constant 0 : index
    %0 = vector.load %arg1[%c0, %c0_0] : memref<24x128xbf16, #tpu.memory_space<vmem>>, vector<24x128xbf16>
    %1 = arith.extf %0 : vector<24x128xbf16> to vector<24x128xf32>
    %c0_1 = arith.constant 0 : index
    %c0_2 = arith.constant 0 : index
    %2 = vector.load %arg1[%c0_1, %c0_2] : memref<24x128xbf16, #tpu.memory_space<vmem>>, vector<24x128xbf16>
    %c0_3 = arith.constant 0 : index
    %c0_4 = arith.constant 0 : index
    %c0_5 = arith.constant 0 : index
    %3 = vector.load %arg3[%c0_3, %c0_4, %c0_5] : memref<3x128x64xbf16, #tpu.memory_space<vmem>>, vector<1x128x64xbf16>
    %4 = vector.shape_cast %3 : vector<1x128x64xbf16> to vector<128x64xbf16>
    %cst = arith.constant dense<0.000000e+00> : vector<24x64xf32>
    %5 = tpu.matmul %2, %4, %cst {dimension_numbers = #tpu.dot_dimension_numbers<[1], [0], [0], [1], [0, 0, 1, 1], [], []>} : vector<24x128xbf16>, vector<128x64xbf16>, vector<24x64xf32> -> vector<24x64xf32>
    %c0_6 = arith.constant 0 : index
    %c0_7 = arith.constant 0 : index
    %6 = vector.load %arg2[%c0_6, %c0_7] : memref<128x128xbf16, #tpu.memory_space<vmem>>, vector<128x128xbf16>
    %cst_8 = arith.constant 5.000000e-02 : f32
    %7 = vector.broadcast %cst_8 : f32 to vector<24x128xf32>
    %8 = arith.mulf %7, %1 : vector<24x128xf32>
    %9 = arith.truncf %1 : vector<24x128xf32> to vector<24x128xbf16>
    %cst_9 = arith.constant dense<0.000000e+00> : vector<24x128xf32>
    %10 = tpu.matmul %9, %6, %cst_9 {dimension_numbers = #tpu.dot_dimension_numbers<[1], [0], [0], [1], [0, 0, 1, 1], [], []>} : vector<24x128xbf16>, vector<128x128xbf16>, vector<24x128xf32> -> vector<24x128xf32>
    %cst_10 = arith.constant 0.949999988 : f32
    %11 = vector.broadcast %cst_10 : f32 to vector<24x128xf32>
    %12 = arith.mulf %11, %10 : vector<24x128xf32>
    %13 = arith.addf %8, %12 : vector<24x128xf32>
    %14 = arith.truncf %13 : vector<24x128xf32> to vector<24x128xbf16>
    %c1 = arith.constant 1 : index
    %c0_11 = arith.constant 0 : index
    %c0_12 = arith.constant 0 : index
    %15 = vector.load %arg3[%c1, %c0_11, %c0_12] : memref<3x128x64xbf16, #tpu.memory_space<vmem>>, vector<1x128x64xbf16>
    %16 = vector.shape_cast %15 : vector<1x128x64xbf16> to vector<128x64xbf16>
    %cst_13 = arith.constant dense<0.000000e+00> : vector<24x64xf32>
    %17 = tpu.matmul %14, %16, %cst_13 {dimension_numbers = #tpu.dot_dimension_numbers<[1], [0], [0], [1], [0, 0, 1, 1], [], []>} : vector<24x128xbf16>, vector<128x64xbf16>, vector<24x64xf32> -> vector<24x64xf32>
    %18 = arith.addf %5, %17 : vector<24x64xf32>
    %cst_14 = arith.constant 5.000000e-02 : f32
    %19 = vector.broadcast %cst_14 : f32 to vector<24x128xf32>
    %20 = arith.mulf %19, %1 : vector<24x128xf32>
    %21 = arith.truncf %13 : vector<24x128xf32> to vector<24x128xbf16>
    %cst_15 = arith.constant dense<0.000000e+00> : vector<24x128xf32>
    %22 = tpu.matmul %21, %6, %cst_15 {dimension_numbers = #tpu.dot_dimension_numbers<[1], [0], [0], [1], [0, 0, 1, 1], [], []>} : vector<24x128xbf16>, vector<128x128xbf16>, vector<24x128xf32> -> vector<24x128xf32>
    %cst_16 = arith.constant 0.949999988 : f32
    %23 = vector.broadcast %cst_16 : f32 to vector<24x128xf32>
    %24 = arith.mulf %23, %22 : vector<24x128xf32>
    %25 = arith.addf %20, %24 : vector<24x128xf32>
    %26 = arith.truncf %25 : vector<24x128xf32> to vector<24x128xbf16>
    %c2 = arith.constant 2 : index
    %c0_17 = arith.constant 0 : index
    %c0_18 = arith.constant 0 : index
    %27 = vector.load %arg3[%c2, %c0_17, %c0_18] : memref<3x128x64xbf16, #tpu.memory_space<vmem>>, vector<1x128x64xbf16>
    %28 = vector.shape_cast %27 : vector<1x128x64xbf16> to vector<128x64xbf16>
    %cst_19 = arith.constant dense<0.000000e+00> : vector<24x64xf32>
    %29 = tpu.matmul %26, %28, %cst_19 {dimension_numbers = #tpu.dot_dimension_numbers<[1], [0], [0], [1], [0, 0, 1, 1], [], []>} : vector<24x128xbf16>, vector<128x64xbf16>, vector<24x64xf32> -> vector<24x64xf32>
    %30 = arith.addf %18, %29 : vector<24x64xf32>
    %c0_20 = arith.constant 0 : index
    %c0_21 = arith.constant 0 : index
    %31 = vector.load %arg4[%c0_20, %c0_21] : memref<1x64xf32, #tpu.memory_space<vmem>>, vector<1x64xf32>
    %32 = vector.broadcast %31 : vector<1x64xf32> to vector<24x64xf32>
    %33 = arith.addf %30, %32 : vector<24x64xf32>
    %c0_22 = arith.constant 0 : index
    %c0_23 = arith.constant 0 : index
    %34 = vector.load %arg5[%c0_22, %c0_23] : memref<24x64xf32, #tpu.memory_space<vmem>>, vector<24x64xf32>
    tpu.vector_store %arg5[%c0_22, %c0_23], %33 {strides = array<i32>} : memref<24x64xf32, #tpu.memory_space<vmem>>, vector<24x64xf32>,
    return
  }
  func.func @transform_0(%arg0: i32) -> (i32, i32) {
    %c0_i32 = arith.constant 0 : i32
    %c0_i32_0 = arith.constant 0 : i32
    return %arg0, %c0_i32 : i32, i32
  }
  func.func @transform_1(%arg0: i32) -> (i32, i32) {
    %c0_i32 = arith.constant 0 : i32
    %c0_i32_0 = arith.constant 0 : i32
    %c0_i32_1 = arith.constant 0 : i32
    return %c0_i32, %c0_i32_0 : i32, i32
  }
  func.func @transform_2(%arg0: i32) -> (i32, i32, i32) {
    %c0_i32 = arith.constant 0 : i32
    %c0_i32_0 = arith.constant 0 : i32
    %c0_i32_1 = arith.constant 0 : i32
    %c0_i32_2 = arith.constant 0 : i32
    return %c0_i32, %c0_i32_0, %c0_i32_1 : i32, i32, i32
  }
  func.func @transform_3(%arg0: i32) -> (i32, i32) {
    %c0_i32 = arith.constant 0 : i32
    %c0_i32_0 = arith.constant 0 : i32
    %c0_i32_1 = arith.constant 0 : i32
    return %c0_i32, %c0_i32_0 : i32, i32
  }
  func.func @transform_4(%arg0: i32) -> (i32, i32) {
    %c0_i32 = arith.constant 0 : i32
    %c0_i32_0 = arith.constant 0 : i32
    return %arg0, %c0_i32 : i32, i32
  }
}

module attributes {stable_mosaic.version = 11 : i64} {
  func.func @_mm_bias_kernel(%arg0: i32, %arg1: memref<24x192xbf16, #tpu.memory_space<vmem>>, %arg2: memref<192x32xbf16, #tpu.memory_space<vmem>>, %arg3: memref<1x32xf32, #tpu.memory_space<vmem>>, %arg4: memref<24x32xf32, #tpu.memory_space<vmem>>) attributes {dimension_semantics = [#tpu.dimension_semantics<parallel>], iteration_bounds = array<i64: 1>, scalar_prefetch = 0 : i64, scratch_operands = 0 : i64, tpu.core_type = #tpu.core_type<tc>, window_params = [{transform_indices = @transform_0, window_bounds = array<i64: 24, 192>}, {pipeline_mode = #tpu.pipeline_mode<synchronous>, transform_indices = @transform_1, window_bounds = array<i64: 192, 32>}, {pipeline_mode = #tpu.pipeline_mode<synchronous>, transform_indices = @transform_2, window_bounds = array<i64: 1, 32>}, {transform_indices = @transform_3, window_bounds = array<i64: 24, 32>}]} {
    %c0 = arith.constant 0 : index
    %c0_0 = arith.constant 0 : index
    %0 = vector.load %arg1[%c0, %c0_0] : memref<24x192xbf16, #tpu.memory_space<vmem>>, vector<24x192xbf16>
    %c0_1 = arith.constant 0 : index
    %c0_2 = arith.constant 0 : index
    %1 = vector.load %arg2[%c0_1, %c0_2] : memref<192x32xbf16, #tpu.memory_space<vmem>>, vector<192x32xbf16>
    %cst = arith.constant dense<0.000000e+00> : vector<24x32xf32>
    %2 = tpu.matmul %0, %1, %cst {dimension_numbers = #tpu.dot_dimension_numbers<[1], [0], [0], [1], [0, 0, 1, 1], [], []>} : vector<24x192xbf16>, vector<192x32xbf16>, vector<24x32xf32> -> vector<24x32xf32>
    %c0_3 = arith.constant 0 : index
    %c0_4 = arith.constant 0 : index
    %3 = vector.load %arg3[%c0_3, %c0_4] : memref<1x32xf32, #tpu.memory_space<vmem>>, vector<1x32xf32>
    %4 = vector.broadcast %3 : vector<1x32xf32> to vector<24x32xf32>
    %5 = arith.addf %2, %4 : vector<24x32xf32>
    %c0_5 = arith.constant 0 : index
    %c0_6 = arith.constant 0 : index
    %6 = vector.load %arg4[%c0_5, %c0_6] : memref<24x32xf32, #tpu.memory_space<vmem>>, vector<24x32xf32>
    tpu.vector_store %arg4[%c0_5, %c0_6], %5 {strides = array<i32>} : memref<24x32xf32, #tpu.memory_space<vmem>>, vector<24x32xf32>,
    return
  }
  func.func @transform_0(%arg0: i32) -> (i32, i32) {
    %c0_i32 = arith.constant 0 : i32
    %c0_i32_0 = arith.constant 0 : i32
    return %arg0, %c0_i32 : i32, i32
  }
  func.func @transform_1(%arg0: i32) -> (i32, i32) {
    %c0_i32 = arith.constant 0 : i32
    %c0_i32_0 = arith.constant 0 : i32
    %c0_i32_1 = arith.constant 0 : i32
    return %c0_i32, %c0_i32_0 : i32, i32
  }
  func.func @transform_2(%arg0: i32) -> (i32, i32) {
    %c0_i32 = arith.constant 0 : i32
    %c0_i32_0 = arith.constant 0 : i32
    %c0_i32_1 = arith.constant 0 : i32
    return %c0_i32, %c0_i32_0 : i32, i32
  }
  func.func @transform_3(%arg0: i32) -> (i32, i32) {
    %c0_i32 = arith.constant 0 : i32
    %c0_i32_0 = arith.constant 0 : i32
    return %arg0, %c0_i32 : i32, i32
  }
}

</mosaic_0001>

<llo_original>
// kernel: mul.4
$region0: #{mul.4}
  %s0 = inlined_call_operand.vmem [shape: f32[3,8,8], index: 0, kind: input, shape index: {}]
  %s1 = inlined_call_operand.vmem [shape: f32[24,8], index: 1, kind: output, shape index: {}]
  $region1: #{mul.4} parent=0
    #allocation0 [shape = 'u8[32768]{0}', space=vmem, size = 0x8000, scoped, tag = 'scoped mem for input reshape']
    %s3 = sshllo.u32 0, 4
    %s4 = smul.addr 4, 7
    %s5 = scalar_lea.vmem %s0, %s4
    %v6 = vld [vmem:[%s5] sm:%s3]
    %s7 = scalar_lea.vmem [#allocation0], 56
    %8 = vst [vmem:[%s7] sm:%s3] %v6
    %s9 = smul.addr 4, 6
    %s10 = scalar_lea.vmem %s0, %s9
    %v11 = vld [vmem:[%s10] sm:%s3]
    %s12 = scalar_lea.vmem [#allocation0], 48
    %13 = vst [vmem:[%s12] sm:%s3] %v11
    %s14 = smul.addr 4, 5
    %s15 = scalar_lea.vmem %s0, %s14
    %v16 = vld [vmem:[%s15] sm:%s3]
    %s17 = scalar_lea.vmem [#allocation0], 40
    %18 = vst [vmem:[%s17] sm:%s3] %v16
    %s19 = smul.addr 4, 4
    %s20 = scalar_lea.vmem %s0, %s19
    %v21 = vld [vmem:[%s20] sm:%s3]
    %s22 = scalar_lea.vmem [#allocation0], 32
    %23 = vst [vmem:[%s22] sm:%s3] %v21
    %s24 = smul.addr 4, 3
    %s25 = scalar_lea.vmem %s0, %s24
    %v26 = vld [vmem:[%s25] sm:%s3]
    %s27 = scalar_lea.vmem [#allocation0], 24
    %28 = vst [vmem:[%s27] sm:%s3] %v26
    %s29 = smul.addr 4, 2
    %s30 = scalar_lea.vmem %s0, %s29
    %v31 = vld [vmem:[%s30] sm:%s3]
    %s32 = scalar_lea.vmem [#allocation0], 16
    %33 = vst [vmem:[%s32] sm:%s3] %v31
    %s34 = scalar_lea.vmem %s0, 4
    %v35 = vld [vmem:[%s34] sm:%s3]
    %s36 = scalar_lea.vmem [#allocation0], 8
    %37 = vst [vmem:[%s36] sm:%s3] %v35
    %v38 = vld [vmem:[%s0] sm:%s3]
    %39 = vst [vmem:[#allocation0] sm:%s3] %v38
    %v40 = vld [vmem:[#allocation0] ss:$8 sm:$0xf]
    %v41 = vld [vmem:[#allocation0] ss:$8 sm:$0xf0]
    %vm42 = vcmask 1047556
    %v43 = vsel %vm42, %v41, %v40
    %vm44 = vcmask 64512
    %45 = vst.msk [vmem:[%s1] sm:$0xff] %vm44, %v43
    %s46 = scalar_lea.vmem [#allocation0], 2
    %v47 = vld [vmem:[%s46] ss:$8 sm:$0xf]
    %s48 = scalar_lea.vmem [#allocation0], 2
    %v49 = vld [vmem:[%s48] ss:$8 sm:$0xf0]
    %vm50 = vcmask 1047556
    %v51 = vsel %vm50, %v49, %v47
    %52 = vrot.lane.b32.xlu0 %v51, 16
    %v53 = vpop.permute.xlu0 %52
    %vm54 = vcmask 195712
    %55 = vst.msk [vmem:[%s1] sm:$0xff] %vm54, %v53
    %s56 = scalar_lea.vmem [#allocation0], 1
    %v57 = vld [vmem:[%s56] ss:$8 sm:$0xf]
    %s58 = scalar_lea.vmem [#allocation0], 1
    %v59 = vld [vmem:[%s58] ss:$8 sm:$0xf0]
    %vm60 = vcmask 1047556
    %v61 = vsel %vm60, %v59, %v57
    %62 = vrot.lane.b32.xlu0 %v61, 8
    %v63 = vpop.permute.xlu0 %62
    %vm64 = vcmask 130112
    %65 = vst.msk [vmem:[%s1] sm:$0xff] %vm64, %v63

// kernel: tile.48
$region0: #{tile.48}
  #allocation0 [shape = 's32[1]{0}', space=sflag, size = 0x4, scoped, tag = 'scoped memory for tile.48']
  %s0 = inlined_call_operand.vmem [shape: f32[8], index: 0, kind: input, shape index: {}]
  %s1 = inlined_call_operand.vmem [shape: f32[8,8], index: 1, kind: output, shape index: {}]
  // Predicated region
  $region2: #{tile.48} parent=0 // pred_check
    _
  $region3: #{tile.48} parent=0 // pred_check_branch
    %3 = sbr.rel (0) target = $region5
  $region4: #{tile.48} parent=0 // pred_region
    _
  $region5: #{tile.48} parent=0 // pred_fallthru
    _
  %v4 = vld [vmem:[%s0] ss:$0 sm:$0xff]
  %5 = vst [vmem:[%s1] sm:$0xff] %v4

// kernel: tile.49
$region0: #{tile.49}
  %s0 = inlined_call_operand.vmem [shape: f32[8,8], index: 0, kind: input, shape index: {}]
  %s1 = inlined_call_operand.vmem [shape: f32[1,64], index: 1, kind: output, shape index: {}]
  $region1: #{tile.49} parent=0
    #allocation0 [shape = 'u8[4096]{0}', space=vmem, size = 0x1000, scoped, tag = 'scoped mem for output reshape']
    %v2 = vld [vmem:[%s0] sm:$0x1]
    %vm3 = vcmask 64512
    %4 = vst.msk [vmem:[#allocation0] sm:$0x1] %vm3, %v2
    %s5 = scalar_lea.vmem %s0, 7
    %v6 = vld [vmem:[%s5] sm:$0x1]
    %7 = vrot.lane.b32.xlu0 %v6, 56
    %v8 = vpop.permute.xlu0 %7
    %vm9 = vcmask 523712
    %10 = vst.msk [vmem:[#allocation0] sm:$0x1] %vm9, %v8
    %s11 = scalar_lea.vmem %s0, 6
    %v12 = vld [vmem:[%s11] sm:$0x1]
    %13 = vrot.lane.b32.xlu0 %v12, 48
    %v14 = vpop.permute.xlu0 %13
    %vm15 = vcmask 458112
    %16 = vst.msk [vmem:[#allocation0] sm:$0x1] %vm15, %v14
    %s17 = scalar_lea.vmem %s0, 5
    %v18 = vld [vmem:[%s17] sm:$0x1]
    %19 = vrot.lane.b32.xlu0 %v18, 40
    %v20 = vpop.permute.xlu0 %19
    %vm21 = vcmask 392512
    %22 = vst.msk [vmem:[#allocation0] sm:$0x1] %vm21, %v20
    %s23 = scalar_lea.vmem %s0, 4
    %v24 = vld [vmem:[%s23] sm:$0x1]
    %25 = vrot.lane.b32.xlu0 %v24, 32
    %v26 = vpop.permute.xlu0 %25
    %vm27 = vcmask 326912
    %28 = vst.msk [vmem:[#allocation0] sm:$0x1] %vm27, %v26
    %s29 = scalar_lea.vmem %s0, 3
    %v30 = vld [vmem:[%s29] sm:$0x1]
    %31 = vrot.lane.b32.xlu0 %v30, 24
    %v32 = vpop.permute.xlu0 %31
    %vm33 = vcmask 261312
    %34 = vst.msk [vmem:[#allocation0] sm:$0x1] %vm33, %v32
    %s35 = scalar_lea.vmem %s0, 2
    %v36 = vld [vmem:[%s35] sm:$0x1]
    %37 = vrot.lane.b32.xlu0 %v36, 16
    %v38 = vpop.permute.xlu0 %37
    %vm39 = vcmask 195712
    %40 = vst.msk [vmem:[#allocation0] sm:$0x1] %vm39, %v38
    %s41 = scalar_lea.vmem %s0, 1
    %v42 = vld [vmem:[%s41] sm:$0x1]
    %43 = vrot.lane.b32.xlu0 %v42, 8
    %v44 = vpop.permute.xlu0 %43
    %vm45 = vcmask 130112
    %46 = vst.msk [vmem:[#allocation0] sm:$0x1] %vm45, %v44
    %s48 = sshllo.u32 0, 1
    %v50 = vld [vmem:[#allocation0] sm:%s48]
    %s51 = sshllo.u32 0, 1
    %52 = vst [vmem:[%s1] sm:%s51] %v50

// kernel: tile.68
$region0: #{tile.68}
  %s0 = inlined_call_operand.vmem [shape: bf16[56,2,64], index: 0, kind: input, shape index: {}]
  %s1 = inlined_call_operand.vmem [shape: bf16[56,128], index: 1, kind: output, shape index: {}]
  $region1: #{tile.68} parent=0
    #allocation0 [shape = 'u8[28672]{0}', space=vmem, size = 0x7000, scoped, tag = 'scoped mem for output reshape']
    #allocation1 [shape = 'u8[229376]{0}', space=vmem, size = 0x38000, scoped, tag = 'scoped mem for input reshape']
    %s3 = smul.u32 1, 2
    %s4 = sshllo.u32 0, %s3
    %s5 = smul.addr 1, 55
    %s6 = scalar_lea.vmem %s0, %s5
    %s7 = sshrl.u32 %s4, 1
    %s8 = sor.u32 %s4, %s7
    %s9 = sand.u32 %s8, 85
    %s10 = sshrl.u32 %s9, 1
    %s11 = sor.u32 %s9, %s10
    %s12 = sand.u32 51, %s11
    %s13 = sshrl.u32 %s12, 2
    %s14 = sor.u32 %s12, %s13
    %s15 = sand.u32 15, %s14
    %v16 = vld [vmem:[%s6] sm:%s15]
    %v17 = vunpack.c.l.bf16 %v16
    %v18 = vunpack.c.h.bf16 %v16
    %s19 = scalar_lea.vmem [#allocation1], 440
    %20 = vst [vmem:[%s19] sm:%s4] %v17
    %s21 = smul.addr 1, 54
    %s22 = scalar_lea.vmem %s0, %s21
    %s23 = sshrl.u32 %s4, 1
    %s24 = sor.u32 %s4, %s23
    %s25 = sand.u32 %s24, 85
    %s26 = sshrl.u32 %s25, 1
    %s27 = sor.u32 %s25, %s26
    %s28 = sand.u32 51, %s27
    %s29 = sshrl.u32 %s28, 2
    %s30 = sor.u32 %s28, %s29
    %s31 = sand.u32 15, %s30
    %v32 = vld [vmem:[%s22] sm:%s31]
    %v33 = vunpack.c.l.bf16 %v32
    %v34 = vunpack.c.h.bf16 %v32
    %s35 = scalar_lea.vmem [#allocation1], 432
    %36 = vst [vmem:[%s35] sm:%s4] %v33
    %s37 = smul.addr 1, 53
    %s38 = scalar_lea.vmem %s0, %s37
    %s39 = sshrl.u32 %s4, 1
    %s40 = sor.u32 %s4, %s39
    %s41 = sand.u32 %s40, 85
    %s42 = sshrl.u32 %s41, 1
    %s43 = sor.u32 %s41, %s42
    %s44 = sand.u32 51, %s43
    %s45 = sshrl.u32 %s44, 2
    %s46 = sor.u32 %s44, %s45
    %s47 = sand.u32 15, %s46
    %v48 = vld [vmem:[%s38] sm:%s47]
    %v49 = vunpack.c.l.bf16 %v48
    %v50 = vunpack.c.h.bf16 %v48
    %s51 = scalar_lea.vmem [#allocation1], 424
    %52 = vst [vmem:[%s51] sm:%s4] %v49
    %s53 = smul.addr 1, 52
    %s54 = scalar_lea.vmem %s0, %s53
    %s55 = sshrl.u32 %s4, 1
    %s56 = sor.u32 %s4, %s55
    %s57 = sand.u32 %s56, 85
    %s58 = sshrl.u32 %s57, 1
    %s59 = sor.u32 %s57, %s58
    %s60 = sand.u32 51, %s59
    %s61 = sshrl.u32 %s60, 2
    %s62 = sor.u32 %s60, %s61
    %s63 = sand.u32 15, %s62
    %v64 = vld [vmem:[%s54] sm:%s63]
    %v65 = vunpack.c.l.bf16 %v64
    %v66 = vunpack.c.h.bf16 %v64
    %s67 = scalar_lea.vmem [#allocation1], 416
    %68 = vst [vmem:[%s67] sm:%s4] %v65
    %s69 = smul.addr 1, 51
    %s70 = scalar_lea.vmem %s0, %s69
    %s71 = sshrl.u32 %s4, 1
    %s72 = sor.u32 %s4, %s71
    %s73 = sand.u32 %s72, 85
    %s74 = sshrl.u32 %s73, 1
    %s75 = sor.u32 %s73, %s74
    %s76 = sand.u32 51, %s75
    %s77 = sshrl.u32 %s76, 2
    %s78 = sor.u32 %s76, %s77
    %s79 = sand.u32 15, %s78
    %v80 = vld [vmem:[%s70] sm:%s79]
    %v81 = vunpack.c.l.bf16 %v80
    %v82 = vunpack.c.h.bf16 %v80
    %s83 = scalar_lea.vmem [#allocation1], 408
    %84 = vst [vmem:[%s83] sm:%s4] %v81
    %s85 = smul.addr 1, 50
    %s86 = scalar_lea.vmem %s0, %s85
    %s87 = sshrl.u32 %s4, 1
    %s88 = sor.u32 %s4, %s87
    %s89 = sand.u32 %s88, 85
    %s90 = sshrl.u32 %s89, 1
    %s91 = sor.u32 %s89, %s90
    %s92 = sand.u32 51, %s91
    %s93 = sshrl.u32 %s92, 2
    %s94 = sor.u32 %s92, %s93
    %s95 = sand.u32 15, %s94
    %v96 = vld [vmem:[%s86] sm:%s95]
    %v97 = vunpack.c.l.bf16 %v96
    %v98 = vunpack.c.h.bf16 %v96
    %s99 = scalar_lea.vmem [#allocation1], 400
    %100 = vst [vmem:[%s99] sm:%s4] %v97
    %s101 = smul.addr 1, 49
    %s102 = scalar_lea.vmem %s0, %s101
    %s103 = sshrl.u32 %s4, 1
    %s104 = sor.u32 %s4, %s103
    %s105 = sand.u32 %s104, 85
    %s106 = sshrl.u32 %s105, 1
    %s107 = sor.u32 %s105, %s106
    %s108 = sand.u32 51, %s107
    %s109 = sshrl.u32 %s108, 2
    %s110 = sor.u32 %s108, %s109
    %s111 = sand.u32 15, %s110
    %v112 = vld [vmem:[%s102] sm:%s111]
    %v113 = vunpack.c.l.bf16 %v112
    %v114 = vunpack.c.h.bf16 %v112
    %s115 = scalar_lea.vmem [#allocation1], 392
    %116 = vst [vmem:[%s115] sm:%s4] %v113
    %s117 = smul.addr 1, 48
    %s118 = scalar_lea.vmem %s0, %s117
    %s119 = sshrl.u32 %s4, 1
    %s120 = sor.u32 %s4, %s119
    %s121 = sand.u32 %s120, 85
    %s122 = sshrl.u32 %s121, 1
    %s123 = sor.u32 %s121, %s122
    %s124 = sand.u32 51, %s123
    %s125 = sshrl.u32 %s124, 2
    %s126 = sor.u32 %s124, %s125
    %s127 = sand.u32 15, %s126
    %v128 = vld [vmem:[%s118] sm:%s127]
    %v129 = vunpack.c.l.bf16 %v128
    %v130 = vunpack.c.h.bf16 %v128
    %s131 = scalar_lea.vmem [#allocation1], 384
    %132 = vst [vmem:[%s131] sm:%s4] %v129
    %s133 = smul.addr 1, 47
    %s134 = scalar_lea.vmem %s0, %s133
    %s135 = sshrl.u32 %s4, 1
    %s136 = sor.u32 %s4, %s135
    %s137 = sand.u32 %s136, 85
    %s138 = sshrl.u32 %s137, 1
    %s139 = sor.u32 %s137, %s138
    %s140 = sand.u32 51, %s139
    %s141 = sshrl.u32 %s140, 2
    %s142 = sor.u32 %s140, %s141
    %s143 = sand.u32 15, %s142
    %v144 = vld [vmem:[%s134] sm:%s143]
    %v145 = vunpack.c.l.bf16 %v144
    %v146 = vunpack.c.h.bf16 %v144
    %s147 = scalar_lea.vmem [#allocation1], 376
    %148 = vst [vmem:[%s147] sm:%s4] %v145
    %s149 = smul.addr 1, 46
    %s150 = scalar_lea.vmem %s0, %s149
    %s151 = sshrl.u32 %s4, 1
    %s152 = sor.u32 %s4, %s151
    %s153 = sand.u32 %s152, 85
    %s154 = sshrl.u32 %s153, 1
    %s155 = sor.u32 %s153, %s154
    %s156 = sand.u32 51, %s155
    %s157 = sshrl.u32 %s156, 2
    %s158 = sor.u32 %s156, %s157
    %s159 = sand.u32 15, %s158
    %v160 = vld [vmem:[%s150] sm:%s159]
    %v161 = vunpack.c.l.bf16 %v160
    %v162 = vunpack.c.h.bf16 %v160
    %s163 = scalar_lea.vmem [#allocation1], 368
    %164 = vst [vmem:[%s163] sm:%s4] %v161
    %s165 = smul.addr 1, 45
    %s166 = scalar_lea.vmem %s0, %s165
    %s167 = sshrl.u32 %s4, 1
    %s168 = sor.u32 %s4, %s167
    %s169 = sand.u32 %s168, 85
    %s170 = sshrl.u32 %s169, 1
    %s171 = sor.u32 %s169, %s170
    %s172 = sand.u32 51, %s171
    %s173 = sshrl.u32 %s172, 2
    %s174 = sor.u32 %s172, %s173
    %s175 = sand.u32 15, %s174
    %v176 = vld [vmem:[%s166] sm:%s175]
    %v177 = vunpack.c.l.bf16 %v176
    %v178 = vunpack.c.h.bf16 %v176
    %s179 = scalar_lea.vmem [#allocation1], 360
    %180 = vst [vmem:[%s179] sm:%s4] %v177
    %s181 = smul.addr 1, 44
    %s182 = scalar_lea.vmem %s0, %s181
    %s183 = sshrl.u32 %s4, 1
    %s184 = sor.u32 %s4, %s183
    %s185 = sand.u32 %s184, 85
    %s186 = sshrl.u32 %s185, 1
    %s187 = sor.u32 %s185, %s186
    %s188 = sand.u32 51, %s187
    %s189 = sshrl.u32 %s188, 2
    %s190 = sor.u32 %s188, %s189
    %s191 = sand.u32 15, %s190
    %v192 = vld [vmem:[%s182] sm:%s191]
    %v193 = vunpack.c.l.bf16 %v192
    %v194 = vunpack.c.h.bf16 %v192
    %s195 = scalar_lea.vmem [#allocation1], 352
    %196 = vst [vmem:[%s195] sm:%s4] %v193
    %s197 = smul.addr 1, 43
    %s198 = scalar_lea.vmem %s0, %s197
    %s199 = sshrl.u32 %s4, 1
    %s200 = sor.u32 %s4, %s199
    %s201 = sand.u32 %s200, 85
    %s202 = sshrl.u32 %s201, 1
    %s203 = sor.u32 %s201, %s202
    %s204 = sand.u32 51, %s203
    %s205 = sshrl.u32 %s204, 2
    %s206 = sor.u32 %s204, %s205
    %s207 = sand.u32 15, %s206
    %v208 = vld [vmem:[%s198] sm:%s207]
    %v209 = vunpack.c.l.bf16 %v208
    %v210 = vunpack.c.h.bf16 %v208
    %s211 = scalar_lea.vmem [#allocation1], 344
    %212 = vst [vmem:[%s211] sm:%s4] %v209
    %s213 = smul.addr 1, 42
    %s214 = scalar_lea.vmem %s0, %s213
    %s215 = sshrl.u32 %s4, 1
    %s216 = sor.u32 %s4, %s215
    %s217 = sand.u32 %s216, 85
    %s218 = sshrl.u32 %s217, 1
    %s219 = sor.u32 %s217, %s218
    %s220 = sand.u32 51, %s219
    %s221 = sshrl.u32 %s220, 2
    %s222 = sor.u32 %s220, %s221
    %s223 = sand.u32 15, %s222
    %v224 = vld [vmem:[%s214] sm:%s223]
    %v225 = vunpack.c.l.bf16 %v224
    %v226 = vunpack.c.h.bf16 %v224
    %s227 = scalar_lea.vmem [#allocation1], 336
    %228 = vst [vmem:[%s227] sm:%s4] %v225
    %s229 = smul.addr 1, 41
    %s230 = scalar_lea.vmem %s0, %s229
    %s231 = sshrl.u32 %s4, 1
    %s232 = sor.u32 %s4, %s231
    %s233 = sand.u32 %s232, 85
    %s234 = sshrl.u32 %s233, 1
    %s235 = sor.u32 %s233, %s234
    %s236 = sand.u32 51, %s235
    %s237 = sshrl.u32 %s236, 2
    %s238 = sor.u32 %s236, %s237
    %s239 = sand.u32 15, %s238
    %v240 = vld [vmem:[%s230] sm:%s239]
    %v241 = vunpack.c.l.bf16 %v240
    %v242 = vunpack.c.h.bf16 %v240
    %s243 = scalar_lea.vmem [#allocation1], 328
    %244 = vst [vmem:[%s243] sm:%s4] %v241
    %s245 = smul.addr 1, 40
    %s246 = scalar_lea.vmem %s0, %s245
    %s247 = sshrl.u32 %s4, 1
    %s248 = sor.u32 %s4, %s247
    %s249 = sand.u32 %s248, 85
    %s250 = sshrl.u32 %s249, 1
    %s251 = sor.u32 %s249, %s250
    %s252 = sand.u32 51, %s251
    %s253 = sshrl.u32 %s252, 2
    %s254 = sor.u32 %s252, %s253
    %s255 = sand.u32 15, %s254
    %v256 = vld [vmem:[%s246] sm:%s255]
    %v257 = vunpack.c.l.bf16 %v256
    %v258 = vunpack.c.h.bf16 %v256
    %s259 = scalar_lea.vmem [#allocation1], 320
    %260 = vst [vmem:[%s259] sm:%s4] %v257
    %s261 = smul.addr 1, 39
    %s262 = scalar_lea.vmem %s0, %s261
    %s263 = sshrl.u32 %s4, 1
    %s264 = sor.u32 %s4, %s263
    %s265 = sand.u32 %s264, 85
    %s266 = sshrl.u32 %s265, 1
    %s267 = sor.u32 %s265, %s266
    %s268 = sand.u32 51, %s267
    %s269 = sshrl.u32 %s268, 2
    %s270 = sor.u32 %s268, %s269
    %s271 = sand.u32 15, %s270
    %v272 = vld [vmem:[%s262] sm:%s271]
    %v273 = vunpack.c.l.bf16 %v272
    %v274 = vunpack.c.h.bf16 %v272
    %s275 = scalar_lea.vmem [#allocation1], 312
    %276 = vst [vmem:[%s275] sm:%s4] %v273
    %s277 = smul.addr 1, 38
    %s278 = scalar_lea.vmem %s0, %s277
    %s279 = sshrl.u32 %s4, 1
    %s280 = sor.u32 %s4, %s279
    %s281 = sand.u32 %s280, 85
    %s282 = sshrl.u32 %s281, 1
    %s283 = sor.u32 %s281, %s282
    %s284 = sand.u32 51, %s283
    %s285 = sshrl.u32 %s284, 2
    %s286 = sor.u32 %s284, %s285
    %s287 = sand.u32 15, %s286
    %v288 = vld [vmem:[%s278] sm:%s287]
    %v289 = vunpack.c.l.bf16 %v288
    %v290 = vunpack.c.h.bf16 %v288
    %s291 = scalar_lea.vmem [#allocation1], 304
    %292 = vst [vmem:[%s291] sm:%s4] %v289
    %s293 = smul.addr 1, 37
    %s294 = scalar_lea.vmem %s0, %s293
    %s295 = sshrl.u32 %s4, 1
    %s296 = sor.u32 %s4, %s295
    %s297 = sand.u32 %s296, 85
    %s298 = sshrl.u32 %s297, 1
    %s299 = sor.u32 %s297, %s298
    %s300 = sand.u32 51, %s299
    %s301 = sshrl.u32 %s300, 2
    %s302 = sor.u32 %s300, %s301
    %s303 = sand.u32 15, %s302
    %v304 = vld [vmem:[%s294] sm:%s303]
    %v305 = vunpack.c.l.bf16 %v304
    %v306 = vunpack.c.h.bf16 %v304
    %s307 = scalar_lea.vmem [#allocation1], 296
    %308 = vst [vmem:[%s307] sm:%s4] %v305
    %s309 = smul.addr 1, 36
    %s310 = scalar_lea.vmem %s0, %s309
    %s311 = sshrl.u32 %s4, 1
    %s312 = sor.u32 %s4, %s311
    %s313 = sand.u32 %s312, 85
    %s314 = sshrl.u32 %s313, 1
    %s315 = sor.u32 %s313, %s314
    %s316 = sand.u32 51, %s315
    %s317 = sshrl.u32 %s316, 2
    %s318 = sor.u32 %s316, %s317
    %s319 = sand.u32 15, %s318
    %v320 = vld [vmem:[%s310] sm:%s319]
    %v321 = vunpack.c.l.bf16 %v320
    %v322 = vunpack.c.h.bf16 %v320
    %s323 = scalar_lea.vmem [#allocation1], 288
    %324 = vst [vmem:[%s323] sm:%s4] %v321
    %s325 = smul.addr 1, 35
    %s326 = scalar_lea.vmem %s0, %s325
    %s327 = sshrl.u32 %s4, 1
    %s328 = sor.u32 %s4, %s327
    %s329 = sand.u32 %s328, 85
    %s330 = sshrl.u32 %s329, 1
    %s331 = sor.u32 %s329, %s330
    %s332 = sand.u32 51, %s331
    %s333 = sshrl.u32 %s332, 2
    %s334 = sor.u32 %s332, %s333
    %s335 = sand.u32 15, %s334
    %v336 = vld [vmem:[%s326] sm:%s335]
    %v337 = vunpack.c.l.bf16 %v336
    %v338 = vunpack.c.h.bf16 %v336
    %s339 = scalar_lea.vmem [#allocation1], 280
    %340 = vst [vmem:[%s339] sm:%s4] %v337
    %s341 = smul.addr 1, 34
    %s342 = scalar_lea.vmem %s0, %s341
    %s343 = sshrl.u32 %s4, 1
    %s344 = sor.u32 %s4, %s343
    %s345 = sand.u32 %s344, 85
    %s346 = sshrl.u32 %s345, 1
    %s347 = sor.u32 %s345, %s346
    %s348 = sand.u32 51, %s347
    %s349 = sshrl.u32 %s348, 2
    %s350 = sor.u32 %s348, %s349
    %s351 = sand.u32 15, %s350
    %v352 = vld [vmem:[%s342] sm:%s351]
    %v353 = vunpack.c.l.bf16 %v352
    %v354 = vunpack.c.h.bf16 %v352
    %s355 = scalar_lea.vmem [#allocation1], 272
    %356 = vst [vmem:[%s355] sm:%s4] %v353
    %s357 = smul.addr 1, 33
    %s358 = scalar_lea.vmem %s0, %s357
    %s359 = sshrl.u32 %s4, 1
    %s360 = sor.u32 %s4, %s359
    %s361 = sand.u32 %s360, 85
    %s362 = sshrl.u32 %s361, 1
    %s363 = sor.u32 %s361, %s362
    %s364 = sand.u32 51, %s363
    %s365 = sshrl.u32 %s364, 2
    %s366 = sor.u32 %s364, %s365
    %s367 = sand.u32 15, %s366
    %v368 = vld [vmem:[%s358] sm:%s367]
    %v369 = vunpack.c.l.bf16 %v368
    %v370 = vunpack.c.h.bf16 %v368
    %s371 = scalar_lea.vmem [#allocation1], 264
    %372 = vst [vmem:[%s371] sm:%s4] %v369
    %s373 = smul.addr 1, 32
    %s374 = scalar_lea.vmem %s0, %s373
    %s375 = sshrl.u32 %s4, 1
    %s376 = sor.u32 %s4, %s375
    %s377 = sand.u32 %s376, 85
    %s378 = sshrl.u32 %s377, 1
    %s379 = sor.u32 %s377, %s378
    %s380 = sand.u32 51, %s379
    %s381 = sshrl.u32 %s380, 2
    %s382 = sor.u32 %s380, %s381
    %s383 = sand.u32 15, %s382
    %v384 = vld [vmem:[%s374] sm:%s383]
    %v385 = vunpack.c.l.bf16 %v384
    %v386 = vunpack.c.h.bf16 %v384
    %s387 = scalar_lea.vmem [#allocation1], 256
    %388 = vst [vmem:[%s387] sm:%s4] %v385
    %s389 = smul.addr 1, 31
    %s390 = scalar_lea.vmem %s0, %s389
    %s391 = sshrl.u32 %s4, 1
    %s392 = sor.u32 %s4, %s391
    %s393 = sand.u32 %s392, 85
    %s394 = sshrl.u32 %s393, 1
    %s395 = sor.u32 %s393, %s394
    %s396 = sand.u32 51, %s395
    %s397 = sshrl.u32 %s396, 2
    %s398 = sor.u32 %s396, %s397
    %s399 = sand.u32 15, %s398
    %v400 = vld [vmem:[%s390] sm:%s399]
    %v401 = vunpack.c.l.bf16 %v400
    %v402 = vunpack.c.h.bf16 %v400
    %s403 = scalar_lea.vmem [#allocation1], 248
    %404 = vst [vmem:[%s403] sm:%s4] %v401
    %s405 = smul.addr 1, 30
    %s406 = scalar_lea.vmem %s0, %s405
    %s407 = sshrl.u32 %s4, 1
    %s408 = sor.u32 %s4, %s407
    %s409 = sand.u32 %s408, 85
    %s410 = sshrl.u32 %s409, 1
    %s411 = sor.u32 %s409, %s410
    %s412 = sand.u32 51, %s411
    %s413 = sshrl.u32 %s412, 2
    %s414 = sor.u32 %s412, %s413
    %s415 = sand.u32 15, %s414
    %v416 = vld [vmem:[%s406] sm:%s415]
    %v417 = vunpack.c.l.bf16 %v416
    %v418 = vunpack.c.h.bf16 %v416
    %s419 = scalar_lea.vmem [#allocation1], 240
    %420 = vst [vmem:[%s419] sm:%s4] %v417
    %s421 = smul.addr 1, 29
    %s422 = scalar_lea.vmem %s0, %s421
    %s423 = sshrl.u32 %s4, 1
    %s424 = sor.u32 %s4, %s423
    %s425 = sand.u32 %s424, 85
    %s426 = sshrl.u32 %s425, 1
    %s427 = sor.u32 %s425, %s426
    %s428 = sand.u32 51, %s427
    %s429 = sshrl.u32 %s428, 2
    %s430 = sor.u32 %s428, %s429
    %s431 = sand.u32 15, %s430
    %v432 = vld [vmem:[%s422] sm:%s431]
    %v433 = vunpack.c.l.bf16 %v432
    %v434 = vunpack.c.h.bf16 %v432
    %s435 = scalar_lea.vmem [#allocation1], 232
    %436 = vst [vmem:[%s435] sm:%s4] %v433
    %s437 = smul.addr 1, 28
    %s438 = scalar_lea.vmem %s0, %s437
    %s439 = sshrl.u32 %s4, 1
    %s440 = sor.u32 %s4, %s439
    %s441 = sand.u32 %s440, 85
    %s442 = sshrl.u32 %s441, 1
    %s443 = sor.u32 %s441, %s442
    %s444 = sand.u32 51, %s443
    %s445 = sshrl.u32 %s444, 2
    %s446 = sor.u32 %s444, %s445
    %s447 = sand.u32 15, %s446
    %v448 = vld [vmem:[%s438] sm:%s447]
    %v449 = vunpack.c.l.bf16 %v448
    %v450 = vunpack.c.h.bf16 %v448
    %s451 = scalar_lea.vmem [#allocation1], 224
    %452 = vst [vmem:[%s451] sm:%s4] %v449
    %s453 = smul.addr 1, 27
    %s454 = scalar_lea.vmem %s0, %s453
    %s455 = sshrl.u32 %s4, 1
    %s456 = sor.u32 %s4, %s455
    %s457 = sand.u32 %s456, 85
    %s458 = sshrl.u32 %s457, 1
    %s459 = sor.u32 %s457, %s458
    %s460 = sand.u32 51, %s459
    %s461 = sshrl.u32 %s460, 2
    %s462 = sor.u32 %s460, %s461
    %s463 = sand.u32 15, %s462
    %v464 = vld [vmem:[%s454] sm:%s463]
    %v465 = vunpack.c.l.bf16 %v464
    %v466 = vunpack.c.h.bf16 %v464
    %s467 = scalar_lea.vmem [#allocation1], 216
    %468 = vst [vmem:[%s467] sm:%s4] %v465
    %s469 = smul.addr 1, 26
    %s470 = scalar_lea.vmem %s0, %s469
    %s471 = sshrl.u32 %s4, 1
    %s472 = sor.u32 %s4, %s471
    %s473 = sand.u32 %s472, 85
    %s474 = sshrl.u32 %s473, 1
    %s475 = sor.u32 %s473, %s474
    %s476 = sand.u32 51, %s475
    %s477 = sshrl.u32 %s476, 2
    %s478 = sor.u32 %s476, %s477
    %s479 = sand.u32 15, %s478
    %v480 = vld [vmem:[%s470] sm:%s479]
    %v481 = vunpack.c.l.bf16 %v480
    %v482 = vunpack.c.h.bf16 %v480
    %s483 = scalar_lea.vmem [#allocation1], 208
    %484 = vst [vmem:[%s483] sm:%s4] %v481
    %s485 = smul.addr 1, 25
    %s486 = scalar_lea.vmem %s0, %s485
    %s487 = sshrl.u32 %s4, 1
    %s488 = sor.u32 %s4, %s487
    %s489 = sand.u32 %s488, 85
    %s490 = sshrl.u32 %s489, 1
    %s491 = sor.u32 %s489, %s490
    %s492 = sand.u32 51, %s491
    %s493 = sshrl.u32 %s492, 2
    %s494 = sor.u32 %s492, %s493
    %s495 = sand.u32 15, %s494
    %v496 = vld [vmem:[%s486] sm:%s495]
    %v497 = vunpack.c.l.bf16 %v496
    %v498 = vunpack.c.h.bf16 %v496
    %s499 = scalar_lea.vmem [#allocation1], 200
    %500 = vst [vmem:[%s499] sm:%s4] %v497
    %s501 = smul.addr 1, 24
    %s502 = scalar_lea.vmem %s0, %s501
    %s503 = sshrl.u32 %s4, 1
    %s504 = sor.u32 %s4, %s503
    %s505 = sand.u32 %s504, 85
    %s506 = sshrl.u32 %s505, 1
    %s507 = sor.u32 %s505, %s506
    %s508 = sand.u32 51, %s507
    %s509 = sshrl.u32 %s508, 2
    %s510 = sor.u32 %s508, %s509
    %s511 = sand.u32 15, %s510
    %v512 = vld [vmem:[%s502] sm:%s511]
    %v513 = vunpack.c.l.bf16 %v512
    %v514 = vunpack.c.h.bf16 %v512
    %s515 = scalar_lea.vmem [#allocation1], 192
    %516 = vst [vmem:[%s515] sm:%s4] %v513
    %s517 = smul.addr 1, 23
    %s518 = scalar_lea.vmem %s0, %s517
    %s519 = sshrl.u32 %s4, 1
    %s520 = sor.u32 %s4, %s519
    %s521 = sand.u32 %s520, 85
    %s522 = sshrl.u32 %s521, 1
    %s523 = sor.u32 %s521, %s522
    %s524 = sand.u32 51, %s523
    %s525 = sshrl.u32 %s524, 2
    %s526 = sor.u32 %s524, %s525
    %s527 = sand.u32 15, %s526
    %v528 = vld [vmem:[%s518] sm:%s527]
    %v529 = vunpack.c.l.bf16 %v528
    %v530 = vunpack.c.h.bf16 %v528
    %s531 = scalar_lea.vmem [#allocation1], 184
    %532 = vst [vmem:[%s531] sm:%s4] %v529
    %s533 = smul.addr 1, 22
    %s534 = scalar_lea.vmem %s0, %s533
    %s535 = sshrl.u32 %s4, 1
    %s536 = sor.u32 %s4, %s535
    %s537 = sand.u32 %s536, 85
    %s538 = sshrl.u32 %s537, 1
    %s539 = sor.u32 %s537, %s538
    %s540 = sand.u32 51, %s539
    %s541 = sshrl.u32 %s540, 2
    %s542 = sor.u32 %s540, %s541
    %s543 = sand.u32 15, %s542
    %v544 = vld [vmem:[%s534] sm:%s543]
    %v545 = vunpack.c.l.bf16 %v544
    %v546 = vunpack.c.h.bf16 %v544
    %s547 = scalar_lea.vmem [#allocation1], 176
    %548 = vst [vmem:[%s547] sm:%s4] %v545
    %s549 = smul.addr 1, 21
    %s550 = scalar_lea.vmem %s0, %s549
    %s551 = sshrl.u32 %s4, 1
    %s552 = sor.u32 %s4, %s551
    %s553 = sand.u32 %s552, 85
    %s554 = sshrl.u32 %s553, 1
    %s555 = sor.u32 %s553, %s554
    %s556 = sand.u32 51, %s555
    %s557 = sshrl.u32 %s556, 2
    %s558 = sor.u32 %s556, %s557
    %s559 = sand.u32 15, %s558
    %v560 = vld [vmem:[%s550] sm:%s559]
    %v561 = vunpack.c.l.bf16 %v560
    %v562 = vunpack.c.h.bf16 %v560
    %s563 = scalar_lea.vmem [#allocation1], 168
    %564 = vst [vmem:[%s563] sm:%s4] %v561
    %s565 = smul.addr 1, 20
    %s566 = scalar_lea.vmem %s0, %s565
    %s567 = sshrl.u32 %s4, 1
    %s568 = sor.u32 %s4, %s567
    %s569 = sand.u32 %s568, 85
    %s570 = sshrl.u32 %s569, 1
    %s571 = sor.u32 %s569, %s570
    %s572 = sand.u32 51, %s571
    %s573 = sshrl.u32 %s572, 2
    %s574 = sor.u32 %s572, %s573
    %s575 = sand.u32 15, %s574
    %v576 = vld [vmem:[%s566] sm:%s575]
    %v577 = vunpack.c.l.bf16 %v576
    %v578 = vunpack.c.h.bf16 %v576
    %s579 = scalar_lea.vmem [#allocation1], 160
    %580 = vst [vmem:[%s579] sm:%s4] %v577
    %s581 = smul.addr 1, 19
    %s582 = scalar_lea.vmem %s0, %s581
    %s583 = sshrl.u32 %s4, 1
    %s584 = sor.u32 %s4, %s583
    %s585 = sand.u32 %s584, 85
    %s586 = sshrl.u32 %s585, 1
    %s587 = sor.u32 %s585, %s586
    %s588 = sand.u32 51, %s587
    %s589 = sshrl.u32 %s588, 2
    %s590 = sor.u32 %s588, %s589
    %s591 = sand.u32 15, %s590
    %v592 = vld [vmem:[%s582] sm:%s591]
    %v593 = vunpack.c.l.bf16 %v592
    %v594 = vunpack.c.h.bf16 %v592
    %s595 = scalar_lea.vmem [#allocation1], 152
    %596 = vst [vmem:[%s595] sm:%s4] %v593
    %s597 = smul.addr 1, 18
    %s598 = scalar_lea.vmem %s0, %s597
    %s599 = sshrl.u32 %s4, 1
    %s600 = sor.u32 %s4, %s599
    %s601 = sand.u32 %s600, 85
    %s602 = sshrl.u32 %s601, 1
    %s603 = sor.u32 %s601, %s602
    %s604 = sand.u32 51, %s603
    %s605 = sshrl.u32 %s604, 2
    %s606 = sor.u32 %s604, %s605
    %s607 = sand.u32 15, %s606
    %v608 = vld [vmem:[%s598] sm:%s607]
    %v609 = vunpack.c.l.bf16 %v608
    %v610 = vunpack.c.h.bf16 %v608
    %s611 = scalar_lea.vmem [#allocation1], 144
    %612 = vst [vmem:[%s611] sm:%s4] %v609
    %s613 = smul.addr 1, 17
    %s614 = scalar_lea.vmem %s0, %s613
    %s615 = sshrl.u32 %s4, 1
    %s616 = sor.u32 %s4, %s615
    %s617 = sand.u32 %s616, 85
    %s618 = sshrl.u32 %s617, 1
    %s619 = sor.u32 %s617, %s618
    %s620 = sand.u32 51, %s619
    %s621 = sshrl.u32 %s620, 2
    %s622 = sor.u32 %s620, %s621
    %s623 = sand.u32 15, %s622
    %v624 = vld [vmem:[%s614] sm:%s623]
    %v625 = vunpack.c.l.bf16 %v624
    %v626 = vunpack.c.h.bf16 %v624
    %s627 = scalar_lea.vmem [#allocation1], 136
    %628 = vst [vmem:[%s627] sm:%s4] %v625
    %s629 = smul.addr 1, 16
    %s630 = scalar_lea.vmem %s0, %s629
    %s631 = sshrl.u32 %s4, 1
    %s632 = sor.u32 %s4, %s631
    %s633 = sand.u32 %s632, 85
    %s634 = sshrl.u32 %s633, 1
    %s635 = sor.u32 %s633, %s634
    %s636 = sand.u32 51, %s635
    %s637 = sshrl.u32 %s636, 2
    %s638 = sor.u32 %s636, %s637
    %s639 = sand.u32 15, %s638
    %v640 = vld [vmem:[%s630] sm:%s639]
    %v641 = vunpack.c.l.bf16 %v640
    %v642 = vunpack.c.h.bf16 %v640
    %s643 = scalar_lea.vmem [#allocation1], 128
    %644 = vst [vmem:[%s643] sm:%s4] %v641
    %s645 = smul.addr 1, 15
    %s646 = scalar_lea.vmem %s0, %s645
    %s647 = sshrl.u32 %s4, 1
    %s648 = sor.u32 %s4, %s647
    %s649 = sand.u32 %s648, 85
    %s650 = sshrl.u32 %s649, 1
    %s651 = sor.u32 %s649, %s650
    %s652 = sand.u32 51, %s651
    %s653 = sshrl.u32 %s652, 2
    %s654 = sor.u32 %s652, %s653
    %s655 = sand.u32 15, %s654
    %v656 = vld [vmem:[%s646] sm:%s655]
    %v657 = vunpack.c.l.bf16 %v656
    %v658 = vunpack.c.h.bf16 %v656
    %s659 = scalar_lea.vmem [#allocation1], 120
    %660 = vst [vmem:[%s659] sm:%s4] %v657
    %s661 = smul.addr 1, 14
    %s662 = scalar_lea.vmem %s0, %s661
    %s663 = sshrl.u32 %s4, 1
    %s664 = sor.u32 %s4, %s663
    %s665 = sand.u32 %s664, 85
    %s666 = sshrl.u32 %s665, 1
    %s667 = sor.u32 %s665, %s666
    %s668 = sand.u32 51, %s667
    %s669 = sshrl.u32 %s668, 2
    %s670 = sor.u32 %s668, %s669
    %s671 = sand.u32 15, %s670
    %v672 = vld [vmem:[%s662] sm:%s671]
    %v673 = vunpack.c.l.bf16 %v672
    %v674 = vunpack.c.h.bf16 %v672
    %s675 = scalar_lea.vmem [#allocation1], 112
    %676 = vst [vmem:[%s675] sm:%s4] %v673
    %s677 = smul.addr 1, 13
    %s678 = scalar_lea.vmem %s0, %s677
    %s679 = sshrl.u32 %s4, 1
    %s680 = sor.u32 %s4, %s679
    %s681 = sand.u32 %s680, 85
    %s682 = sshrl.u32 %s681, 1
    %s683 = sor.u32 %s681, %s682
    %s684 = sand.u32 51, %s683
    %s685 = sshrl.u32 %s684, 2
    %s686 = sor.u32 %s684, %s685
    %s687 = sand.u32 15, %s686
    %v688 = vld [vmem:[%s678] sm:%s687]
    %v689 = vunpack.c.l.bf16 %v688
    %v690 = vunpack.c.h.bf16 %v688
    %s691 = scalar_lea.vmem [#allocation1], 104
    %692 = vst [vmem:[%s691] sm:%s4] %v689
    %s693 = smul.addr 1, 12
    %s694 = scalar_lea.vmem %s0, %s693
    %s695 = sshrl.u32 %s4, 1
    %s696 = sor.u32 %s4, %s695
    %s697 = sand.u32 %s696, 85
    %s698 = sshrl.u32 %s697, 1
    %s699 = sor.u32 %s697, %s698
    %s700 = sand.u32 51, %s699
    %s701 = sshrl.u32 %s700, 2
    %s702 = sor.u32 %s700, %s701
    %s703 = sand.u32 15, %s702
    %v704 = vld [vmem:[%s694] sm:%s703]
    %v705 = vunpack.c.l.bf16 %v704
    %v706 = vunpack.c.h.bf16 %v704
    %s707 = scalar_lea.vmem [#allocation1], 96
    %708 = vst [vmem:[%s707] sm:%s4] %v705
    %s709 = smul.addr 1, 11
    %s710 = scalar_lea.vmem %s0, %s709
    %s711 = sshrl.u32 %s4, 1
    %s712 = sor.u32 %s4, %s711
    %s713 = sand.u32 %s712, 85
    %s714 = sshrl.u32 %s713, 1
    %s715 = sor.u32 %s713, %s714
    %s716 = sand.u32 51, %s715
    %s717 = sshrl.u32 %s716, 2
    %s718 = sor.u32 %s716, %s717
    %s719 = sand.u32 15, %s718
    %v720 = vld [vmem:[%s710] sm:%s719]
    %v721 = vunpack.c.l.bf16 %v720
    %v722 = vunpack.c.h.bf16 %v720
    %s723 = scalar_lea.vmem [#allocation1], 88
    %724 = vst [vmem:[%s723] sm:%s4] %v721
    %s725 = smul.addr 1, 10
    %s726 = scalar_lea.vmem %s0, %s725
    %s727 = sshrl.u32 %s4, 1
    %s728 = sor.u32 %s4, %s727
    %s729 = sand.u32 %s728, 85
    %s730 = sshrl.u32 %s729, 1
    %s731 = sor.u32 %s729, %s730
    %s732 = sand.u32 51, %s731
    %s733 = sshrl.u32 %s732, 2
    %s734 = sor.u32 %s732, %s733
    %s735 = sand.u32 15, %s734
    %v736 = vld [vmem:[%s726] sm:%s735]
    %v737 = vunpack.c.l.bf16 %v736
    %v738 = vunpack.c.h.bf16 %v736
    %s739 = scalar_lea.vmem [#allocation1], 80
    %740 = vst [vmem:[%s739] sm:%s4] %v737
    %s741 = smul.addr 1, 9
    %s742 = scalar_lea.vmem %s0, %s741
    %s743 = sshrl.u32 %s4, 1
    %s744 = sor.u32 %s4, %s743
    %s745 = sand.u32 %s744, 85
    %s746 = sshrl.u32 %s745, 1
    %s747 = sor.u32 %s745, %s746
    %s748 = sand.u32 51, %s747
    %s749 = sshrl.u32 %s748, 2
    %s750 = sor.u32 %s748, %s749
    %s751 = sand.u32 15, %s750
    %v752 = vld [vmem:[%s742] sm:%s751]
    %v753 = vunpack.c.l.bf16 %v752
    %v754 = vunpack.c.h.bf16 %v752
    %s755 = scalar_lea.vmem [#allocation1], 72
    %756 = vst [vmem:[%s755] sm:%s4] %v753
    %s757 = smul.addr 1, 8
    %s758 = scalar_lea.vmem %s0, %s757
    %s759 = sshrl.u32 %s4, 1
    %s760 = sor.u32 %s4, %s759
    %s761 = sand.u32 %s760, 85
    %s762 = sshrl.u32 %s761, 1
    %s763 = sor.u32 %s761, %s762
    %s764 = sand.u32 51, %s763
    %s765 = sshrl.u32 %s764, 2
    %s766 = sor.u32 %s764, %s765
    %s767 = sand.u32 15, %s766
    %v768 = vld [vmem:[%s758] sm:%s767]
    %v769 = vunpack.c.l.bf16 %v768
    %v770 = vunpack.c.h.bf16 %v768
    %s771 = scalar_lea.vmem [#allocation1], 64
    %772 = vst [vmem:[%s771] sm:%s4] %v769
    %s773 = smul.addr 1, 7
    %s774 = scalar_lea.vmem %s0, %s773
    %s775 = sshrl.u32 %s4, 1
    %s776 = sor.u32 %s4, %s775
    %s777 = sand.u32 %s776, 85
    %s778 = sshrl.u32 %s777, 1
    %s779 = sor.u32 %s777, %s778
    %s780 = sand.u32 51, %s779
    %s781 = sshrl.u32 %s780, 2
    %s782 = sor.u32 %s780, %s781
    %s783 = sand.u32 15, %s782
    %v784 = vld [vmem:[%s774] sm:%s783]
    %v785 = vunpack.c.l.bf16 %v784
    %v786 = vunpack.c.h.bf16 %v784
    %s787 = scalar_lea.vmem [#allocation1], 56
    %788 = vst [vmem:[%s787] sm:%s4] %v785
    %s789 = smul.addr 1, 6
    %s790 = scalar_lea.vmem %s0, %s789
    %s791 = sshrl.u32 %s4, 1
    %s792 = sor.u32 %s4, %s791
    %s793 = sand.u32 %s792, 85
    %s794 = sshrl.u32 %s793, 1
    %s795 = sor.u32 %s793, %s794
    %s796 = sand.u32 51, %s795
    %s797 = sshrl.u32 %s796, 2
    %s798 = sor.u32 %s796, %s797
    %s799 = sand.u32 15, %s798
    %v800 = vld [vmem:[%s790] sm:%s799]
    %v801 = vunpack.c.l.bf16 %v800
    %v802 = vunpack.c.h.bf16 %v800
    %s803 = scalar_lea.vmem [#allocation1], 48
    %804 = vst [vmem:[%s803] sm:%s4] %v801
    %s805 = smul.addr 1, 5
    %s806 = scalar_lea.vmem %s0, %s805
    %s807 = sshrl.u32 %s4, 1
    %s808 = sor.u32 %s4, %s807
    %s809 = sand.u32 %s808, 85
    %s810 = sshrl.u32 %s809, 1
    %s811 = sor.u32 %s809, %s810
    %s812 = sand.u32 51, %s811
    %s813 = sshrl.u32 %s812, 2
    %s814 = sor.u32 %s812, %s813
    %s815 = sand.u32 15, %s814
    %v816 = vld [vmem:[%s806] sm:%s815]
    %v817 = vunpack.c.l.bf16 %v816
    %v818 = vunpack.c.h.bf16 %v816
    %s819 = scalar_lea.vmem [#allocation1], 40
    %820 = vst [vmem:[%s819] sm:%s4] %v817
    %s821 = smul.addr 1, 4
    %s822 = scalar_lea.vmem %s0, %s821
    %s823 = sshrl.u32 %s4, 1
    %s824 = sor.u32 %s4, %s823
    %s825 = sand.u32 %s824, 85
    %s826 = sshrl.u32 %s825, 1
    %s827 = sor.u32 %s825, %s826
    %s828 = sand.u32 51, %s827
    %s829 = sshrl.u32 %s828, 2
    %s830 = sor.u32 %s828, %s829
    %s831 = sand.u32 15, %s830
    %v832 = vld [vmem:[%s822] sm:%s831]
    %v833 = vunpack.c.l.bf16 %v832
    %v834 = vunpack.c.h.bf16 %v832
    %s835 = scalar_lea.vmem [#allocation1], 32
    %836 = vst [vmem:[%s835] sm:%s4] %v833
    %s837 = smul.addr 1, 3
    %s838 = scalar_lea.vmem %s0, %s837
    %s839 = sshrl.u32 %s4, 1
    %s840 = sor.u32 %s4, %s839
    %s841 = sand.u32 %s840, 85
    %s842 = sshrl.u32 %s841, 1
    %s843 = sor.u32 %s841, %s842
    %s844 = sand.u32 51, %s843
    %s845 = sshrl.u32 %s844, 2
    %s846 = sor.u32 %s844, %s845
    %s847 = sand.u32 15, %s846
    %v848 = vld [vmem:[%s838] sm:%s847]
    %v849 = vunpack.c.l.bf16 %v848
    %v850 = vunpack.c.h.bf16 %v848
    %s851 = scalar_lea.vmem [#allocation1], 24
    %852 = vst [vmem:[%s851] sm:%s4] %v849
    %s853 = smul.addr 1, 2
    %s854 = scalar_lea.vmem %s0, %s853
    %s855 = sshrl.u32 %s4, 1
    %s856 = sor.u32 %s4, %s855
    %s857 = sand.u32 %s856, 85
    %s858 = sshrl.u32 %s857, 1
    %s859 = sor.u32 %s857, %s858
    %s860 = sand.u32 51, %s859
    %s861 = sshrl.u32 %s860, 2
    %s862 = sor.u32 %s860, %s861
    %s863 = sand.u32 15, %s862
    %v864 = vld [vmem:[%s854] sm:%s863]
    %v865 = vunpack.c.l.bf16 %v864
    %v866 = vunpack.c.h.bf16 %v864
    %s867 = scalar_lea.vmem [#allocation1], 16
    %868 = vst [vmem:[%s867] sm:%s4] %v865
    %s869 = scalar_lea.vmem %s0, 1
    %s870 = sshrl.u32 %s4, 1
    %s871 = sor.u32 %s4, %s870
    %s872 = sand.u32 %s871, 85
    %s873 = sshrl.u32 %s872, 1
    %s874 = sor.u32 %s872, %s873
    %s875 = sand.u32 51, %s874
    %s876 = sshrl.u32 %s875, 2
    %s877 = sor.u32 %s875, %s876
    %s878 = sand.u32 15, %s877
    %v879 = vld [vmem:[%s869] sm:%s878]
    %v880 = vunpack.c.l.bf16 %v879
    %v881 = vunpack.c.h.bf16 %v879
    %s882 = scalar_lea.vmem [#allocation1], 8
    %883 = vst [vmem:[%s882] sm:%s4] %v880
    %s884 = sshrl.u32 %s4, 1
    %s885 = sor.u32 %s4, %s884
    %s886 = sand.u32 %s885, 85
    %s887 = sshrl.u32 %s886, 1
    %s888 = sor.u32 %s886, %s887
    %s889 = sand.u32 51, %s888
    %s890 = sshrl.u32 %s889, 2
    %s891 = sor.u32 %s889, %s890
    %s892 = sand.u32 15, %s891
    %v893 = vld [vmem:[%s0] sm:%s892]
    %v894 = vunpack.c.l.bf16 %v893
    %v895 = vunpack.c.h.bf16 %v893
    %896 = vst [vmem:[#allocation1] sm:%s4] %v894
    %v897 = vld [vmem:[#allocation1] ss:$8 sm:$0xf]
    %v898 = vld [vmem:[#allocation1] ss:$8 sm:$0xf0]
    %vm899 = vcmask 1047556
    %v900 = vsel %vm899, %v898, %v897
    %vm901 = vcmask 523264
    %902 = vst.msk [vmem:[#allocation0] sm:$0xff] %vm901, %v900
    %s903 = scalar_lea.vmem [#allocation1], 64
    %v904 = vld [vmem:[%s903] ss:$8 sm:$0xf]
    %s905 = scalar_lea.vmem [#allocation1], 64
    %v906 = vld [vmem:[%s905] ss:$8 sm:$0xf0]
    %vm907 = vcmask 1047556
    %v908 = vsel %vm907, %v906, %v904
    %vm909 = vcmask 523264
    %s910 = scalar_lea.vmem [#allocation0], 8
    %911 = vst.msk [vmem:[%s910] sm:$0xff] %vm909, %v908
    %s912 = scalar_lea.vmem [#allocation1], 128
    %v913 = vld [vmem:[%s912] ss:$8 sm:$0xf]
    %s914 = scalar_lea.vmem [#allocation1], 128
    %v915 = vld [vmem:[%s914] ss:$8 sm:$0xf0]
    %vm916 = vcmask 1047556
    %v917 = vsel %vm916, %v915, %v913
    %vm918 = vcmask 523264
    %s919 = scalar_lea.vmem [#allocation0], 16
    %920 = vst.msk [vmem:[%s919] sm:$0xff] %vm918, %v917
    %s921 = scalar_lea.vmem [#allocation1], 192
    %v922 = vld [vmem:[%s921] ss:$8 sm:$0xf]
    %s923 = scalar_lea.vmem [#allocation1], 192
    %v924 = vld [vmem:[%s923] ss:$8 sm:$0xf0]
    %vm925 = vcmask 1047556
    %v926 = vsel %vm925, %v924, %v922
    %vm927 = vcmask 523264
    %s928 = scalar_lea.vmem [#allocation0], 24
    %929 = vst.msk [vmem:[%s928] sm:$0xff] %vm927, %v926
    %s930 = scalar_lea.vmem [#allocation1], 256
    %v931 = vld [vmem:[%s930] ss:$8 sm:$0xf]
    %s932 = scalar_lea.vmem [#allocation1], 256
    %v933 = vld [vmem:[%s932] ss:$8 sm:$0xf0]
    %vm934 = vcmask 1047556
    %v935 = vsel %vm934, %v933, %v931
    %vm936 = vcmask 523264
    %s937 = scalar_lea.vmem [#allocation0], 32
    %938 = vst.msk [vmem:[%s937] sm:$0xff] %vm936, %v935
    %s939 = scalar_lea.vmem [#allocation1], 320
    %v940 = vld [vmem:[%s939] ss:$8 sm:$0xf]
    %s941 = scalar_lea.vmem [#allocation1], 320
    %v942 = vld [vmem:[%s941] ss:$8 sm:$0xf0]
    %vm943 = vcmask 1047556
    %v944 = vsel %vm943, %v942, %v940
    %vm945 = vcmask 523264
    %s946 = scalar_lea.vmem [#allocation0], 40
    %947 = vst.msk [vmem:[%s946] sm:$0xff] %vm945, %v944
    %s948 = scalar_lea.vmem [#allocation1], 384
    %v949 = vld [vmem:[%s948] ss:$8 sm:$0xf]
    %s950 = scalar_lea.vmem [#allocation1], 384
    %v951 = vld [vmem:[%s950] ss:$8 sm:$0xf0]
    %vm952 = vcmask 1047556
    %v953 = vsel %vm952, %v951, %v949
    %vm954 = vcmask 523264
    %s955 = scalar_lea.vmem [#allocation0], 48
    %956 = vst.msk [vmem:[%s955] sm:$0xff] %vm954, %v953
    %s957 = scalar_lea.vmem [#allocation1], 1
    %v958 = vld [vmem:[%s957] ss:$8 sm:$0xf]
    %s959 = scalar_lea.vmem [#allocation1], 1
    %v960 = vld [vmem:[%s959] ss:$8 sm:$0xf0]
    %vm961 = vcmask 1047556
    %v962 = vsel %vm961, %v960, %v958
    %963 = vrot.lane.b32.xlu0 %v962, 64
    %v964 = vpop.permute.xlu0 %963
    %vm965 = vcmask 1048064
    %966 = vst.msk [vmem:[#allocation0] sm:$0xff] %vm965, %v964
    %s967 = scalar_lea.vmem [#allocation1], 257
    %v968 = vld [vmem:[%s967] ss:$8 sm:$0xf]
    %s969 = scalar_lea.vmem [#allocation1], 257
    %v970 = vld [vmem:[%s969] ss:$8 sm:$0xf0]
    %vm971 = vcmask 1047556
    %v972 = vsel %vm971, %v970, %v968
    %973 = vrot.lane.b32.xlu0 %v972, 64
    %v974 = vpop.permute.xlu0 %973
    %vm975 = vcmask 1048064
    %s976 = scalar_lea.vmem [#allocation0], 32
    %977 = vst.msk [vmem:[%s976] sm:$0xff] %vm975, %v974
    %s978 = scalar_lea.vmem [#allocation1], 65
    %v979 = vld [vmem:[%s978] ss:$8 sm:$0xf]
    %s980 = scalar_lea.vmem [#allocation1], 65
    %v981 = vld [vmem:[%s980] ss:$8 sm:$0xf0]
    %vm982 = vcmask 1047556
    %v983 = vsel %vm982, %v981, %v979
    %984 = vrot.lane.b32.xlu0 %v983, 64
    %v985 = vpop.permute.xlu0 %984
    %vm986 = vcmask 1048064
    %s987 = scalar_lea.vmem [#allocation0], 8
    %988 = vst.msk [vmem:[%s987] sm:$0xff] %vm986, %v985
    %s989 = scalar_lea.vmem [#allocation1], 321
    %v990 = vld [vmem:[%s989] ss:$8 sm:$0xf]
    %s991 = scalar_lea.vmem [#allocation1], 321
    %v992 = vld [vmem:[%s991] ss:$8 sm:$0xf0]
    %vm993 = vcmask 1047556
    %v994 = vsel %vm993, %v992, %v990
    %995 = vrot.lane.b32.xlu0 %v994, 64
    %v996 = vpop.permute.xlu0 %995
    %vm997 = vcmask 1048064
    %s998 = scalar_lea.vmem [#allocation0], 40
    %999 = vst.msk [vmem:[%s998] sm:$0xff] %vm997, %v996
    %s1000 = scalar_lea.vmem [#allocation1], 129
    %v1001 = vld [vmem:[%s1000] ss:$8 sm:$0xf]
    %s1002 = scalar_lea.vmem [#allocation1], 129
    %v1003 = vld [vmem:[%s1002] ss:$8 sm:$0xf0]
    %vm1004 = vcmask 1047556
    %v1005 = vsel %vm1004, %v1003, %v1001
    %1006 = vrot.lane.b32.xlu0 %v1005, 64
    %v1007 = vpop.permute.xlu0 %1006
    %vm1008 = vcmask 1048064
    %s1009 = scalar_lea.vmem [#allocation0], 16
    %1010 = vst.msk [vmem:[%s1009] sm:$0xff] %vm1008, %v1007
    %s1011 = scalar_lea.vmem [#allocation1], 385
    %v1012 = vld [vmem:[%s1011] ss:$8 sm:$0xf]
    %s1013 = scalar_lea.vmem [#allocation1], 385
    %v1014 = vld [vmem:[%s1013] ss:$8 sm:$0xf0]
    %vm1015 = vcmask 1047556
    %v1016 = vsel %vm1015, %v1014, %v1012
    %1017 = vrot.lane.b32.xlu0 %v1016, 64
    %v1018 = vpop.permute.xlu0 %1017
    %vm1019 = vcmask 1048064
    %s1020 = scalar_lea.vmem [#allocation0], 48
    %1021 = vst.msk [vmem:[%s1020] sm:$0xff] %vm1019, %v1018
    %s1022 = scalar_lea.vmem [#allocation1], 193
    %v1023 = vld [vmem:[%s1022] ss:$8 sm:$0xf]
    %s1024 = scalar_lea.vmem [#allocation1], 193
    %v1025 = vld [vmem:[%s1024] ss:$8 sm:$0xf0]
    %vm1026 = vcmask 1047556
    %v1027 = vsel %vm1026, %v1025, %v1023
    %1028 = vrot.lane.b32.xlu0 %v1027, 64
    %v1029 = vpop.permute.xlu0 %1028
    %vm1030 = vcmask 1048064
    %s1031 = scalar_lea.vmem [#allocation0], 24
    %1032 = vst.msk [vmem:[%s1031] sm:$0xff] %vm1030, %v1029
    %s1034 = smul.u32 4, 2
    %s1035 = sshllo.u32 0, %s1034
    %s1036 = sshrl.u32 %s1034, 1
    %v1037 = vld [vmem:[#allocation0] sm:%s1035]
    %v1038 = vpack.c.bf16 0.0, %v1037
    %s1039 = sshllo.u32 0, %s1036
    %1040 = vst [vmem:[%s1] sm:%s1039] %v1038
    %s1041 = scalar_lea.vmem [#allocation0], 8
    %v1042 = vld [vmem:[%s1041] sm:%s1035]
    %v1043 = vpack.c.bf16 0.0, %v1042
    %s1044 = sshllo.u32 0, %s1036
    %s1045 = scalar_lea.vmem %s1, 4
    %1046 = vst [vmem:[%s1045] sm:%s1044] %v1043
    %s1047 = scalar_lea.vmem [#allocation0], 16
    %v1048 = vld [vmem:[%s1047] sm:%s1035]
    %v1049 = vpack.c.bf16 0.0, %v1048
    %s1050 = sshllo.u32 0, %s1036
    %s1051 = smul.addr 4, 2
    %s1052 = scalar_lea.vmem %s1, %s1051
    %1053 = vst [vmem:[%s1052] sm:%s1050] %v1049
    %s1054 = scalar_lea.vmem [#allocation0], 24
    %v1055 = vld [vmem:[%s1054] sm:%s1035]
    %v1056 = vpack.c.bf16 0.0, %v1055
    %s1057 = sshllo.u32 0, %s1036
    %s1058 = smul.addr 4, 3
    %s1059 = scalar_lea.vmem %s1, %s1058
    %1060 = vst [vmem:[%s1059] sm:%s1057] %v1056
    %s1061 = scalar_lea.vmem [#allocation0], 32
    %v1062 = vld [vmem:[%s1061] sm:%s1035]
    %v1063 = vpack.c.bf16 0.0, %v1062
    %s1064 = sshllo.u32 0, %s1036
    %s1065 = smul.addr 4, 4
    %s1066 = scalar_lea.vmem %s1, %s1065
    %1067 = vst [vmem:[%s1066] sm:%s1064] %v1063
    %s1068 = scalar_lea.vmem [#allocation0], 40
    %v1069 = vld [vmem:[%s1068] sm:%s1035]
    %v1070 = vpack.c.bf16 0.0, %v1069
    %s1071 = sshllo.u32 0, %s1036
    %s1072 = smul.addr 4, 5
    %s1073 = scalar_lea.vmem %s1, %s1072
    %1074 = vst [vmem:[%s1073] sm:%s1071] %v1070
    %s1075 = scalar_lea.vmem [#allocation0], 48
    %v1076 = vld [vmem:[%s1075] sm:%s1035]
    %v1077 = vpack.c.bf16 0.0, %v1076
    %s1078 = sshllo.u32 0, %s1036
    %s1079 = smul.addr 4, 6
    %s1080 = scalar_lea.vmem %s1, %s1079
    %1081 = vst [vmem:[%s1080] sm:%s1078] %v1077

// kernel: _lambda_.7
$region0: #{_lambda_.7}
  #allocation0 [shape = 'u32[]', space=smem, size = 0x4, offset = 0x4, fixed_abs, tag = 'smem constant byte address 0x4 - core index']
  #allocation1 [shape = 'u32[144,128]{1,0:T(1,128)}', space=vmem, size = 0x12000, scoped, tag = 'internal scratch']
  %s0 = inlined_call_operand.vmem [shape: bf16[64,192], index: 0, kind: input, shape index: {}]
  %s1 = inlined_call_operand.vmem [shape: bf16[192,64], index: 1, kind: input, shape index: {}]
  %s2 = inlined_call_operand.vmem [shape: f32[1,64], index: 2, kind: input, shape index: {}]
  %s3 = inlined_call_operand.vmem [shape: f32[64,64], index: 3, kind: output, shape index: {}]
  %s4 = sld [smem:[#allocation0]]
  $region45: #{_lambda_.7} parent=0
    _
  %s6 = ssub.s32 1, %s4
  %s7 = scalar_select 0, %s6, %s4
  loop: start=0, step=1, limit=4
  $region2: #{_lambda_.7} parent=0 // loop_pre_header
    _
  $region3: #{_lambda_.7} parent=0 // loop_header
    %s9 = sphi 0, %s13
    %p10 = scmp.ge.s32.totalorder %s9, 4
    %s19 = sphi 0, %s21
    %s22 = sphi 0, %s19
    %s23 = sphi 0, %s22
    %s39 = sphi 0, %s23
    %s43 = sphi 0, %s43
    %s45 = sphi 0, %s43
    %s46 = sphi 0, %s45
    %s60 = sphi 0, %s46
    %s64 = sphi 0, %s64
    %s66 = sphi 0, %s64
    %s67 = sphi 0, %s66
    %s81 = sphi 0, %s67
    %s87 = sphi 0, %s89
    %s90 = sphi 0, %s87
    %s91 = sphi 0, %s90
    %s107 = sphi 0, %s91
  $region4: #{_lambda_.7} parent=0 // loop_header_branch
    %12 = sbr.rel (%p10) target = $region8
  $region5: #{_lambda_.7} parent=0 // loop_body
    %s14 = ssub.s32 %s9, 1
    %s15 = ssub.s32 %s9, 2
    %s16 = sadd.s32 %s9, 1
    %s17 = ssub.s32 %s9, %s16
    %p18 = scmp.eq.s32.totalorder %s17, 0
    %s20 = sadd.s32 %s19, 1
    %s21 = scalar_select %p18, %s19, %s20
    %p24 = pneg %p18
    %p25 = scmp.eq.s32.totalorder %s9, 1
    %p26 = por %p24, %p25
    %p27 = scmp.ne.s32.totalorder %s19, %s22
    %p28 = scmp.eq.s32.totalorder %s9, 0
    %p29 = por %p27, %p28
    %p30 = scmp.ne.s32.totalorder %s19, %s22
    %p31 = scmp.eq.s32.totalorder %s14, 1
    %p32 = por %p30, %p31
    %p33 = scmp.ne.s32.totalorder %s22, %s23
    %p34 = scmp.eq.s32.totalorder %s14, 0
    %p35 = por %p33, %p34
    %p36 = scmp.ne.s32.totalorder %s22, %s23
    %p37 = scmp.eq.s32.totalorder %s15, 1
    %p38 = por %p36, %p37
    %p40 = scmp.ne.s32.totalorder %s23, %s39
    %p41 = scmp.eq.s32.totalorder %s15, 0
    %p42 = por %p40, %p41
    %s44 = sadd.s32 %s43, 1
    %p47 = scmp.eq.s32.totalorder %s9, 1
    %p48 = scmp.ne.s32.totalorder %s43, %s45
    %p49 = scmp.eq.s32.totalorder %s9, 0
    %p50 = por %p48, %p49
    %p51 = scmp.ne.s32.totalorder %s43, %s45
    %p52 = scmp.eq.s32.totalorder %s14, 1
    %p53 = por %p51, %p52
    %p54 = scmp.ne.s32.totalorder %s45, %s46
    %p55 = scmp.eq.s32.totalorder %s14, 0
    %p56 = por %p54, %p55
    %p57 = scmp.ne.s32.totalorder %s45, %s46
    %p58 = scmp.eq.s32.totalorder %s15, 1
    %p59 = por %p57, %p58
    %p61 = scmp.ne.s32.totalorder %s46, %s60
    %p62 = scmp.eq.s32.totalorder %s15, 0
    %p63 = por %p61, %p62
    %s65 = sadd.s32 %s64, 1
    %p68 = scmp.eq.s32.totalorder %s9, 1
    %p69 = scmp.ne.s32.totalorder %s64, %s66
    %p70 = scmp.eq.s32.totalorder %s9, 0
    %p71 = por %p69, %p70
    %p72 = scmp.ne.s32.totalorder %s64, %s66
    %p73 = scmp.eq.s32.totalorder %s14, 1
    %p74 = por %p72, %p73
    %p75 = scmp.ne.s32.totalorder %s66, %s67
    %p76 = scmp.eq.s32.totalorder %s14, 0
    %p77 = por %p75, %p76
    %p78 = scmp.ne.s32.totalorder %s66, %s67
    %p79 = scmp.eq.s32.totalorder %s15, 1
    %p80 = por %p78, %p79
    %p82 = scmp.ne.s32.totalorder %s67, %s81
    %p83 = scmp.eq.s32.totalorder %s15, 0
    %p84 = por %p82, %p83
    %s85 = ssub.s32 %s9, %s16
    %p86 = scmp.eq.s32.totalorder %s85, 0
    %s88 = sadd.s32 %s87, 1
    %s89 = scalar_select %p86, %s87, %s88
    %p92 = pneg %p86
    %p93 = scmp.eq.s32.totalorder %s9, 1
    %p94 = por %p92, %p93
    %p95 = scmp.ne.s32.totalorder %s87, %s90
    %p96 = scmp.eq.s32.totalorder %s9, 0
    %p97 = por %p95, %p96
    %p98 = scmp.ne.s32.totalorder %s87, %s90
    %p99 = scmp.eq.s32.totalorder %s14, 1
    %p100 = por %p98, %p99
    %p101 = scmp.ne.s32.totalorder %s90, %s91
    %p102 = scmp.eq.s32.totalorder %s14, 0
    %p103 = por %p101, %p102
    %p104 = scmp.ne.s32.totalorder %s90, %s91
    %p105 = scmp.eq.s32.totalorder %s15, 1
    %p106 = por %p104, %p105
    %p108 = scmp.ne.s32.totalorder %s91, %s107
    %p109 = scmp.eq.s32.totalorder %s15, 0
    %p110 = por %p108, %p109
    %p111 = scmp.le.s32.totalorder 1, %s9
    %p112 = scmp.lt.s32.totalorder %s9, 3
    %p113 = pnand %p111, %p112
    %p114 = pneg %p113
    // Predicated region
    $region9: #{_lambda_.7} parent=5 // pred_check
      _
    $region10: #{_lambda_.7} parent=5 // pred_check_branch
      %116 = sbr.rel (%p113) target = $region12
    $region11: #{_lambda_.7} parent=5 // pred_region
      %s117 = ssub.s32 %s9, 1
      // Predicated region
      $region13: #{_lambda_.7} parent=11 // pred_check
        %p118 = pneg %p56
      $region14: #{_lambda_.7} parent=11 // pred_check_branch
        %120 = sbr.rel (%p118) target = $region16
      $region15: #{_lambda_.7} parent=11 // pred_region
        _
      $region16: #{_lambda_.7} parent=11 // pred_fallthru
        _
      // Predicated region
      $region17: #{_lambda_.7} parent=11 // pred_check
        %p121 = pneg %p77
      $region18: #{_lambda_.7} parent=11 // pred_check_branch
        %123 = sbr.rel (%p121) target = $region20
      $region19: #{_lambda_.7} parent=11 // pred_region
        _
      $region20: #{_lambda_.7} parent=11 // pred_fallthru
        _
    $region12: #{_lambda_.7} parent=5 // pred_fallthru
      _
    %p124 = scmp.lt.s32.totalorder %s9, 2
    // Predicated region
    $region21: #{_lambda_.7} parent=5 // pred_check
      %p125 = pneg %p124
    $region22: #{_lambda_.7} parent=5 // pred_check_branch
      %127 = sbr.rel (%p125) target = $region24
    $region23: #{_lambda_.7} parent=5 // pred_region
      // Predicated region
      $region25: #{_lambda_.7} parent=23 // pred_check
        %p128 = pneg %p29
      $region26: #{_lambda_.7} parent=23 // pred_check_branch
        %130 = sbr.rel (%p128) target = $region28
      $region27: #{_lambda_.7} parent=23 // pred_region
        %s131 = smul.u32 4, %s9
        %p132 = scmp.lt.s32.totalorder %s131, 7
        %s133 = scalar_select %p132, %s131, 7
        %s134 = smul.addr %s133, 2
        %s135 = smul.addr %s134, 4
        %s136 = scalar_lea.vmem %s0, %s135
        %s137 = smul.u32 4, %s9
      $region28: #{_lambda_.7} parent=23 // pred_fallthru
        _
    $region24: #{_lambda_.7} parent=5 // pred_fallthru
      _
    %p138 = scmp.le.s32.totalorder 1, %s9
    %p139 = scmp.lt.s32.totalorder %s9, 3
    %p140 = pnand %p138, %p139
    %p141 = pneg %p140
    // Predicated region
    $region29: #{_lambda_.7} parent=5 // pred_check
      _
    $region30: #{_lambda_.7} parent=5 // pred_check_branch
      %143 = sbr.rel (%p140) target = $region32
    $region31: #{_lambda_.7} parent=5 // pred_region
      %s144 = ssub.s32 %s9, 1
      %s145 = smul.u32 4, %s14
      %p146 = scmp.lt.s32.totalorder %s145, 7
      %s147 = scalar_select %p146, %s145, 7
      %s148 = smul.addr %s147, 2
      %s149 = smul.addr %s148, 4
      %s150 = scalar_lea.vmem %s0, %s149
      %p151 = pneg %p35
      %p152 = pneg %p32
      %p153 = pneg %p56
      %p154 = pneg %p53
      %p155 = pneg %p77
      %p156 = pneg %p74
      %p157 = pneg %p103
      %p158 = pneg %p100
      %s159 = smul.u32 4, %s14
      %p160 = scmp.lt.s32.totalorder %s159, 7
      %s161 = scalar_select %p160, %s159, 7
      %s162 = smul.addr %s161, 8
      %s163 = scalar_lea.vmem %s3, %s162
      %s164 = smul.u32 4, %s14
      %p165 = scmp.lt.s32.totalorder %s164, 7
      %s166 = scalar_select %p165, %s164, 7
      %s167 = smul.addr %s166, 2
      %s168 = smul.addr %s167, 4
      %s169 = scalar_lea.vmem %s0, %s168
      %s170 = smul.u32 4, %s14
      %s171 = smul.u32 4, %s14
      %p172 = scmp.lt.s32.totalorder %s171, 7
      %s173 = scalar_select %p172, %s171, 7
      %s174 = smul.addr %s173, 8
      %s175 = scalar_lea.vmem %s3, %s174
      %s176 = smul.u32 4, %s14
      %v178 = vld [vmem:[%s169] sm:$0xff]
      %v179 = vld [vmem:[%s169 + $0x8] sm:$0xff]
      %v180 = vld [vmem:[%s169 + $0x10] sm:$0xff]
      %v181 = vld [vmem:[%s169 + $0x18] sm:$0xff]
      %v182 = vld [vmem:[%s1] sm:$0xf]
      %v183 = vld [vmem:[%s1 + $0x4] sm:$0xf]
      %v184 = vld [vmem:[%s1 + $0x8] sm:$0xf]
      %v185 = vld [vmem:[%s1 + $0xc] sm:$0xf]
      %v186 = vld [vmem:[%s1 + $0x10] sm:$0xf]
      %v187 = vld [vmem:[%s1 + $0x14] sm:$0xf]
      %v188 = vld [vmem:[%s1 + $0x18] sm:$0xf]
      %v189 = vld [vmem:[%s1 + $0x1c] sm:$0xf]
      %v190 = vld [vmem:[%s1 + $0x20] sm:$0xf]
      %v191 = vld [vmem:[%s1 + $0x24] sm:$0xf]
      %v192 = vld [vmem:[%s1 + $0x28] sm:$0xf]
      %v193 = vld [vmem:[%s1 + $0x2c] sm:$0xf]
      %v194 = vld [vmem:[%s1 + $0x30] sm:$0xf]
      %v195 = vld [vmem:[%s1 + $0x34] sm:$0xf]
      %v196 = vld [vmem:[%s1 + $0x38] sm:$0xf]
      %v197 = vld [vmem:[%s1 + $0x3c] sm:$0xf]
      %v198 = vld [vmem:[%s1 + $0x40] sm:$0xf]
      %v199 = vld [vmem:[%s1 + $0x44] sm:$0xf]
      %v200 = vld [vmem:[%s1 + $0x48] sm:$0xf]
      %v201 = vld [vmem:[%s1 + $0x4c] sm:$0xf]
      %v202 = vld [vmem:[%s1 + $0x50] sm:$0xf]
      %v203 = vld [vmem:[%s1 + $0x54] sm:$0xf]
      %v204 = vld [vmem:[%s1 + $0x58] sm:$0xf]
      %v205 = vld [vmem:[%s1 + $0x5c] sm:$0xf]
      %v206 = vld [vmem:[%s2] sm:$0x1]
      %v208 = vlaneseq
      %v209 = vshrl.u32 %v208, 7
      %v210 = vsub.s32 0, %v209
      %v211 = vrot.slane %v206, %v210
      %v217 = vunpack.c.l.b16 %v178
      %v218 = vunpack.c.h.b16 %v178
      %v219 = vunpack.c.l.b16 %v179
      %v220 = vunpack.c.h.b16 %v179
      %v221 = vunpack.c.l.b16 %v180
      %v222 = vunpack.c.h.b16 %v180
      %v223 = vunpack.c.l.b16 %v181
      %v224 = vunpack.c.h.b16 %v181
      %v225 = vpack.c.b16 %v219, %v217
      %v226 = vpack.c.b16 %v220, %v218
      %v227 = vpack.c.b16 %v223, %v221
      %v228 = vpack.c.b16 %v224, %v222
      %v255 = vunpack.c.l.b16 %v182
      %v256 = vunpack.c.l.b16 %v183
      %v257 = vunpack.c.l.b16 %v184
      %v258 = vunpack.c.l.b16 %v185
      %v259 = vunpack.c.l.b16 %v186
      %v260 = vunpack.c.l.b16 %v187
      %v261 = vunpack.c.l.b16 %v188
      %v262 = vunpack.c.l.b16 %v189
      %v263 = vunpack.c.l.b16 %v190
      %v264 = vunpack.c.l.b16 %v191
      %v265 = vunpack.c.l.b16 %v192
      %v266 = vunpack.c.l.b16 %v193
      %v267 = vunpack.c.l.b16 %v194
      %v268 = vunpack.c.l.b16 %v195
      %v269 = vunpack.c.l.b16 %v196
      %v270 = vunpack.c.l.b16 %v197
      %v271 = vunpack.c.l.b16 %v198
      %v272 = vunpack.c.l.b16 %v199
      %v273 = vunpack.c.l.b16 %v200
      %v274 = vunpack.c.l.b16 %v201
      %v275 = vunpack.c.l.b16 %v202
      %v276 = vunpack.c.l.b16 %v203
      %v277 = vunpack.c.l.b16 %v204
      %v278 = vunpack.c.l.b16 %v205
      %v279 = vpack.c.b16 %v256, %v255
      %v280 = vpack.c.b16 %v258, %v257
      %v281 = vpack.c.b16 %v260, %v259
      %v282 = vpack.c.b16 %v262, %v261
      %v283 = vpack.c.b16 %v264, %v263
      %v284 = vpack.c.b16 %v266, %v265
      %v285 = vpack.c.b16 %v268, %v267
      %v286 = vpack.c.b16 %v270, %v269
      %v287 = vpack.c.b16 %v272, %v271
      %v288 = vpack.c.b16 %v274, %v273
      %v289 = vpack.c.b16 %v276, %v275
      %v290 = vpack.c.b16 %v278, %v277
      %vm303 = vcmask 523264
      %v305 = vsel %vm303, %v226, 0
      %v308 = vsel %vm303, %v228, 0
      %310 = vmatprep.subr.bf16.mxu0 0
      %311 = vmatpush1.bf16.msra.mxu0 %v279
      %312 = vmatprep.subr.bf16.mxu0 0
      %313 = vmatpush1.bf16.msra.mxu0 %v280
      %314 = vmatprep.subr.bf16.mxu0 0
      %315 = vmatpush1.bf16.msra.mxu0 %v281
      %316 = vmatprep.subr.bf16.mxu0 0
      %317 = vmatpush1.bf16.msra.mxu0 %v282
      %318 = vmatprep.subr.bf16.mxu0 0
      %319 = vmatpush1.bf16.msra.mxu0 %v283
      %320 = vmatprep.subr.bf16.mxu0 0
      %321 = vmatpush1.bf16.msra.mxu0 %v284
      %322 = vmatprep.subr.bf16.mxu0 0
      %323 = vmatpush1.bf16.msra.mxu0 %v285
      %324 = vmatprep.subr.bf16.mxu0 0
      %325 = vmatpush1.bf16.msra.mxu0 %v286
      %326 = vmatprep.subr.bf16.mxu0 0
      %327 = vmatpush1.bf16.msra.mxu0 %v287
      %328 = vmatprep.subr.bf16.mxu0 0
      %329 = vmatpush1.bf16.msra.mxu0 %v288
      %330 = vmatprep.subr.bf16.mxu0 0
      %331 = vmatpush1.bf16.msra.mxu0 %v289
      %332 = vmatprep.subr.bf16.mxu0 0
      %333 = vmatpush1.bf16.msra.mxu0 %v290
      %334 = vmatprep.subr.bf16.mxu0 0
      %335 = vmatpush1.bf16.msra.mxu0 0
      %336 = vmatprep.subr.bf16.mxu0 0
      %337 = vmatpush1.bf16.msra.mxu0 0
      %338 = vmatprep.subr.bf16.mxu0 0
      %339 = vmatpush1.bf16.msra.mxu0 0
      %340 = vmatprep.subr.bf16.mxu0 0
      %341 = vmatpush1.bf16.msra.mxu0 0
      %342 = vmatprep.mubr.bf16.mxu0 %v305
      %343 = vmatmul.mubr.bf16.gmra.mrb[0].mxu0 %v225
      %v344 = vpop.f32.mrb[0].mxu0
      %v345 = vadd.f32 %v211, %v344
      %v346 = vpop.f32.mrb[0].mxu0
      %v347 = vpop.f32.mrb[0].mxu0
      %v348 = vadd.f32 %v211, %v347
      %v349 = vpop.f32.mrb[0].mxu0
      %350 = vmatprep.mubr.bf16.mxu0 %v308
      %351 = vmatmul.mubr.bf16.gmra.mrb[0].mxu0 %v227
      %v352 = vpop.f32.mrb[0].mxu0
      %v353 = vadd.f32 %v211, %v352
      %v354 = vpop.f32.mrb[0].mxu0
      %v355 = vpop.f32.mrb[0].mxu0
      %v356 = vadd.f32 %v211, %v355
      %v357 = vpop.f32.mrb[0].mxu0
      %358 = vdwg.mxu0
      %359 = vst.msk [vmem:[%s175] sm:$0xff] %vm303, %v345
      %360 = vst.msk [vmem:[%s175 + $0x8] sm:$0xff] %vm303, %v348
      %361 = vst.msk [vmem:[%s175 + $0x10] sm:$0xff] %vm303, %v353
      %362 = vst.msk [vmem:[%s175 + $0x18] sm:$0xff] %vm303, %v356
      %s363 = smul.u32 4, %s14
      %p364 = scmp.lt.s32.totalorder %s363, 7
      %s365 = scalar_select %p364, %s363, 7
      %s366 = smul.addr %s365, 8
      %s367 = scalar_lea.vmem %s3, %s366
      // Predicated region
      $region33: #{_lambda_.7} parent=31 // pred_check
        %p368 = pneg %p100
      $region34: #{_lambda_.7} parent=31 // pred_check_branch
        %370 = sbr.rel (%p368) target = $region36
      $region35: #{_lambda_.7} parent=31 // pred_region
        %s371 = smul.u32 4, %s14
      $region36: #{_lambda_.7} parent=31 // pred_fallthru
        _
    $region32: #{_lambda_.7} parent=5 // pred_fallthru
      _
    %p372 = scmp.le.s32.totalorder 2, %s9
    // Predicated region
    $region37: #{_lambda_.7} parent=5 // pred_check
      %p373 = pneg %p372
    $region38: #{_lambda_.7} parent=5 // pred_check_branch
      %375 = sbr.rel (%p373) target = $region40
    $region39: #{_lambda_.7} parent=5 // pred_region
      %s376 = ssub.s32 %s9, 2
      // Predicated region
      $region41: #{_lambda_.7} parent=39 // pred_check
        %p377 = pneg %p106
      $region42: #{_lambda_.7} parent=39 // pred_check_branch
        %379 = sbr.rel (%p377) target = $region44
      $region43: #{_lambda_.7} parent=39 // pred_region
        %s380 = smul.u32 4, %s15
        %p381 = scmp.lt.s32.totalorder %s380, 7
        %s382 = scalar_select %p381, %s380, 7
        %s383 = smul.addr %s382, 8
        %s384 = scalar_lea.vmem %s3, %s383
      $region44: #{_lambda_.7} parent=39 // pred_fallthru
        _
    $region40: #{_lambda_.7} parent=5 // pred_fallthru
      _
  $region6: #{_lambda_.7} parent=0 // loop_footer
    %s13 = sadd.s32 1, %s9
  $region7: #{_lambda_.7} parent=0 // loop_footer_branch
    %8 = sbr.rel target = $region3
  $region8: #{_lambda_.7} parent=0 // loop_exit
    _

// kernel: _lambda_.10
$region0: #{_lambda_.10}
  #allocation0 [shape = 'u32[]', space=smem, size = 0x4, offset = 0x4, fixed_abs, tag = 'smem constant byte address 0x4 - core index']
  #allocation1 [shape = 'u32[144,128]{1,0:T(1,128)}', space=vmem, size = 0x12000, scoped, tag = 'internal scratch']
  %s0 = inlined_call_operand.vmem [shape: bf16[64,128], index: 0, kind: input, shape index: {}]
  %s1 = inlined_call_operand.vmem [shape: bf16[128,128], index: 1, kind: input, shape index: {}]
  %s2 = inlined_call_operand.vmem [shape: bf16[3,128,64], index: 2, kind: input, shape index: {}]
  %s3 = inlined_call_operand.vmem [shape: f32[1,64], index: 3, kind: input, shape index: {}]
  %s4 = inlined_call_operand.vmem [shape: f32[64,64], index: 4, kind: output, shape index: {}]
  %s5 = sld [smem:[#allocation0]]
  $region49: #{_lambda_.10} parent=0
    _
  %s7 = ssub.s32 1, %s5
  %s8 = scalar_select 0, %s7, %s5
  loop: start=0, step=1, limit=4
  $region2: #{_lambda_.10} parent=0 // loop_pre_header
    _
  $region3: #{_lambda_.10} parent=0 // loop_header
    %s10 = sphi 0, %s14
    %p11 = scmp.ge.s32.totalorder %s10, 4
    %s20 = sphi 0, %s22
    %s23 = sphi 0, %s20
    %s24 = sphi 0, %s23
    %s40 = sphi 0, %s24
    %s44 = sphi 0, %s44
    %s46 = sphi 0, %s44
    %s47 = sphi 0, %s46
    %s61 = sphi 0, %s47
    %s65 = sphi 0, %s65
    %s67 = sphi 0, %s65
    %s68 = sphi 0, %s67
    %s82 = sphi 0, %s68
    %s86 = sphi 0, %s86
    %s88 = sphi 0, %s86
    %s89 = sphi 0, %s88
    %s103 = sphi 0, %s89
    %s109 = sphi 0, %s111
    %s112 = sphi 0, %s109
    %s113 = sphi 0, %s112
    %s129 = sphi 0, %s113
  $region4: #{_lambda_.10} parent=0 // loop_header_branch
    %13 = sbr.rel (%p11) target = $region8
  $region5: #{_lambda_.10} parent=0 // loop_body
    %s15 = ssub.s32 %s10, 1
    %s16 = ssub.s32 %s10, 2
    %s17 = sadd.s32 %s10, 1
    %s18 = ssub.s32 %s10, %s17
    %p19 = scmp.eq.s32.totalorder %s18, 0
    %s21 = sadd.s32 %s20, 1
    %s22 = scalar_select %p19, %s20, %s21
    %p25 = pneg %p19
    %p26 = scmp.eq.s32.totalorder %s10, 1
    %p27 = por %p25, %p26
    %p28 = scmp.ne.s32.totalorder %s20, %s23
    %p29 = scmp.eq.s32.totalorder %s10, 0
    %p30 = por %p28, %p29
    %p31 = scmp.ne.s32.totalorder %s20, %s23
    %p32 = scmp.eq.s32.totalorder %s15, 1
    %p33 = por %p31, %p32
    %p34 = scmp.ne.s32.totalorder %s23, %s24
    %p35 = scmp.eq.s32.totalorder %s15, 0
    %p36 = por %p34, %p35
    %p37 = scmp.ne.s32.totalorder %s23, %s24
    %p38 = scmp.eq.s32.totalorder %s16, 1
    %p39 = por %p37, %p38
    %p41 = scmp.ne.s32.totalorder %s24, %s40
    %p42 = scmp.eq.s32.totalorder %s16, 0
    %p43 = por %p41, %p42
    %s45 = sadd.s32 %s44, 1
    %p48 = scmp.eq.s32.totalorder %s10, 1
    %p49 = scmp.ne.s32.totalorder %s44, %s46
    %p50 = scmp.eq.s32.totalorder %s10, 0
    %p51 = por %p49, %p50
    %p52 = scmp.ne.s32.totalorder %s44, %s46
    %p53 = scmp.eq.s32.totalorder %s15, 1
    %p54 = por %p52, %p53
    %p55 = scmp.ne.s32.totalorder %s46, %s47
    %p56 = scmp.eq.s32.totalorder %s15, 0
    %p57 = por %p55, %p56
    %p58 = scmp.ne.s32.totalorder %s46, %s47
    %p59 = scmp.eq.s32.totalorder %s16, 1
    %p60 = por %p58, %p59
    %p62 = scmp.ne.s32.totalorder %s47, %s61
    %p63 = scmp.eq.s32.totalorder %s16, 0
    %p64 = por %p62, %p63
    %s66 = sadd.s32 %s65, 1
    %p69 = scmp.eq.s32.totalorder %s10, 1
    %p70 = scmp.ne.s32.totalorder %s65, %s67
    %p71 = scmp.eq.s32.totalorder %s10, 0
    %p72 = por %p70, %p71
    %p73 = scmp.ne.s32.totalorder %s65, %s67
    %p74 = scmp.eq.s32.totalorder %s15, 1
    %p75 = por %p73, %p74
    %p76 = scmp.ne.s32.totalorder %s67, %s68
    %p77 = scmp.eq.s32.totalorder %s15, 0
    %p78 = por %p76, %p77
    %p79 = scmp.ne.s32.totalorder %s67, %s68
    %p80 = scmp.eq.s32.totalorder %s16, 1
    %p81 = por %p79, %p80
    %p83 = scmp.ne.s32.totalorder %s68, %s82
    %p84 = scmp.eq.s32.totalorder %s16, 0
    %p85 = por %p83, %p84
    %s87 = sadd.s32 %s86, 1
    %p90 = scmp.eq.s32.totalorder %s10, 1
    %p91 = scmp.ne.s32.totalorder %s86, %s88
    %p92 = scmp.eq.s32.totalorder %s10, 0
    %p93 = por %p91, %p92
    %p94 = scmp.ne.s32.totalorder %s86, %s88
    %p95 = scmp.eq.s32.totalorder %s15, 1
    %p96 = por %p94, %p95
    %p97 = scmp.ne.s32.totalorder %s88, %s89
    %p98 = scmp.eq.s32.totalorder %s15, 0
    %p99 = por %p97, %p98
    %p100 = scmp.ne.s32.totalorder %s88, %s89
    %p101 = scmp.eq.s32.totalorder %s16, 1
    %p102 = por %p100, %p101
    %p104 = scmp.ne.s32.totalorder %s89, %s103
    %p105 = scmp.eq.s32.totalorder %s16, 0
    %p106 = por %p104, %p105
    %s107 = ssub.s32 %s10, %s17
    %p108 = scmp.eq.s32.totalorder %s107, 0
    %s110 = sadd.s32 %s109, 1
    %s111 = scalar_select %p108, %s109, %s110
    %p114 = pneg %p108
    %p115 = scmp.eq.s32.totalorder %s10, 1
    %p116 = por %p114, %p115
    %p117 = scmp.ne.s32.totalorder %s109, %s112
    %p118 = scmp.eq.s32.totalorder %s10, 0
    %p119 = por %p117, %p118
    %p120 = scmp.ne.s32.totalorder %s109, %s112
    %p121 = scmp.eq.s32.totalorder %s15, 1
    %p122 = por %p120, %p121
    %p123 = scmp.ne.s32.totalorder %s112, %s113
    %p124 = scmp.eq.s32.totalorder %s15, 0
    %p125 = por %p123, %p124
    %p126 = scmp.ne.s32.totalorder %s112, %s113
    %p127 = scmp.eq.s32.totalorder %s16, 1
    %p128 = por %p126, %p127
    %p130 = scmp.ne.s32.totalorder %s113, %s129
    %p131 = scmp.eq.s32.totalorder %s16, 0
    %p132 = por %p130, %p131
    %p133 = scmp.le.s32.totalorder 1, %s10
    %p134 = scmp.lt.s32.totalorder %s10, 3
    %p135 = pnand %p133, %p134
    %p136 = pneg %p135
    // Predicated region
    $region9: #{_lambda_.10} parent=5 // pred_check
      _
    $region10: #{_lambda_.10} parent=5 // pred_check_branch
      %138 = sbr.rel (%p135) target = $region12
    $region11: #{_lambda_.10} parent=5 // pred_region
      %s139 = ssub.s32 %s10, 1
      // Predicated region
      $region13: #{_lambda_.10} parent=11 // pred_check
        %p140 = pneg %p57
      $region14: #{_lambda_.10} parent=11 // pred_check_branch
        %142 = sbr.rel (%p140) target = $region16
      $region15: #{_lambda_.10} parent=11 // pred_region
        _
      $region16: #{_lambda_.10} parent=11 // pred_fallthru
        _
      // Predicated region
      $region17: #{_lambda_.10} parent=11 // pred_check
        %p143 = pneg %p78
      $region18: #{_lambda_.10} parent=11 // pred_check_branch
        %145 = sbr.rel (%p143) target = $region20
      $region19: #{_lambda_.10} parent=11 // pred_region
        _
      $region20: #{_lambda_.10} parent=11 // pred_fallthru
        _
      // Predicated region
      $region21: #{_lambda_.10} parent=11 // pred_check
        %p146 = pneg %p99
      $region22: #{_lambda_.10} parent=11 // pred_check_branch
        %148 = sbr.rel (%p146) target = $region24
      $region23: #{_lambda_.10} parent=11 // pred_region
        _
      $region24: #{_lambda_.10} parent=11 // pred_fallthru
        _
    $region12: #{_lambda_.10} parent=5 // pred_fallthru
      _
    %p149 = scmp.lt.s32.totalorder %s10, 2
    // Predicated region
    $region25: #{_lambda_.10} parent=5 // pred_check
      %p150 = pneg %p149
    $region26: #{_lambda_.10} parent=5 // pred_check_branch
      %152 = sbr.rel (%p150) target = $region28
    $region27: #{_lambda_.10} parent=5 // pred_region
      // Predicated region
      $region29: #{_lambda_.10} parent=27 // pred_check
        %p153 = pneg %p30
      $region30: #{_lambda_.10} parent=27 // pred_check_branch
        %155 = sbr.rel (%p153) target = $region32
      $region31: #{_lambda_.10} parent=27 // pred_region
        %s156 = smul.u32 4, %s10
        %p157 = scmp.lt.s32.totalorder %s156, 7
        %s158 = scalar_select %p157, %s156, 7
        %s159 = smul.addr %s158, 4
        %s160 = scalar_lea.vmem %s0, %s159
        %s161 = smul.u32 4, %s10
      $region32: #{_lambda_.10} parent=27 // pred_fallthru
        _
    $region28: #{_lambda_.10} parent=5 // pred_fallthru
      _
    %p162 = scmp.le.s32.totalorder 1, %s10
    %p163 = scmp.lt.s32.totalorder %s10, 3
    %p164 = pnand %p162, %p163
    %p165 = pneg %p164
    // Predicated region
    $region33: #{_lambda_.10} parent=5 // pred_check
      _
    $region34: #{_lambda_.10} parent=5 // pred_check_branch
      %167 = sbr.rel (%p164) target = $region36
    $region35: #{_lambda_.10} parent=5 // pred_region
      %s168 = ssub.s32 %s10, 1
      %s169 = smul.u32 4, %s15
      %p170 = scmp.lt.s32.totalorder %s169, 7
      %s171 = scalar_select %p170, %s169, 7
      %s172 = smul.addr %s171, 4
      %s173 = scalar_lea.vmem %s0, %s172
      %p174 = pneg %p36
      %p175 = pneg %p33
      %p176 = pneg %p57
      %p177 = pneg %p54
      %p178 = pneg %p78
      %p179 = pneg %p75
      %p180 = pneg %p99
      %p181 = pneg %p96
      %p182 = pneg %p125
      %p183 = pneg %p122
      %s184 = smul.u32 4, %s15
      %p185 = scmp.lt.s32.totalorder %s184, 7
      %s186 = scalar_select %p185, %s184, 7
      %s187 = smul.addr %s186, 8
      %s188 = scalar_lea.vmem %s4, %s187
      %s189 = smul.u32 4, %s15
      %p190 = scmp.lt.s32.totalorder %s189, 7
      %s191 = scalar_select %p190, %s189, 7
      %s192 = smul.addr %s191, 4
      %s193 = scalar_lea.vmem %s0, %s192
      %s194 = smul.u32 4, %s15
      %s195 = smul.u32 4, %s15
      %p196 = scmp.lt.s32.totalorder %s195, 7
      %s197 = scalar_select %p196, %s195, 7
      %s198 = smul.addr %s197, 8
      %s199 = scalar_lea.vmem %s4, %s198
      %s200 = smul.u32 4, %s15
      %v202 = vld [vmem:[%s193] sm:$0xf]
      %v203 = vld [vmem:[%s193 + $0x4] sm:$0xf]
      %v204 = vld [vmem:[%s193 + $0x8] sm:$0xf]
      %v205 = vld [vmem:[%s193 + $0xc] sm:$0xf]
      %v206 = vunpack.c.l.bf16 %v202
      %v207 = vunpack.c.l.bf16 %v203
      %v208 = vunpack.c.l.bf16 %v204
      %v209 = vunpack.c.l.bf16 %v205
      %v210 = vld [vmem:[%s2] sm:$0xf]
      %v211 = vld [vmem:[%s2 + $0x4] sm:$0xf]
      %v212 = vld [vmem:[%s2 + $0x8] sm:$0xf]
      %v213 = vld [vmem:[%s2 + $0xc] sm:$0xf]
      %v214 = vld [vmem:[%s2 + $0x10] sm:$0xf]
      %v215 = vld [vmem:[%s2 + $0x14] sm:$0xf]
      %v216 = vld [vmem:[%s2 + $0x18] sm:$0xf]
      %v217 = vld [vmem:[%s2 + $0x1c] sm:$0xf]
      %v218 = vld [vmem:[%s2 + $0x20] sm:$0xf]
      %v219 = vld [vmem:[%s2 + $0x24] sm:$0xf]
      %v220 = vld [vmem:[%s2 + $0x28] sm:$0xf]
      %v221 = vld [vmem:[%s2 + $0x2c] sm:$0xf]
      %v222 = vld [vmem:[%s2 + $0x30] sm:$0xf]
      %v223 = vld [vmem:[%s2 + $0x34] sm:$0xf]
      %v224 = vld [vmem:[%s2 + $0x38] sm:$0xf]
      %v225 = vld [vmem:[%s2 + $0x3c] sm:$0xf]
      %v226 = vld [vmem:[%s1] sm:$0xf]
      %v227 = vld [vmem:[%s1 + $0x4] sm:$0xf]
      %v228 = vld [vmem:[%s1 + $0x8] sm:$0xf]
      %v229 = vld [vmem:[%s1 + $0xc] sm:$0xf]
      %v230 = vld [vmem:[%s1 + $0x10] sm:$0xf]
      %v231 = vld [vmem:[%s1 + $0x14] sm:$0xf]
      %v232 = vld [vmem:[%s1 + $0x18] sm:$0xf]
      %v233 = vld [vmem:[%s1 + $0x1c] sm:$0xf]
      %v234 = vld [vmem:[%s1 + $0x20] sm:$0xf]
      %v235 = vld [vmem:[%s1 + $0x24] sm:$0xf]
      %v236 = vld [vmem:[%s1 + $0x28] sm:$0xf]
      %v237 = vld [vmem:[%s1 + $0x2c] sm:$0xf]
      %v238 = vld [vmem:[%s1 + $0x30] sm:$0xf]
      %v239 = vld [vmem:[%s1 + $0x34] sm:$0xf]
      %v240 = vld [vmem:[%s1 + $0x38] sm:$0xf]
      %v241 = vld [vmem:[%s1 + $0x3c] sm:$0xf]
      %v242 = vmul.f32 %v206, 0.05
      %v243 = vmul.f32 %v207, 0.05
      %v244 = vmul.f32 %v208, 0.05
      %v245 = vmul.f32 %v209, 0.05
      %v250 = vunpack.c.l.b16 %v202
      %v251 = vunpack.c.l.b16 %v203
      %v252 = vunpack.c.l.b16 %v204
      %v253 = vunpack.c.l.b16 %v205
      %v254 = vpack.c.b16 %v251, %v250
      %v255 = vpack.c.b16 %v253, %v252
      %v274 = vunpack.c.l.b16 %v226
      %v275 = vunpack.c.l.b16 %v227
      %v276 = vunpack.c.l.b16 %v228
      %v277 = vunpack.c.l.b16 %v229
      %v278 = vunpack.c.l.b16 %v230
      %v279 = vunpack.c.l.b16 %v231
      %v280 = vunpack.c.l.b16 %v232
      %v281 = vunpack.c.l.b16 %v233
      %v282 = vunpack.c.l.b16 %v234
      %v283 = vunpack.c.l.b16 %v235
      %v284 = vunpack.c.l.b16 %v236
      %v285 = vunpack.c.l.b16 %v237
      %v286 = vunpack.c.l.b16 %v238
      %v287 = vunpack.c.l.b16 %v239
      %v288 = vunpack.c.l.b16 %v240
      %v289 = vunpack.c.l.b16 %v241
      %v290 = vpack.c.b16 %v275, %v274
      %v291 = vpack.c.b16 %v277, %v276
      %v292 = vpack.c.b16 %v279, %v278
      %v293 = vpack.c.b16 %v281, %v280
      %v294 = vpack.c.b16 %v283, %v282
      %v295 = vpack.c.b16 %v285, %v284
      %v296 = vpack.c.b16 %v287, %v286
      %v297 = vpack.c.b16 %v289, %v288
      %306 = vmatprep.subr.bf16.mxu0 0
      %307 = vmatpush1.bf16.msra.mxu0 %v290
      %308 = vmatprep.subr.bf16.mxu0 0
      %309 = vmatpush1.bf16.msra.mxu0 %v291
      %310 = vmatprep.subr.bf16.mxu0 0
      %311 = vmatpush1.bf16.msra.mxu0 %v292
      %312 = vmatprep.subr.bf16.mxu0 0
      %313 = vmatpush1.bf16.msra.mxu0 %v293
      %314 = vmatprep.subr.bf16.mxu0 0
      %315 = vmatpush1.bf16.msra.mxu0 %v294
      %316 = vmatprep.subr.bf16.mxu0 0
      %317 = vmatpush1.bf16.msra.mxu0 %v295
      %318 = vmatprep.subr.bf16.mxu0 0
      %319 = vmatpush1.bf16.msra.mxu0 %v296
      %320 = vmatprep.subr.bf16.mxu0 0
      %321 = vmatpush1.bf16.msra.mxu0 %v297
      %322 = vmatprep.subr.bf16.mxu0 0
      %323 = vmatpush1.bf16.msra.mxu0 0
      %324 = vmatprep.subr.bf16.mxu0 0
      %325 = vmatpush1.bf16.msra.mxu0 0
      %326 = vmatprep.subr.bf16.mxu0 0
      %327 = vmatpush1.bf16.msra.mxu0 0
      %328 = vmatprep.subr.bf16.mxu0 0
      %329 = vmatpush1.bf16.msra.mxu0 0
      %330 = vmatprep.subr.bf16.mxu0 0
      %331 = vmatpush1.bf16.msra.mxu0 0
      %332 = vmatprep.subr.bf16.mxu0 0
      %333 = vmatpush1.bf16.msra.mxu0 0
      %334 = vmatprep.subr.bf16.mxu0 0
      %335 = vmatpush1.bf16.msra.mxu0 0
      %336 = vmatprep.subr.bf16.mxu0 0
      %337 = vmatpush1.bf16.msra.mxu0 0
      %338 = vmatprep.mubr.bf16.mxu0 0
      %339 = vmatmul.mubr.bf16.gmra.mrb[0].mxu0 %v254
      %v340 = vpop.f32.mrb[0].mxu0
      %v341 = vadd.f32 0.0, %v340
      %v342 = vpop.f32.mrb[0].mxu0
      %v343 = vpop.f32.mrb[0].mxu0
      %v344 = vadd.f32 0.0, %v343
      %v345 = vpop.f32.mrb[0].mxu0
      %346 = vmatprep.mubr.bf16.mxu0 0
      %347 = vmatmul.mubr.bf16.gmra.mrb[0].mxu0 %v255
      %v348 = vpop.f32.mrb[0].mxu0
      %v349 = vadd.f32 0.0, %v348
      %v350 = vpop.f32.mrb[0].mxu0
      %v351 = vpop.f32.mrb[0].mxu0
      %v352 = vadd.f32 0.0, %v351
      %v353 = vpop.f32.mrb[0].mxu0
      %354 = vdwg.mxu0
      %v355 = vmul.f32 %v341, 0.95
      %v356 = vmul.f32 %v344, 0.95
      %v357 = vmul.f32 %v349, 0.95
      %v358 = vmul.f32 %v352, 0.95
      %v359 = vadd.f32 %v242, %v355
      %v360 = vadd.f32 %v243, %v356
      %v361 = vadd.f32 %v244, %v357
      %v362 = vadd.f32 %v245, %v358
      %v363 = vpack.c.bf16 %v360, %v359
      %v364 = vpack.c.bf16 %v362, %v361
      %s365 = scalar_lea.vmem %s2, 64
      %v366 = vld [vmem:[%s365] sm:$0xf]
      %v367 = vld [vmem:[%s365 + $0x4] sm:$0xf]
      %v368 = vld [vmem:[%s365 + $0x8] sm:$0xf]
      %v369 = vld [vmem:[%s365 + $0xc] sm:$0xf]
      %v370 = vld [vmem:[%s365 + $0x10] sm:$0xf]
      %v371 = vld [vmem:[%s365 + $0x14] sm:$0xf]
      %v372 = vld [vmem:[%s365 + $0x18] sm:$0xf]
      %v373 = vld [vmem:[%s365 + $0x1c] sm:$0xf]
      %v374 = vld [vmem:[%s365 + $0x20] sm:$0xf]
      %v375 = vld [vmem:[%s365 + $0x24] sm:$0xf]
      %v376 = vld [vmem:[%s365 + $0x28] sm:$0xf]
      %v377 = vld [vmem:[%s365 + $0x2c] sm:$0xf]
      %v378 = vld [vmem:[%s365 + $0x30] sm:$0xf]
      %v379 = vld [vmem:[%s365 + $0x34] sm:$0xf]
      %v380 = vld [vmem:[%s365 + $0x38] sm:$0xf]
      %v381 = vld [vmem:[%s365 + $0x3c] sm:$0xf]
      %v398 = vunpack.c.l.b16 %v366
      %v399 = vunpack.c.l.b16 %v367
      %v400 = vunpack.c.l.b16 %v368
      %v401 = vunpack.c.l.b16 %v369
      %v402 = vunpack.c.l.b16 %v370
      %v403 = vunpack.c.l.b16 %v371
      %v404 = vunpack.c.l.b16 %v372
      %v405 = vunpack.c.l.b16 %v373
      %v406 = vunpack.c.l.b16 %v374
      %v407 = vunpack.c.l.b16 %v375
      %v408 = vunpack.c.l.b16 %v376
      %v409 = vunpack.c.l.b16 %v377
      %v410 = vunpack.c.l.b16 %v378
      %v411 = vunpack.c.l.b16 %v379
      %v412 = vunpack.c.l.b16 %v380
      %v413 = vunpack.c.l.b16 %v381
      %v414 = vpack.c.b16 %v399, %v398
      %v415 = vpack.c.b16 %v401, %v400
      %v416 = vpack.c.b16 %v403, %v402
      %v417 = vpack.c.b16 %v405, %v404
      %v418 = vpack.c.b16 %v407, %v406
      %v419 = vpack.c.b16 %v409, %v408
      %v420 = vpack.c.b16 %v411, %v410
      %v421 = vpack.c.b16 %v413, %v412
      %430 = vmatprep.subr.bf16.mxu0 0
      %431 = vmatpush1.bf16.msra.mxu0 %v414
      %432 = vmatprep.subr.bf16.mxu0 0
      %433 = vmatpush1.bf16.msra.mxu0 %v415
      %434 = vmatprep.subr.bf16.mxu0 0
      %435 = vmatpush1.bf16.msra.mxu0 %v416
      %436 = vmatprep.subr.bf16.mxu0 0
      %437 = vmatpush1.bf16.msra.mxu0 %v417
      %438 = vmatprep.subr.bf16.mxu0 0
      %439 = vmatpush1.bf16.msra.mxu0 %v418
      %440 = vmatprep.subr.bf16.mxu0 0
      %441 = vmatpush1.bf16.msra.mxu0 %v419
      %442 = vmatprep.subr.bf16.mxu0 0
      %443 = vmatpush1.bf16.msra.mxu0 %v420
      %444 = vmatprep.subr.bf16.mxu0 0
      %445 = vmatpush1.bf16.msra.mxu0 %v421
      %446 = vmatprep.subr.bf16.mxu0 0
      %447 = vmatpush1.bf16.msra.mxu0 0
      %448 = vmatprep.subr.bf16.mxu0 0
      %449 = vmatpush1.bf16.msra.mxu0 0
      %450 = vmatprep.subr.bf16.mxu0 0
      %451 = vmatpush1.bf16.msra.mxu0 0
      %452 = vmatprep.subr.bf16.mxu0 0
      %453 = vmatpush1.bf16.msra.mxu0 0
      %454 = vmatprep.subr.bf16.mxu0 0
      %455 = vmatpush1.bf16.msra.mxu0 0
      %456 = vmatprep.subr.bf16.mxu0 0
      %457 = vmatpush1.bf16.msra.mxu0 0
      %458 = vmatprep.subr.bf16.mxu0 0
      %459 = vmatpush1.bf16.msra.mxu0 0
      %460 = vmatprep.subr.bf16.mxu0 0
      %461 = vmatpush1.bf16.msra.mxu0 0
      %462 = vmatprep.mubr.bf16.mxu0 0
      %463 = vmatmul.mubr.bf16.gmra.mrb[0].mxu0 %v363
      %v464 = vpop.f32.mrb[0].mxu0
      %v465 = vadd.f32 0.0, %v464
      %v466 = vpop.f32.mrb[0].mxu0
      %v467 = vpop.f32.mrb[0].mxu0
      %v468 = vadd.f32 0.0, %v467
      %v469 = vpop.f32.mrb[0].mxu0
      %470 = vmatprep.mubr.bf16.mxu0 0
      %471 = vmatmul.mubr.bf16.gmra.mrb[0].mxu0 %v364
      %v472 = vpop.f32.mrb[0].mxu0
      %v473 = vadd.f32 0.0, %v472
      %v474 = vpop.f32.mrb[0].mxu0
      %v475 = vpop.f32.mrb[0].mxu0
      %v476 = vadd.f32 0.0, %v475
      %v477 = vpop.f32.mrb[0].mxu0
      %478 = vdwg.mxu0
      %v495 = vunpack.c.l.b16 %v210
      %v496 = vunpack.c.l.b16 %v211
      %v497 = vunpack.c.l.b16 %v212
      %v498 = vunpack.c.l.b16 %v213
      %v499 = vunpack.c.l.b16 %v214
      %v500 = vunpack.c.l.b16 %v215
      %v501 = vunpack.c.l.b16 %v216
      %v502 = vunpack.c.l.b16 %v217
      %v503 = vunpack.c.l.b16 %v218
      %v504 = vunpack.c.l.b16 %v219
      %v505 = vunpack.c.l.b16 %v220
      %v506 = vunpack.c.l.b16 %v221
      %v507 = vunpack.c.l.b16 %v222
      %v508 = vunpack.c.l.b16 %v223
      %v509 = vunpack.c.l.b16 %v224
      %v510 = vunpack.c.l.b16 %v225
      %v511 = vpack.c.b16 %v496, %v495
      %v512 = vpack.c.b16 %v498, %v497
      %v513 = vpack.c.b16 %v500, %v499
      %v514 = vpack.c.b16 %v502, %v501
      %v515 = vpack.c.b16 %v504, %v503
      %v516 = vpack.c.b16 %v506, %v505
      %v517 = vpack.c.b16 %v508, %v507
      %v518 = vpack.c.b16 %v510, %v509
      %527 = vmatprep.subr.bf16.mxu0 0
      %528 = vmatpush1.bf16.msra.mxu0 %v511
      %529 = vmatprep.subr.bf16.mxu0 0
      %530 = vmatpush1.bf16.msra.mxu0 %v512
      %531 = vmatprep.subr.bf16.mxu0 0
      %532 = vmatpush1.bf16.msra.mxu0 %v513
      %533 = vmatprep.subr.bf16.mxu0 0
      %534 = vmatpush1.bf16.msra.mxu0 %v514
      %535 = vmatprep.subr.bf16.mxu0 0
      %536 = vmatpush1.bf16.msra.mxu0 %v515
      %537 = vmatprep.subr.bf16.mxu0 0
      %538 = vmatpush1.bf16.msra.mxu0 %v516
      %539 = vmatprep.subr.bf16.mxu0 0
      %540 = vmatpush1.bf16.msra.mxu0 %v517
      %541 = vmatprep.subr.bf16.mxu0 0
      %542 = vmatpush1.bf16.msra.mxu0 %v518
      %543 = vmatprep.subr.bf16.mxu0 0
      %544 = vmatpush1.bf16.msra.mxu0 0
      %545 = vmatprep.subr.bf16.mxu0 0
      %546 = vmatpush1.bf16.msra.mxu0 0
      %547 = vmatprep.subr.bf16.mxu0 0
      %548 = vmatpush1.bf16.msra.mxu0 0
      %549 = vmatprep.subr.bf16.mxu0 0
      %550 = vmatpush1.bf16.msra.mxu0 0
      %551 = vmatprep.subr.bf16.mxu0 0
      %552 = vmatpush1.bf16.msra.mxu0 0
      %553 = vmatprep.subr.bf16.mxu0 0
      %554 = vmatpush1.bf16.msra.mxu0 0
      %555 = vmatprep.subr.bf16.mxu0 0
      %556 = vmatpush1.bf16.msra.mxu0 0
      %557 = vmatprep.subr.bf16.mxu0 0
      %558 = vmatpush1.bf16.msra.mxu0 0
      %559 = vmatprep.mubr.bf16.mxu0 0
      %560 = vmatmul.mubr.bf16.gmra.mrb[0].mxu0 %v254
      %v561 = vpop.f32.mrb[0].mxu0
      %v562 = vadd.f32 %v465, %v561
      %v563 = vpop.f32.mrb[0].mxu0
      %v564 = vpop.f32.mrb[0].mxu0
      %v565 = vadd.f32 %v468, %v564
      %v566 = vpop.f32.mrb[0].mxu0
      %567 = vmatprep.mubr.bf16.mxu0 0
      %568 = vmatmul.mubr.bf16.gmra.mrb[0].mxu0 %v255
      %v569 = vpop.f32.mrb[0].mxu0
      %v570 = vadd.f32 %v473, %v569
      %v571 = vpop.f32.mrb[0].mxu0
      %v572 = vpop.f32.mrb[0].mxu0
      %v573 = vadd.f32 %v476, %v572
      %v574 = vpop.f32.mrb[0].mxu0
      %575 = vdwg.mxu0
      %576 = vmatprep.subr.bf16.mxu0 0
      %577 = vmatpush1.bf16.msra.mxu0 %v290
      %578 = vmatprep.subr.bf16.mxu0 0
      %579 = vmatpush1.bf16.msra.mxu0 %v291
      %580 = vmatprep.subr.bf16.mxu0 0
      %581 = vmatpush1.bf16.msra.mxu0 %v292
      %582 = vmatprep.subr.bf16.mxu0 0
      %583 = vmatpush1.bf16.msra.mxu0 %v293
      %584 = vmatprep.subr.bf16.mxu0 0
      %585 = vmatpush1.bf16.msra.mxu0 %v294
      %586 = vmatprep.subr.bf16.mxu0 0
      %587 = vmatpush1.bf16.msra.mxu0 %v295
      %588 = vmatprep.subr.bf16.mxu0 0
      %589 = vmatpush1.bf16.msra.mxu0 %v296
      %590 = vmatprep.subr.bf16.mxu0 0
      %591 = vmatpush1.bf16.msra.mxu0 %v297
      %592 = vmatprep.subr.bf16.mxu0 0
      %593 = vmatpush1.bf16.msra.mxu0 0
      %594 = vmatprep.subr.bf16.mxu0 0
      %595 = vmatpush1.bf16.msra.mxu0 0
      %596 = vmatprep.subr.bf16.mxu0 0
      %597 = vmatpush1.bf16.msra.mxu0 0
      %598 = vmatprep.subr.bf16.mxu0 0
      %599 = vmatpush1.bf16.msra.mxu0 0
      %600 = vmatprep.subr.bf16.mxu0 0
      %601 = vmatpush1.bf16.msra.mxu0 0
      %602 = vmatprep.subr.bf16.mxu0 0
      %603 = vmatpush1.bf16.msra.mxu0 0
      %604 = vmatprep.subr.bf16.mxu0 0
      %605 = vmatpush1.bf16.msra.mxu0 0
      %606 = vmatprep.subr.bf16.mxu0 0
      %607 = vmatpush1.bf16.msra.mxu0 0
      %608 = vmatprep.mubr.bf16.mxu0 0
      %609 = vmatmul.mubr.bf16.gmra.mrb[0].mxu0 %v363
      %v610 = vpop.f32.mrb[0].mxu0
      %v611 = vadd.f32 0.0, %v610
      %v612 = vpop.f32.mrb[0].mxu0
      %v613 = vpop.f32.mrb[0].mxu0
      %v614 = vadd.f32 0.0, %v613
      %v615 = vpop.f32.mrb[0].mxu0
      %616 = vmatprep.mubr.bf16.mxu0 0
      %617 = vmatmul.mubr.bf16.gmra.mrb[0].mxu0 %v364
      %v618 = vpop.f32.mrb[0].mxu0
      %v619 = vadd.f32 0.0, %v618
      %v620 = vpop.f32.mrb[0].mxu0
      %v621 = vpop.f32.mrb[0].mxu0
      %v622 = vadd.f32 0.0, %v621
      %v623 = vpop.f32.mrb[0].mxu0
      %624 = vdwg.mxu0
      %v625 = vmul.f32 %v611, 0.95
      %v626 = vmul.f32 %v614, 0.95
      %v627 = vmul.f32 %v619, 0.95
      %v628 = vmul.f32 %v622, 0.95
      %v629 = vadd.f32 %v242, %v625
      %v630 = vadd.f32 %v243, %v626
      %v631 = vadd.f32 %v244, %v627
      %v632 = vadd.f32 %v245, %v628
      %v633 = vpack.c.bf16 %v630, %v629
      %v634 = vpack.c.bf16 %v632, %v631
      %s635 = scalar_lea.vmem %s2, 128
      %v636 = vld [vmem:[%s635] sm:$0xf]
      %v637 = vld [vmem:[%s635 + $0x4] sm:$0xf]
      %v638 = vld [vmem:[%s635 + $0x8] sm:$0xf]
      %v639 = vld [vmem:[%s635 + $0xc] sm:$0xf]
      %v640 = vld [vmem:[%s635 + $0x10] sm:$0xf]
      %v641 = vld [vmem:[%s635 + $0x14] sm:$0xf]
      %v642 = vld [vmem:[%s635 + $0x18] sm:$0xf]
      %v643 = vld [vmem:[%s635 + $0x1c] sm:$0xf]
      %v644 = vld [vmem:[%s635 + $0x20] sm:$0xf]
      %v645 = vld [vmem:[%s635 + $0x24] sm:$0xf]
      %v646 = vld [vmem:[%s635 + $0x28] sm:$0xf]
      %v647 = vld [vmem:[%s635 + $0x2c] sm:$0xf]
      %v648 = vld [vmem:[%s635 + $0x30] sm:$0xf]
      %v649 = vld [vmem:[%s635 + $0x34] sm:$0xf]
      %v650 = vld [vmem:[%s635 + $0x38] sm:$0xf]
      %v651 = vld [vmem:[%s635 + $0x3c] sm:$0xf]
      %v668 = vunpack.c.l.b16 %v636
      %v669 = vunpack.c.l.b16 %v637
      %v670 = vunpack.c.l.b16 %v638
      %v671 = vunpack.c.l.b16 %v639
      %v672 = vunpack.c.l.b16 %v640
      %v673 = vunpack.c.l.b16 %v641
      %v674 = vunpack.c.l.b16 %v642
      %v675 = vunpack.c.l.b16 %v643
      %v676 = vunpack.c.l.b16 %v644
      %v677 = vunpack.c.l.b16 %v645
      %v678 = vunpack.c.l.b16 %v646
      %v679 = vunpack.c.l.b16 %v647
      %v680 = vunpack.c.l.b16 %v648
      %v681 = vunpack.c.l.b16 %v649
      %v682 = vunpack.c.l.b16 %v650
      %v683 = vunpack.c.l.b16 %v651
      %v684 = vpack.c.b16 %v669, %v668
      %v685 = vpack.c.b16 %v671, %v670
      %v686 = vpack.c.b16 %v673, %v672
      %v687 = vpack.c.b16 %v675, %v674
      %v688 = vpack.c.b16 %v677, %v676
      %v689 = vpack.c.b16 %v679, %v678
      %v690 = vpack.c.b16 %v681, %v680
      %v691 = vpack.c.b16 %v683, %v682
      %700 = vmatprep.subr.bf16.mxu0 0
      %701 = vmatpush1.bf16.msra.mxu0 %v684
      %702 = vmatprep.subr.bf16.mxu0 0
      %703 = vmatpush1.bf16.msra.mxu0 %v685
      %704 = vmatprep.subr.bf16.mxu0 0
      %705 = vmatpush1.bf16.msra.mxu0 %v686
      %706 = vmatprep.subr.bf16.mxu0 0
      %707 = vmatpush1.bf16.msra.mxu0 %v687
      %708 = vmatprep.subr.bf16.mxu0 0
      %709 = vmatpush1.bf16.msra.mxu0 %v688
      %710 = vmatprep.subr.bf16.mxu0 0
      %711 = vmatpush1.bf16.msra.mxu0 %v689
      %712 = vmatprep.subr.bf16.mxu0 0
      %713 = vmatpush1.bf16.msra.mxu0 %v690
      %714 = vmatprep.subr.bf16.mxu0 0
      %715 = vmatpush1.bf16.msra.mxu0 %v691
      %716 = vmatprep.subr.bf16.mxu0 0
      %717 = vmatpush1.bf16.msra.mxu0 0
      %718 = vmatprep.subr.bf16.mxu0 0
      %719 = vmatpush1.bf16.msra.mxu0 0
      %720 = vmatprep.subr.bf16.mxu0 0
      %721 = vmatpush1.bf16.msra.mxu0 0
      %722 = vmatprep.subr.bf16.mxu0 0
      %723 = vmatpush1.bf16.msra.mxu0 0
      %724 = vmatprep.subr.bf16.mxu0 0
      %725 = vmatpush1.bf16.msra.mxu0 0
      %726 = vmatprep.subr.bf16.mxu0 0
      %727 = vmatpush1.bf16.msra.mxu0 0
      %728 = vmatprep.subr.bf16.mxu0 0
      %729 = vmatpush1.bf16.msra.mxu0 0
      %730 = vmatprep.subr.bf16.mxu0 0
      %731 = vmatpush1.bf16.msra.mxu0 0
      %732 = vmatprep.mubr.bf16.mxu0 0
      %733 = vmatmul.mubr.bf16.gmra.mrb[0].mxu0 %v633
      %v734 = vpop.f32.mrb[0].mxu0
      %v735 = vadd.f32 0.0, %v734
      %v736 = vpop.f32.mrb[0].mxu0
      %v737 = vpop.f32.mrb[0].mxu0
      %v738 = vadd.f32 0.0, %v737
      %v739 = vpop.f32.mrb[0].mxu0
      %740 = vmatprep.mubr.bf16.mxu0 0
      %741 = vmatmul.mubr.bf16.gmra.mrb[0].mxu0 %v634
      %v742 = vpop.f32.mrb[0].mxu0
      %v743 = vadd.f32 0.0, %v742
      %v744 = vpop.f32.mrb[0].mxu0
      %v745 = vpop.f32.mrb[0].mxu0
      %v746 = vadd.f32 0.0, %v745
      %v747 = vpop.f32.mrb[0].mxu0
      %748 = vdwg.mxu0
      %v749 = vadd.f32 %v562, %v735
      %v750 = vadd.f32 %v565, %v738
      %v751 = vadd.f32 %v570, %v743
      %v752 = vadd.f32 %v573, %v746
      %v753 = vld [vmem:[%s3] sm:$0x1]
      %v755 = vlaneseq
      %v756 = vshrl.u32 %v755, 7
      %v757 = vsub.s32 0, %v756
      %v758 = vrot.slane %v753, %v757
      %v760 = vadd.f32 %v749, %v758
      %v761 = vadd.f32 %v750, %v758
      %v762 = vadd.f32 %v751, %v758
      %v763 = vadd.f32 %v752, %v758
      %vm764 = vcmask 523264
      %765 = vst.msk [vmem:[%s199] sm:$0xff] %vm764, %v760
      %766 = vst.msk [vmem:[%s199 + $0x8] sm:$0xff] %vm764, %v761
      %767 = vst.msk [vmem:[%s199 + $0x10] sm:$0xff] %vm764, %v762
      %768 = vst.msk [vmem:[%s199 + $0x18] sm:$0xff] %vm764, %v763
      %s769 = smul.u32 4, %s15
      %p770 = scmp.lt.s32.totalorder %s769, 7
      %s771 = scalar_select %p770, %s769, 7
      %s772 = smul.addr %s771, 8
      %s773 = scalar_lea.vmem %s4, %s772
      // Predicated region
      $region37: #{_lambda_.10} parent=35 // pred_check
        %p774 = pneg %p122
      $region38: #{_lambda_.10} parent=35 // pred_check_branch
        %776 = sbr.rel (%p774) target = $region40
      $region39: #{_lambda_.10} parent=35 // pred_region
        %s777 = smul.u32 4, %s15
      $region40: #{_lambda_.10} parent=35 // pred_fallthru
        _
    $region36: #{_lambda_.10} parent=5 // pred_fallthru
      _
    %p778 = scmp.le.s32.totalorder 2, %s10
    // Predicated region
    $region41: #{_lambda_.10} parent=5 // pred_check
      %p779 = pneg %p778
    $region42: #{_lambda_.10} parent=5 // pred_check_branch
      %781 = sbr.rel (%p779) target = $region44
    $region43: #{_lambda_.10} parent=5 // pred_region
      %s782 = ssub.s32 %s10, 2
      // Predicated region
      $region45: #{_lambda_.10} parent=43 // pred_check
        %p783 = pneg %p128
      $region46: #{_lambda_.10} parent=43 // pred_check_branch
        %785 = sbr.rel (%p783) target = $region48
      $region47: #{_lambda_.10} parent=43 // pred_region
        %s786 = smul.u32 4, %s16
        %p787 = scmp.lt.s32.totalorder %s786, 7
        %s788 = scalar_select %p787, %s786, 7
        %s789 = smul.addr %s788, 8
        %s790 = scalar_lea.vmem %s4, %s789
      $region48: #{_lambda_.10} parent=43 // pred_fallthru
        _
    $region44: #{_lambda_.10} parent=5 // pred_fallthru
      _
  $region6: #{_lambda_.10} parent=0 // loop_footer
    %s14 = sadd.s32 1, %s10
  $region7: #{_lambda_.10} parent=0 // loop_footer_branch
    %9 = sbr.rel target = $region3
  $region8: #{_lambda_.10} parent=0 // loop_exit
    _

// kernel: mul.121
$region0: #{mul.121}
  %s0 = inlined_call_operand.vmem [shape: f32[3,8,4], index: 0, kind: input, shape index: {}]
  %s1 = inlined_call_operand.vmem [shape: f32[24,4], index: 1, kind: output, shape index: {}]
  $region1: #{mul.121} parent=0
    #allocation0 [shape = 'u8[4096]{0}', space=vmem, size = 0x1000, scoped, tag = 'scoped mem for output reshape']
    #allocation1 [shape = 'u8[16384]{0}', space=vmem, size = 0x4000, scoped, tag = 'scoped mem for input reshape']
    %s3 = sshllo.u32 0, 4
    %s4 = smul.addr 4, 3
    %s5 = scalar_lea.vmem %s0, %s4
    %v6 = vld [vmem:[%s5] sm:%s3]
    %s7 = scalar_lea.vmem [#allocation1], 24
    %8 = vst [vmem:[%s7] sm:%s3] %v6
    %s9 = smul.addr 4, 2
    %s10 = scalar_lea.vmem %s0, %s9
    %v11 = vld [vmem:[%s10] sm:%s3]
    %s12 = scalar_lea.vmem [#allocation1], 16
    %13 = vst [vmem:[%s12] sm:%s3] %v11
    %s14 = scalar_lea.vmem %s0, 4
    %v15 = vld [vmem:[%s14] sm:%s3]
    %s16 = scalar_lea.vmem [#allocation1], 8
    %17 = vst [vmem:[%s16] sm:%s3] %v15
    %v18 = vld [vmem:[%s0] sm:%s3]
    %19 = vst [vmem:[#allocation1] sm:%s3] %v18
    %v20 = vld [vmem:[#allocation1] ss:$8 sm:$0xf]
    %vm21 = vcmask 64512
    %22 = vst.msk [vmem:[#allocation0] sm:$0xf] %vm21, %v20
    %s23 = scalar_lea.vmem [#allocation1], 2
    %v24 = vld [vmem:[%s23] ss:$8 sm:$0xf]
    %25 = vrot.lane.b32.xlu0 %v24, 16
    %v26 = vpop.permute.xlu0 %25
    %vm27 = vcmask 195712
    %28 = vst.msk [vmem:[#allocation0] sm:$0xf] %vm27, %v26
    %s29 = scalar_lea.vmem [#allocation1], 1
    %v30 = vld [vmem:[%s29] ss:$8 sm:$0xf]
    %31 = vrot.lane.b32.xlu0 %v30, 8
    %v32 = vpop.permute.xlu0 %31
    %vm33 = vcmask 130112
    %34 = vst.msk [vmem:[#allocation0] sm:$0xf] %vm33, %v32
    %s36 = sshllo.u32 0, 4
    %v38 = vld [vmem:[#allocation0] sm:%s36]
    %s39 = sshllo.u32 0, 4
    %40 = vst [vmem:[%s1] sm:%s39] %v38

// kernel: tile.73
$region0: #{tile.73}
  #allocation0 [shape = 's32[1]{0}', space=sflag, size = 0x4, scoped, tag = 'scoped memory for tile.73']
  %s0 = inlined_call_operand.vmem [shape: f32[4], index: 0, kind: input, shape index: {}]
  %s1 = inlined_call_operand.vmem [shape: f32[8,4], index: 1, kind: output, shape index: {}]
  // Predicated region
  $region2: #{tile.73} parent=0 // pred_check
    _
  $region3: #{tile.73} parent=0 // pred_check_branch
    %3 = sbr.rel (0) target = $region5
  $region4: #{tile.73} parent=0 // pred_region
    _
  $region5: #{tile.73} parent=0 // pred_fallthru
    _
  %v4 = vld [vmem:[%s0] ss:$0 sm:$0xff]
  %5 = vst [vmem:[%s1] sm:$0xff] %v4

// kernel: tile.74
$region0: #{tile.74}
  %s0 = inlined_call_operand.vmem [shape: f32[8,4], index: 0, kind: input, shape index: {}]
  %s1 = inlined_call_operand.vmem [shape: f32[1,32], index: 1, kind: output, shape index: {}]
  $region1: #{tile.74} parent=0
    #allocation0 [shape = 'u8[4096]{0}', space=vmem, size = 0x1000, scoped, tag = 'scoped mem for output reshape']
    %v2 = vld [vmem:[%s0] sm:$0x1]
    %vm3 = vcmask 31744
    %4 = vst.msk [vmem:[#allocation0] sm:$0x1] %vm3, %v2
    %s5 = scalar_lea.vmem %s0, 7
    %v6 = vld [vmem:[%s5] sm:$0x1]
    %7 = vrot.lane.b32.xlu0 %v6, 28
    %v8 = vpop.permute.xlu0 %7
    %vm9 = vcmask 261344
    %10 = vst.msk [vmem:[#allocation0] sm:$0x1] %vm9, %v8
    %s11 = scalar_lea.vmem %s0, 6
    %v12 = vld [vmem:[%s11] sm:$0x1]
    %13 = vrot.lane.b32.xlu0 %v12, 24
    %v14 = vpop.permute.xlu0 %13
    %vm15 = vcmask 228544
    %16 = vst.msk [vmem:[#allocation0] sm:$0x1] %vm15, %v14
    %s17 = scalar_lea.vmem %s0, 5
    %v18 = vld [vmem:[%s17] sm:$0x1]
    %19 = vrot.lane.b32.xlu0 %v18, 20
    %v20 = vpop.permute.xlu0 %19
    %vm21 = vcmask 195744
    %22 = vst.msk [vmem:[#allocation0] sm:$0x1] %vm21, %v20
    %s23 = scalar_lea.vmem %s0, 4
    %v24 = vld [vmem:[%s23] sm:$0x1]
    %25 = vrot.lane.b32.xlu0 %v24, 16
    %v26 = vpop.permute.xlu0 %25
    %vm27 = vcmask 162944
    %28 = vst.msk [vmem:[#allocation0] sm:$0x1] %vm27, %v26
    %s29 = scalar_lea.vmem %s0, 3
    %v30 = vld [vmem:[%s29] sm:$0x1]
    %31 = vrot.lane.b32.xlu0 %v30, 12
    %v32 = vpop.permute.xlu0 %31
    %vm33 = vcmask 130144
    %34 = vst.msk [vmem:[#allocation0] sm:$0x1] %vm33, %v32
    %s35 = scalar_lea.vmem %s0, 2
    %v36 = vld [vmem:[%s35] sm:$0x1]
    %37 = vrot.lane.b32.xlu0 %v36, 8
    %v38 = vpop.permute.xlu0 %37
    %vm39 = vcmask 97344
    %40 = vst.msk [vmem:[#allocation0] sm:$0x1] %vm39, %v38
    %s41 = scalar_lea.vmem %s0, 1
    %v42 = vld [vmem:[%s41] sm:$0x1]
    %43 = vrot.lane.b32.xlu0 %v42, 4
    %v44 = vpop.permute.xlu0 %43
    %vm45 = vcmask 64544
    %46 = vst.msk [vmem:[#allocation0] sm:$0x1] %vm45, %v44
    %s48 = sshllo.u32 0, 1
    %v50 = vld [vmem:[#allocation0] sm:%s48]
    %s51 = sshllo.u32 0, 1
    %52 = vst [vmem:[%s1] sm:%s51] %v50

// kernel: _lambda_.11
$region0: #{_lambda_.11}
  #allocation0 [shape = 'u32[]', space=smem, size = 0x4, offset = 0x4, fixed_abs, tag = 'smem constant byte address 0x4 - core index']
  #allocation1 [shape = 'u32[144,128]{1,0:T(1,128)}', space=vmem, size = 0x12000, scoped, tag = 'internal scratch']
  %s0 = inlined_call_operand.vmem [shape: bf16[64,192], index: 0, kind: input, shape index: {}]
  %s1 = inlined_call_operand.vmem [shape: bf16[192,32], index: 1, kind: input, shape index: {}]
  %s2 = inlined_call_operand.vmem [shape: f32[1,32], index: 2, kind: input, shape index: {}]
  %s3 = inlined_call_operand.vmem [shape: f32[64,32], index: 3, kind: output, shape index: {}]
  %s4 = sld [smem:[#allocation0]]
  $region45: #{_lambda_.11} parent=0
    _
  %s6 = ssub.s32 1, %s4
  %s7 = scalar_select 0, %s6, %s4
  loop: start=0, step=1, limit=4
  $region2: #{_lambda_.11} parent=0 // loop_pre_header
    _
  $region3: #{_lambda_.11} parent=0 // loop_header
    %s9 = sphi 0, %s13
    %p10 = scmp.ge.s32.totalorder %s9, 4
    %s19 = sphi 0, %s21
    %s22 = sphi 0, %s19
    %s23 = sphi 0, %s22
    %s39 = sphi 0, %s23
    %s43 = sphi 0, %s43
    %s45 = sphi 0, %s43
    %s46 = sphi 0, %s45
    %s60 = sphi 0, %s46
    %s64 = sphi 0, %s64
    %s66 = sphi 0, %s64
    %s67 = sphi 0, %s66
    %s81 = sphi 0, %s67
    %s87 = sphi 0, %s89
    %s90 = sphi 0, %s87
    %s91 = sphi 0, %s90
    %s107 = sphi 0, %s91
  $region4: #{_lambda_.11} parent=0 // loop_header_branch
    %12 = sbr.rel (%p10) target = $region8
  $region5: #{_lambda_.11} parent=0 // loop_body
    %s14 = ssub.s32 %s9, 1
    %s15 = ssub.s32 %s9, 2
    %s16 = sadd.s32 %s9, 1
    %s17 = ssub.s32 %s9, %s16
    %p18 = scmp.eq.s32.totalorder %s17, 0
    %s20 = sadd.s32 %s19, 1
    %s21 = scalar_select %p18, %s19, %s20
    %p24 = pneg %p18
    %p25 = scmp.eq.s32.totalorder %s9, 1
    %p26 = por %p24, %p25
    %p27 = scmp.ne.s32.totalorder %s19, %s22
    %p28 = scmp.eq.s32.totalorder %s9, 0
    %p29 = por %p27, %p28
    %p30 = scmp.ne.s32.totalorder %s19, %s22
    %p31 = scmp.eq.s32.totalorder %s14, 1
    %p32 = por %p30, %p31
    %p33 = scmp.ne.s32.totalorder %s22, %s23
    %p34 = scmp.eq.s32.totalorder %s14, 0
    %p35 = por %p33, %p34
    %p36 = scmp.ne.s32.totalorder %s22, %s23
    %p37 = scmp.eq.s32.totalorder %s15, 1
    %p38 = por %p36, %p37
    %p40 = scmp.ne.s32.totalorder %s23, %s39
    %p41 = scmp.eq.s32.totalorder %s15, 0
    %p42 = por %p40, %p41
    %s44 = sadd.s32 %s43, 1
    %p47 = scmp.eq.s32.totalorder %s9, 1
    %p48 = scmp.ne.s32.totalorder %s43, %s45
    %p49 = scmp.eq.s32.totalorder %s9, 0
    %p50 = por %p48, %p49
    %p51 = scmp.ne.s32.totalorder %s43, %s45
    %p52 = scmp.eq.s32.totalorder %s14, 1
    %p53 = por %p51, %p52
    %p54 = scmp.ne.s32.totalorder %s45, %s46
    %p55 = scmp.eq.s32.totalorder %s14, 0
    %p56 = por %p54, %p55
    %p57 = scmp.ne.s32.totalorder %s45, %s46
    %p58 = scmp.eq.s32.totalorder %s15, 1
    %p59 = por %p57, %p58
    %p61 = scmp.ne.s32.totalorder %s46, %s60
    %p62 = scmp.eq.s32.totalorder %s15, 0
    %p63 = por %p61, %p62
    %s65 = sadd.s32 %s64, 1
    %p68 = scmp.eq.s32.totalorder %s9, 1
    %p69 = scmp.ne.s32.totalorder %s64, %s66
    %p70 = scmp.eq.s32.totalorder %s9, 0
    %p71 = por %p69, %p70
    %p72 = scmp.ne.s32.totalorder %s64, %s66
    %p73 = scmp.eq.s32.totalorder %s14, 1
    %p74 = por %p72, %p73
    %p75 = scmp.ne.s32.totalorder %s66, %s67
    %p76 = scmp.eq.s32.totalorder %s14, 0
    %p77 = por %p75, %p76
    %p78 = scmp.ne.s32.totalorder %s66, %s67
    %p79 = scmp.eq.s32.totalorder %s15, 1
    %p80 = por %p78, %p79
    %p82 = scmp.ne.s32.totalorder %s67, %s81
    %p83 = scmp.eq.s32.totalorder %s15, 0
    %p84 = por %p82, %p83
    %s85 = ssub.s32 %s9, %s16
    %p86 = scmp.eq.s32.totalorder %s85, 0
    %s88 = sadd.s32 %s87, 1
    %s89 = scalar_select %p86, %s87, %s88
    %p92 = pneg %p86
    %p93 = scmp.eq.s32.totalorder %s9, 1
    %p94 = por %p92, %p93
    %p95 = scmp.ne.s32.totalorder %s87, %s90
    %p96 = scmp.eq.s32.totalorder %s9, 0
    %p97 = por %p95, %p96
    %p98 = scmp.ne.s32.totalorder %s87, %s90
    %p99 = scmp.eq.s32.totalorder %s14, 1
    %p100 = por %p98, %p99
    %p101 = scmp.ne.s32.totalorder %s90, %s91
    %p102 = scmp.eq.s32.totalorder %s14, 0
    %p103 = por %p101, %p102
    %p104 = scmp.ne.s32.totalorder %s90, %s91
    %p105 = scmp.eq.s32.totalorder %s15, 1
    %p106 = por %p104, %p105
    %p108 = scmp.ne.s32.totalorder %s91, %s107
    %p109 = scmp.eq.s32.totalorder %s15, 0
    %p110 = por %p108, %p109
    %p111 = scmp.le.s32.totalorder 1, %s9
    %p112 = scmp.lt.s32.totalorder %s9, 3
    %p113 = pnand %p111, %p112
    %p114 = pneg %p113
    // Predicated region
    $region9: #{_lambda_.11} parent=5 // pred_check
      _
    $region10: #{_lambda_.11} parent=5 // pred_check_branch
      %116 = sbr.rel (%p113) target = $region12
    $region11: #{_lambda_.11} parent=5 // pred_region
      %s117 = ssub.s32 %s9, 1
      // Predicated region
      $region13: #{_lambda_.11} parent=11 // pred_check
        %p118 = pneg %p56
      $region14: #{_lambda_.11} parent=11 // pred_check_branch
        %120 = sbr.rel (%p118) target = $region16
      $region15: #{_lambda_.11} parent=11 // pred_region
        _
      $region16: #{_lambda_.11} parent=11 // pred_fallthru
        _
      // Predicated region
      $region17: #{_lambda_.11} parent=11 // pred_check
        %p121 = pneg %p77
      $region18: #{_lambda_.11} parent=11 // pred_check_branch
        %123 = sbr.rel (%p121) target = $region20
      $region19: #{_lambda_.11} parent=11 // pred_region
        _
      $region20: #{_lambda_.11} parent=11 // pred_fallthru
        _
    $region12: #{_lambda_.11} parent=5 // pred_fallthru
      _
    %p124 = scmp.lt.s32.totalorder %s9, 2
    // Predicated region
    $region21: #{_lambda_.11} parent=5 // pred_check
      %p125 = pneg %p124
    $region22: #{_lambda_.11} parent=5 // pred_check_branch
      %127 = sbr.rel (%p125) target = $region24
    $region23: #{_lambda_.11} parent=5 // pred_region
      // Predicated region
      $region25: #{_lambda_.11} parent=23 // pred_check
        %p128 = pneg %p29
      $region26: #{_lambda_.11} parent=23 // pred_check_branch
        %130 = sbr.rel (%p128) target = $region28
      $region27: #{_lambda_.11} parent=23 // pred_region
        %s131 = smul.u32 4, %s9
        %p132 = scmp.lt.s32.totalorder %s131, 7
        %s133 = scalar_select %p132, %s131, 7
        %s134 = smul.addr %s133, 2
        %s135 = smul.addr %s134, 4
        %s136 = scalar_lea.vmem %s0, %s135
        %s137 = smul.u32 4, %s9
      $region28: #{_lambda_.11} parent=23 // pred_fallthru
        _
    $region24: #{_lambda_.11} parent=5 // pred_fallthru
      _
    %p138 = scmp.le.s32.totalorder 1, %s9
    %p139 = scmp.lt.s32.totalorder %s9, 3
    %p140 = pnand %p138, %p139
    %p141 = pneg %p140
    // Predicated region
    $region29: #{_lambda_.11} parent=5 // pred_check
      _
    $region30: #{_lambda_.11} parent=5 // pred_check_branch
      %143 = sbr.rel (%p140) target = $region32
    $region31: #{_lambda_.11} parent=5 // pred_region
      %s144 = ssub.s32 %s9, 1
      %s145 = smul.u32 4, %s14
      %p146 = scmp.lt.s32.totalorder %s145, 7
      %s147 = scalar_select %p146, %s145, 7
      %s148 = smul.addr %s147, 2
      %s149 = smul.addr %s148, 4
      %s150 = scalar_lea.vmem %s0, %s149
      %p151 = pneg %p35
      %p152 = pneg %p32
      %p153 = pneg %p56
      %p154 = pneg %p53
      %p155 = pneg %p77
      %p156 = pneg %p74
      %p157 = pneg %p103
      %p158 = pneg %p100
      %s159 = smul.u32 4, %s14
      %p160 = scmp.lt.s32.totalorder %s159, 7
      %s161 = scalar_select %p160, %s159, 7
      %s162 = smul.addr %s161, 8
      %s163 = scalar_lea.vmem %s3, %s162
      %s164 = smul.u32 4, %s14
      %p165 = scmp.lt.s32.totalorder %s164, 7
      %s166 = scalar_select %p165, %s164, 7
      %s167 = smul.addr %s166, 2
      %s168 = smul.addr %s167, 4
      %s169 = scalar_lea.vmem %s0, %s168
      %s170 = smul.u32 4, %s14
      %s171 = smul.u32 4, %s14
      %p172 = scmp.lt.s32.totalorder %s171, 7
      %s173 = scalar_select %p172, %s171, 7
      %s174 = smul.addr %s173, 8
      %s175 = scalar_lea.vmem %s3, %s174
      %s176 = smul.u32 4, %s14
      %v178 = vld [vmem:[%s169] sm:$0xff]
      %v179 = vld [vmem:[%s169 + $0x8] sm:$0xff]
      %v180 = vld [vmem:[%s169 + $0x10] sm:$0xff]
      %v181 = vld [vmem:[%s169 + $0x18] sm:$0xff]
      %v182 = vld [vmem:[%s1] sm:$0xf]
      %v183 = vld [vmem:[%s1 + $0x4] sm:$0xf]
      %v184 = vld [vmem:[%s1 + $0x8] sm:$0xf]
      %v185 = vld [vmem:[%s1 + $0xc] sm:$0xf]
      %v186 = vld [vmem:[%s1 + $0x10] sm:$0xf]
      %v187 = vld [vmem:[%s1 + $0x14] sm:$0xf]
      %v188 = vld [vmem:[%s1 + $0x18] sm:$0xf]
      %v189 = vld [vmem:[%s1 + $0x1c] sm:$0xf]
      %v190 = vld [vmem:[%s1 + $0x20] sm:$0xf]
      %v191 = vld [vmem:[%s1 + $0x24] sm:$0xf]
      %v192 = vld [vmem:[%s1 + $0x28] sm:$0xf]
      %v193 = vld [vmem:[%s1 + $0x2c] sm:$0xf]
      %v194 = vld [vmem:[%s1 + $0x30] sm:$0xf]
      %v195 = vld [vmem:[%s1 + $0x34] sm:$0xf]
      %v196 = vld [vmem:[%s1 + $0x38] sm:$0xf]
      %v197 = vld [vmem:[%s1 + $0x3c] sm:$0xf]
      %v198 = vld [vmem:[%s1 + $0x40] sm:$0xf]
      %v199 = vld [vmem:[%s1 + $0x44] sm:$0xf]
      %v200 = vld [vmem:[%s1 + $0x48] sm:$0xf]
      %v201 = vld [vmem:[%s1 + $0x4c] sm:$0xf]
      %v202 = vld [vmem:[%s1 + $0x50] sm:$0xf]
      %v203 = vld [vmem:[%s1 + $0x54] sm:$0xf]
      %v204 = vld [vmem:[%s1 + $0x58] sm:$0xf]
      %v205 = vld [vmem:[%s1 + $0x5c] sm:$0xf]
      %v206 = vld [vmem:[%s2] sm:$0x1]
      %v208 = vlaneseq
      %v209 = vshrl.u32 %v208, 7
      %v210 = vsub.s32 0, %v209
      %v211 = vrot.slane %v206, %v210
      %v217 = vunpack.c.l.b16 %v178
      %v218 = vunpack.c.h.b16 %v178
      %v219 = vunpack.c.l.b16 %v179
      %v220 = vunpack.c.h.b16 %v179
      %v221 = vunpack.c.l.b16 %v180
      %v222 = vunpack.c.h.b16 %v180
      %v223 = vunpack.c.l.b16 %v181
      %v224 = vunpack.c.h.b16 %v181
      %v225 = vpack.c.b16 %v219, %v217
      %v226 = vpack.c.b16 %v220, %v218
      %v227 = vpack.c.b16 %v223, %v221
      %v228 = vpack.c.b16 %v224, %v222
      %v255 = vunpack.c.l.b16 %v182
      %v256 = vunpack.c.l.b16 %v183
      %v257 = vunpack.c.l.b16 %v184
      %v258 = vunpack.c.l.b16 %v185
      %v259 = vunpack.c.l.b16 %v186
      %v260 = vunpack.c.l.b16 %v187
      %v261 = vunpack.c.l.b16 %v188
      %v262 = vunpack.c.l.b16 %v189
      %v263 = vunpack.c.l.b16 %v190
      %v264 = vunpack.c.l.b16 %v191
      %v265 = vunpack.c.l.b16 %v192
      %v266 = vunpack.c.l.b16 %v193
      %v267 = vunpack.c.l.b16 %v194
      %v268 = vunpack.c.l.b16 %v195
      %v269 = vunpack.c.l.b16 %v196
      %v270 = vunpack.c.l.b16 %v197
      %v271 = vunpack.c.l.b16 %v198
      %v272 = vunpack.c.l.b16 %v199
      %v273 = vunpack.c.l.b16 %v200
      %v274 = vunpack.c.l.b16 %v201
      %v275 = vunpack.c.l.b16 %v202
      %v276 = vunpack.c.l.b16 %v203
      %v277 = vunpack.c.l.b16 %v204
      %v278 = vunpack.c.l.b16 %v205
      %v279 = vpack.c.b16 %v256, %v255
      %v280 = vpack.c.b16 %v258, %v257
      %v281 = vpack.c.b16 %v260, %v259
      %v282 = vpack.c.b16 %v262, %v261
      %v283 = vpack.c.b16 %v264, %v263
      %v284 = vpack.c.b16 %v266, %v265
      %v285 = vpack.c.b16 %v268, %v267
      %v286 = vpack.c.b16 %v270, %v269
      %v287 = vpack.c.b16 %v272, %v271
      %v288 = vpack.c.b16 %v274, %v273
      %v289 = vpack.c.b16 %v276, %v275
      %v290 = vpack.c.b16 %v278, %v277
      %vm303 = vcmask 523264
      %v305 = vsel %vm303, %v226, 0
      %v308 = vsel %vm303, %v228, 0
      %310 = vmatprep.subr.bf16.mxu0 0
      %311 = vmatpush1.bf16.msra.mxu0 %v279
      %312 = vmatprep.subr.bf16.mxu0 0
      %313 = vmatpush1.bf16.msra.mxu0 %v280
      %314 = vmatprep.subr.bf16.mxu0 0
      %315 = vmatpush1.bf16.msra.mxu0 %v281
      %316 = vmatprep.subr.bf16.mxu0 0
      %317 = vmatpush1.bf16.msra.mxu0 %v282
      %318 = vmatprep.subr.bf16.mxu0 0
      %319 = vmatpush1.bf16.msra.mxu0 %v283
      %320 = vmatprep.subr.bf16.mxu0 0
      %321 = vmatpush1.bf16.msra.mxu0 %v284
      %322 = vmatprep.subr.bf16.mxu0 0
      %323 = vmatpush1.bf16.msra.mxu0 %v285
      %324 = vmatprep.subr.bf16.mxu0 0
      %325 = vmatpush1.bf16.msra.mxu0 %v286
      %326 = vmatprep.subr.bf16.mxu0 0
      %327 = vmatpush1.bf16.msra.mxu0 %v287
      %328 = vmatprep.subr.bf16.mxu0 0
      %329 = vmatpush1.bf16.msra.mxu0 %v288
      %330 = vmatprep.subr.bf16.mxu0 0
      %331 = vmatpush1.bf16.msra.mxu0 %v289
      %332 = vmatprep.subr.bf16.mxu0 0
      %333 = vmatpush1.bf16.msra.mxu0 %v290
      %334 = vmatprep.subr.bf16.mxu0 0
      %335 = vmatpush1.bf16.msra.mxu0 0
      %336 = vmatprep.subr.bf16.mxu0 0
      %337 = vmatpush1.bf16.msra.mxu0 0
      %338 = vmatprep.subr.bf16.mxu0 0
      %339 = vmatpush1.bf16.msra.mxu0 0
      %340 = vmatprep.subr.bf16.mxu0 0
      %341 = vmatpush1.bf16.msra.mxu0 0
      %342 = vmatprep.mubr.bf16.mxu0 %v305
      %343 = vmatmul.mubr.bf16.gmra.mrb[0].mxu0 %v225
      %v344 = vpop.f32.mrb[0].mxu0
      %v345 = vadd.f32 %v211, %v344
      %v346 = vpop.f32.mrb[0].mxu0
      %v347 = vpop.f32.mrb[0].mxu0
      %v348 = vadd.f32 %v211, %v347
      %v349 = vpop.f32.mrb[0].mxu0
      %350 = vmatprep.mubr.bf16.mxu0 %v308
      %351 = vmatmul.mubr.bf16.gmra.mrb[0].mxu0 %v227
      %v352 = vpop.f32.mrb[0].mxu0
      %v353 = vadd.f32 %v211, %v352
      %v354 = vpop.f32.mrb[0].mxu0
      %v355 = vpop.f32.mrb[0].mxu0
      %v356 = vadd.f32 %v211, %v355
      %v357 = vpop.f32.mrb[0].mxu0
      %358 = vdwg.mxu0
      %vm359 = vcmask 261120
      %360 = vst.msk [vmem:[%s175] sm:$0xff] %vm359, %v345
      %361 = vst.msk [vmem:[%s175 + $0x8] sm:$0xff] %vm359, %v348
      %362 = vst.msk [vmem:[%s175 + $0x10] sm:$0xff] %vm359, %v353
      %363 = vst.msk [vmem:[%s175 + $0x18] sm:$0xff] %vm359, %v356
      %s364 = smul.u32 4, %s14
      %p365 = scmp.lt.s32.totalorder %s364, 7
      %s366 = scalar_select %p365, %s364, 7
      %s367 = smul.addr %s366, 8
      %s368 = scalar_lea.vmem %s3, %s367
      // Predicated region
      $region33: #{_lambda_.11} parent=31 // pred_check
        %p369 = pneg %p100
      $region34: #{_lambda_.11} parent=31 // pred_check_branch
        %371 = sbr.rel (%p369) target = $region36
      $region35: #{_lambda_.11} parent=31 // pred_region
        %s372 = smul.u32 4, %s14
      $region36: #{_lambda_.11} parent=31 // pred_fallthru
        _
    $region32: #{_lambda_.11} parent=5 // pred_fallthru
      _
    %p373 = scmp.le.s32.totalorder 2, %s9
    // Predicated region
    $region37: #{_lambda_.11} parent=5 // pred_check
      %p374 = pneg %p373
    $region38: #{_lambda_.11} parent=5 // pred_check_branch
      %376 = sbr.rel (%p374) target = $region40
    $region39: #{_lambda_.11} parent=5 // pred_region
      %s377 = ssub.s32 %s9, 2
      // Predicated region
      $region41: #{_lambda_.11} parent=39 // pred_check
        %p378 = pneg %p106
      $region42: #{_lambda_.11} parent=39 // pred_check_branch
        %380 = sbr.rel (%p378) target = $region44
      $region43: #{_lambda_.11} parent=39 // pred_region
        %s381 = smul.u32 4, %s15
        %p382 = scmp.lt.s32.totalorder %s381, 7
        %s383 = scalar_select %p382, %s381, 7
        %s384 = smul.addr %s383, 8
        %s385 = scalar_lea.vmem %s3, %s384
      $region44: #{_lambda_.11} parent=39 // pred_fallthru
        _
    $region40: #{_lambda_.11} parent=5 // pred_fallthru
      _
  $region6: #{_lambda_.11} parent=0 // loop_footer
    %s13 = sadd.s32 1, %s9
  $region7: #{_lambda_.11} parent=0 // loop_footer_branch
    %8 = sbr.rel target = $region3
  $region8: #{_lambda_.11} parent=0 // loop_exit
    _

// kernel: _lambda_.8
$region0: #{_lambda_.8}
  #allocation0 [shape = 'u32[]', space=smem, size = 0x4, offset = 0x4, fixed_abs, tag = 'smem constant byte address 0x4 - core index']
  #allocation1 [shape = 'u32[144,128]{1,0:T(1,128)}', space=vmem, size = 0x12000, scoped, tag = 'internal scratch']
  %s0 = inlined_call_operand.vmem [shape: bf16[32,64], index: 0, kind: input, shape index: {}]
  %s1 = inlined_call_operand.vmem [shape: bf16[64,64], index: 1, kind: input, shape index: {}]
  %s2 = inlined_call_operand.vmem [shape: f32[1,64], index: 2, kind: input, shape index: {}]
  %s3 = inlined_call_operand.vmem [shape: f32[32,64], index: 3, kind: output, shape index: {}]
  %s4 = sld [smem:[#allocation0]]
  $region22: #{_lambda_.8} parent=0
    _
  %s6 = ssub.s32 1, %s4
  %s7 = scalar_select 0, %s6, %s4
  // Predicated region
  $region2: #{_lambda_.8} parent=0 // pred_check
    _
  $region3: #{_lambda_.8} parent=0 // pred_check_branch
    %9 = sbr.rel (0) target = $region5
  $region4: #{_lambda_.8} parent=0 // pred_region
    _
  $region5: #{_lambda_.8} parent=0 // pred_fallthru
    _
  // Predicated region
  $region6: #{_lambda_.8} parent=0 // pred_check
    _
  $region7: #{_lambda_.8} parent=0 // pred_check_branch
    %11 = sbr.rel (0) target = $region9
  $region8: #{_lambda_.8} parent=0 // pred_region
    _
  $region9: #{_lambda_.8} parent=0 // pred_fallthru
    _
  // Predicated region
  $region10: #{_lambda_.8} parent=0 // pred_check
    _
  $region11: #{_lambda_.8} parent=0 // pred_check_branch
    %13 = sbr.rel (0) target = $region13
  $region12: #{_lambda_.8} parent=0 // pred_region
    _
  $region13: #{_lambda_.8} parent=0 // pred_fallthru
    _
  %v15 = vld [vmem:[%s0] sm:$0xf]
  %v16 = vld [vmem:[%s0 + $0x4] sm:$0xf]
  %v17 = vld [vmem:[%s0 + $0x8] sm:$0xf]
  %v18 = vld [vmem:[%s0 + $0xc] sm:$0xf]
  %v19 = vld [vmem:[%s1] sm:$0xf]
  %v20 = vld [vmem:[%s1 + $0x4] sm:$0xf]
  %v21 = vld [vmem:[%s1 + $0x8] sm:$0xf]
  %v22 = vld [vmem:[%s1 + $0xc] sm:$0xf]
  %v23 = vld [vmem:[%s1 + $0x10] sm:$0xf]
  %v24 = vld [vmem:[%s1 + $0x14] sm:$0xf]
  %v25 = vld [vmem:[%s1 + $0x18] sm:$0xf]
  %v26 = vld [vmem:[%s1 + $0x1c] sm:$0xf]
  %v27 = vld [vmem:[%s2] sm:$0x1]
  %v29 = vlaneseq
  %v30 = vshrl.u32 %v29, 7
  %v31 = vsub.s32 0, %v30
  %v32 = vrot.slane %v27, %v31
  %v38 = vunpack.c.l.b16 %v15
  %v39 = vunpack.c.l.b16 %v16
  %v40 = vunpack.c.l.b16 %v17
  %v41 = vunpack.c.l.b16 %v18
  %v42 = vpack.c.b16 %v39, %v38
  %v43 = vpack.c.b16 %v41, %v40
  %v52 = vunpack.c.l.b16 %v19
  %v53 = vunpack.c.l.b16 %v20
  %v54 = vunpack.c.l.b16 %v21
  %v55 = vunpack.c.l.b16 %v22
  %v56 = vunpack.c.l.b16 %v23
  %v57 = vunpack.c.l.b16 %v24
  %v58 = vunpack.c.l.b16 %v25
  %v59 = vunpack.c.l.b16 %v26
  %v60 = vpack.c.b16 %v53, %v52
  %v61 = vpack.c.b16 %v55, %v54
  %v62 = vpack.c.b16 %v57, %v56
  %v63 = vpack.c.b16 %v59, %v58
  %vm68 = vcmask 523264
  %v70 = vsel %vm68, %v42, 0
  %v73 = vsel %vm68, %v43, 0
  %75 = vmatprep.subr.bf16.mxu0 0
  %76 = vmatpush1.bf16.msra.mxu0 %v60
  %77 = vmatprep.subr.bf16.mxu0 0
  %78 = vmatpush1.bf16.msra.mxu0 %v61
  %79 = vmatprep.subr.bf16.mxu0 0
  %80 = vmatpush1.bf16.msra.mxu0 %v62
  %81 = vmatprep.subr.bf16.mxu0 0
  %82 = vmatpush1.bf16.msra.mxu0 %v63
  %83 = vmatprep.subr.bf16.mxu0 0
  %84 = vmatpush1.bf16.msra.mxu0 0
  %85 = vmatprep.subr.bf16.mxu0 0
  %86 = vmatpush1.bf16.msra.mxu0 0
  %87 = vmatprep.subr.bf16.mxu0 0
  %88 = vmatpush1.bf16.msra.mxu0 0
  %89 = vmatprep.subr.bf16.mxu0 0
  %90 = vmatpush1.bf16.msra.mxu0 0
  %91 = vmatprep.subr.bf16.mxu0 0
  %92 = vmatpush1.bf16.msra.mxu0 0
  %93 = vmatprep.subr.bf16.mxu0 0
  %94 = vmatpush1.bf16.msra.mxu0 0
  %95 = vmatprep.subr.bf16.mxu0 0
  %96 = vmatpush1.bf16.msra.mxu0 0
  %97 = vmatprep.subr.bf16.mxu0 0
  %98 = vmatpush1.bf16.msra.mxu0 0
  %99 = vmatprep.subr.bf16.mxu0 0
  %100 = vmatpush1.bf16.msra.mxu0 0
  %101 = vmatprep.subr.bf16.mxu0 0
  %102 = vmatpush1.bf16.msra.mxu0 0
  %103 = vmatprep.subr.bf16.mxu0 0
  %104 = vmatpush1.bf16.msra.mxu0 0
  %105 = vmatprep.subr.bf16.mxu0 0
  %106 = vmatpush1.bf16.msra.mxu0 0
  %107 = vmatprep.mubr.bf16.mxu0 0
  %108 = vmatmul.mubr.bf16.gmra.mrb[0].mxu0 %v70
  %v109 = vpop.f32.mrb[0].mxu0
  %v110 = vadd.f32 %v32, %v109
  %v111 = vpop.f32.mrb[0].mxu0
  %v112 = vpop.f32.mrb[0].mxu0
  %v113 = vadd.f32 %v32, %v112
  %v114 = vpop.f32.mrb[0].mxu0
  %115 = vmatprep.mubr.bf16.mxu0 0
  %116 = vmatmul.mubr.bf16.gmra.mrb[0].mxu0 %v73
  %v117 = vpop.f32.mrb[0].mxu0
  %v118 = vadd.f32 %v32, %v117
  %v119 = vpop.f32.mrb[0].mxu0
  %v120 = vpop.f32.mrb[0].mxu0
  %v121 = vadd.f32 %v32, %v120
  %v122 = vpop.f32.mrb[0].mxu0
  %123 = vdwg.mxu0
  %124 = vst.msk [vmem:[%s3] sm:$0xff] %vm68, %v110
  %125 = vst.msk [vmem:[%s3 + $0x8] sm:$0xff] %vm68, %v113
  %126 = vst.msk [vmem:[%s3 + $0x10] sm:$0xff] %vm68, %v118
  %127 = vst.msk [vmem:[%s3 + $0x18] sm:$0xff] %vm68, %v121
  // Predicated region
  $region14: #{_lambda_.8} parent=0 // pred_check
    _
  $region15: #{_lambda_.8} parent=0 // pred_check_branch
    %129 = sbr.rel (0) target = $region17
  $region16: #{_lambda_.8} parent=0 // pred_region
    _
  $region17: #{_lambda_.8} parent=0 // pred_fallthru
    _
  // Predicated region
  $region18: #{_lambda_.8} parent=0 // pred_check
    _
  $region19: #{_lambda_.8} parent=0 // pred_check_branch
    %131 = sbr.rel (0) target = $region21
  $region20: #{_lambda_.8} parent=0 // pred_region
    _
  $region21: #{_lambda_.8} parent=0 // pred_fallthru
    _

// kernel: mul.128
$region0: #{mul.128}
  %s0 = inlined_call_operand.vmem [shape: f32[5,8,8], index: 0, kind: input, shape index: {}]
  %s1 = inlined_call_operand.vmem [shape: f32[40,8], index: 1, kind: output, shape index: {}]
  %v2 = vld [vmem:[%s0] ss:$8 sm:$0xf]
  %v3 = vld [vmem:[%s0] ss:$8 sm:$0xf0]
  %vm4 = vcmask 1047556
  %v5 = vsel %vm4, %v3, %v2
  %vm6 = vcmask 64512
  %7 = vst.msk [vmem:[%s1] sm:$0xff] %vm6, %v5
  %s8 = scalar_lea.vmem %s0, 4
  %v9 = vld [vmem:[%s8] ss:$8 sm:$0xf]
  %s10 = scalar_lea.vmem %s0, 4
  %v11 = vld [vmem:[%s10] ss:$8 sm:$0xf0]
  %vm12 = vcmask 1047556
  %v13 = vsel %vm12, %v11, %v9
  %14 = vrot.lane.b32.xlu0 %v13, 32
  %v15 = vpop.permute.xlu0 %14
  %vm16 = vcmask 326912
  %17 = vst.msk [vmem:[%s1] sm:$0xff] %vm16, %v15
  %s18 = scalar_lea.vmem %s0, 3
  %v19 = vld [vmem:[%s18] ss:$8 sm:$0xf]
  %s20 = scalar_lea.vmem %s0, 3
  %v21 = vld [vmem:[%s20] ss:$8 sm:$0xf0]
  %vm22 = vcmask 1047556
  %v23 = vsel %vm22, %v21, %v19
  %24 = vrot.lane.b32.xlu0 %v23, 24
  %v25 = vpop.permute.xlu0 %24
  %vm26 = vcmask 261312
  %27 = vst.msk [vmem:[%s1] sm:$0xff] %vm26, %v25
  %s28 = scalar_lea.vmem %s0, 2
  %v29 = vld [vmem:[%s28] ss:$8 sm:$0xf]
  %s30 = scalar_lea.vmem %s0, 2
  %v31 = vld [vmem:[%s30] ss:$8 sm:$0xf0]
  %vm32 = vcmask 1047556
  %v33 = vsel %vm32, %v31, %v29
  %34 = vrot.lane.b32.xlu0 %v33, 16
  %v35 = vpop.permute.xlu0 %34
  %vm36 = vcmask 195712
  %37 = vst.msk [vmem:[%s1] sm:$0xff] %vm36, %v35
  %s38 = scalar_lea.vmem %s0, 1
  %v39 = vld [vmem:[%s38] ss:$8 sm:$0xf]
  %s40 = scalar_lea.vmem %s0, 1
  %v41 = vld [vmem:[%s40] ss:$8 sm:$0xf0]
  %vm42 = vcmask 1047556
  %v43 = vsel %vm42, %v41, %v39
  %44 = vrot.lane.b32.xlu0 %v43, 8
  %v45 = vpop.permute.xlu0 %44
  %vm46 = vcmask 130112
  %47 = vst.msk [vmem:[%s1] sm:$0xff] %vm46, %v45

// kernel: _lambda_.9
$region0: #{_lambda_.9}
  #allocation0 [shape = 'u32[]', space=smem, size = 0x4, offset = 0x4, fixed_abs, tag = 'smem constant byte address 0x4 - core index']
  #allocation1 [shape = 'u32[144,128]{1,0:T(1,128)}', space=vmem, size = 0x12000, scoped, tag = 'internal scratch']
  %s0 = inlined_call_operand.vmem [shape: bf16[48,320], index: 0, kind: input, shape index: {}]
  %s1 = inlined_call_operand.vmem [shape: bf16[320,64], index: 1, kind: input, shape index: {}]
  %s2 = inlined_call_operand.vmem [shape: f32[1,64], index: 2, kind: input, shape index: {}]
  %s3 = inlined_call_operand.vmem [shape: f32[48,64], index: 3, kind: output, shape index: {}]
  %s4 = sld [smem:[#allocation0]]
  $region45: #{_lambda_.9} parent=0
    _
  %s6 = ssub.s32 1, %s4
  %s7 = scalar_select 0, %s6, %s4
  loop: start=0, step=1, limit=4
  $region2: #{_lambda_.9} parent=0 // loop_pre_header
    _
  $region3: #{_lambda_.9} parent=0 // loop_header
    %s9 = sphi 0, %s13
    %p10 = scmp.ge.s32.totalorder %s9, 4
    %s19 = sphi 0, %s21
    %s22 = sphi 0, %s19
    %s23 = sphi 0, %s22
    %s39 = sphi 0, %s23
    %s43 = sphi 0, %s43
    %s45 = sphi 0, %s43
    %s46 = sphi 0, %s45
    %s60 = sphi 0, %s46
    %s64 = sphi 0, %s64
    %s66 = sphi 0, %s64
    %s67 = sphi 0, %s66
    %s81 = sphi 0, %s67
    %s87 = sphi 0, %s89
    %s90 = sphi 0, %s87
    %s91 = sphi 0, %s90
    %s107 = sphi 0, %s91
  $region4: #{_lambda_.9} parent=0 // loop_header_branch
    %12 = sbr.rel (%p10) target = $region8
  $region5: #{_lambda_.9} parent=0 // loop_body
    %s14 = ssub.s32 %s9, 1
    %s15 = ssub.s32 %s9, 2
    %s16 = sadd.s32 %s9, 1
    %s17 = ssub.s32 %s9, %s16
    %p18 = scmp.eq.s32.totalorder %s17, 0
    %s20 = sadd.s32 %s19, 1
    %s21 = scalar_select %p18, %s19, %s20
    %p24 = pneg %p18
    %p25 = scmp.eq.s32.totalorder %s9, 1
    %p26 = por %p24, %p25
    %p27 = scmp.ne.s32.totalorder %s19, %s22
    %p28 = scmp.eq.s32.totalorder %s9, 0
    %p29 = por %p27, %p28
    %p30 = scmp.ne.s32.totalorder %s19, %s22
    %p31 = scmp.eq.s32.totalorder %s14, 1
    %p32 = por %p30, %p31
    %p33 = scmp.ne.s32.totalorder %s22, %s23
    %p34 = scmp.eq.s32.totalorder %s14, 0
    %p35 = por %p33, %p34
    %p36 = scmp.ne.s32.totalorder %s22, %s23
    %p37 = scmp.eq.s32.totalorder %s15, 1
    %p38 = por %p36, %p37
    %p40 = scmp.ne.s32.totalorder %s23, %s39
    %p41 = scmp.eq.s32.totalorder %s15, 0
    %p42 = por %p40, %p41
    %s44 = sadd.s32 %s43, 1
    %p47 = scmp.eq.s32.totalorder %s9, 1
    %p48 = scmp.ne.s32.totalorder %s43, %s45
    %p49 = scmp.eq.s32.totalorder %s9, 0
    %p50 = por %p48, %p49
    %p51 = scmp.ne.s32.totalorder %s43, %s45
    %p52 = scmp.eq.s32.totalorder %s14, 1
    %p53 = por %p51, %p52
    %p54 = scmp.ne.s32.totalorder %s45, %s46
    %p55 = scmp.eq.s32.totalorder %s14, 0
    %p56 = por %p54, %p55
    %p57 = scmp.ne.s32.totalorder %s45, %s46
    %p58 = scmp.eq.s32.totalorder %s15, 1
    %p59 = por %p57, %p58
    %p61 = scmp.ne.s32.totalorder %s46, %s60
    %p62 = scmp.eq.s32.totalorder %s15, 0
    %p63 = por %p61, %p62
    %s65 = sadd.s32 %s64, 1
    %p68 = scmp.eq.s32.totalorder %s9, 1
    %p69 = scmp.ne.s32.totalorder %s64, %s66
    %p70 = scmp.eq.s32.totalorder %s9, 0
    %p71 = por %p69, %p70
    %p72 = scmp.ne.s32.totalorder %s64, %s66
    %p73 = scmp.eq.s32.totalorder %s14, 1
    %p74 = por %p72, %p73
    %p75 = scmp.ne.s32.totalorder %s66, %s67
    %p76 = scmp.eq.s32.totalorder %s14, 0
    %p77 = por %p75, %p76
    %p78 = scmp.ne.s32.totalorder %s66, %s67
    %p79 = scmp.eq.s32.totalorder %s15, 1
    %p80 = por %p78, %p79
    %p82 = scmp.ne.s32.totalorder %s67, %s81
    %p83 = scmp.eq.s32.totalorder %s15, 0
    %p84 = por %p82, %p83
    %s85 = ssub.s32 %s9, %s16
    %p86 = scmp.eq.s32.totalorder %s85, 0
    %s88 = sadd.s32 %s87, 1
    %s89 = scalar_select %p86, %s87, %s88
    %p92 = pneg %p86
    %p93 = scmp.eq.s32.totalorder %s9, 1
    %p94 = por %p92, %p93
    %p95 = scmp.ne.s32.totalorder %s87, %s90
    %p96 = scmp.eq.s32.totalorder %s9, 0
    %p97 = por %p95, %p96
    %p98 = scmp.ne.s32.totalorder %s87, %s90
    %p99 = scmp.eq.s32.totalorder %s14, 1
    %p100 = por %p98, %p99
    %p101 = scmp.ne.s32.totalorder %s90, %s91
    %p102 = scmp.eq.s32.totalorder %s14, 0
    %p103 = por %p101, %p102
    %p104 = scmp.ne.s32.totalorder %s90, %s91
    %p105 = scmp.eq.s32.totalorder %s15, 1
    %p106 = por %p104, %p105
    %p108 = scmp.ne.s32.totalorder %s91, %s107
    %p109 = scmp.eq.s32.totalorder %s15, 0
    %p110 = por %p108, %p109
    %p111 = scmp.le.s32.totalorder 1, %s9
    %p112 = scmp.lt.s32.totalorder %s9, 3
    %p113 = pnand %p111, %p112
    %p114 = pneg %p113
    // Predicated region
    $region9: #{_lambda_.9} parent=5 // pred_check
      _
    $region10: #{_lambda_.9} parent=5 // pred_check_branch
      %116 = sbr.rel (%p113) target = $region12
    $region11: #{_lambda_.9} parent=5 // pred_region
      %s117 = ssub.s32 %s9, 1
      // Predicated region
      $region13: #{_lambda_.9} parent=11 // pred_check
        %p118 = pneg %p56
      $region14: #{_lambda_.9} parent=11 // pred_check_branch
        %120 = sbr.rel (%p118) target = $region16
      $region15: #{_lambda_.9} parent=11 // pred_region
        _
      $region16: #{_lambda_.9} parent=11 // pred_fallthru
        _
      // Predicated region
      $region17: #{_lambda_.9} parent=11 // pred_check
        %p121 = pneg %p77
      $region18: #{_lambda_.9} parent=11 // pred_check_branch
        %123 = sbr.rel (%p121) target = $region20
      $region19: #{_lambda_.9} parent=11 // pred_region
        _
      $region20: #{_lambda_.9} parent=11 // pred_fallthru
        _
    $region12: #{_lambda_.9} parent=5 // pred_fallthru
      _
    %p124 = scmp.lt.s32.totalorder %s9, 2
    // Predicated region
    $region21: #{_lambda_.9} parent=5 // pred_check
      %p125 = pneg %p124
    $region22: #{_lambda_.9} parent=5 // pred_check_branch
      %127 = sbr.rel (%p125) target = $region24
    $region23: #{_lambda_.9} parent=5 // pred_region
      // Predicated region
      $region25: #{_lambda_.9} parent=23 // pred_check
        %p128 = pneg %p29
      $region26: #{_lambda_.9} parent=23 // pred_check_branch
        %130 = sbr.rel (%p128) target = $region28
      $region27: #{_lambda_.9} parent=23 // pred_region
        %s131 = smul.u32 3, %s9
        %p132 = scmp.lt.s32.totalorder %s131, 5
        %s133 = scalar_select %p132, %s131, 5
        %s134 = smul.addr %s133, 3
        %s135 = smul.addr %s134, 4
        %s136 = scalar_lea.vmem %s0, %s135
        %s137 = smul.u32 3, %s9
      $region28: #{_lambda_.9} parent=23 // pred_fallthru
        _
    $region24: #{_lambda_.9} parent=5 // pred_fallthru
      _
    %p138 = scmp.le.s32.totalorder 1, %s9
    %p139 = scmp.lt.s32.totalorder %s9, 3
    %p140 = pnand %p138, %p139
    %p141 = pneg %p140
    // Predicated region
    $region29: #{_lambda_.9} parent=5 // pred_check
      _
    $region30: #{_lambda_.9} parent=5 // pred_check_branch
      %143 = sbr.rel (%p140) target = $region32
    $region31: #{_lambda_.9} parent=5 // pred_region
      %s144 = ssub.s32 %s9, 1
      %s145 = smul.u32 3, %s14
      %p146 = scmp.lt.s32.totalorder %s145, 5
      %s147 = scalar_select %p146, %s145, 5
      %s148 = smul.addr %s147, 3
      %s149 = smul.addr %s148, 4
      %s150 = scalar_lea.vmem %s0, %s149
      %p151 = pneg %p35
      %p152 = pneg %p32
      %p153 = pneg %p56
      %p154 = pneg %p53
      %p155 = pneg %p77
      %p156 = pneg %p74
      %p157 = pneg %p103
      %p158 = pneg %p100
      %s159 = smul.u32 3, %s14
      %p160 = scmp.lt.s32.totalorder %s159, 5
      %s161 = scalar_select %p160, %s159, 5
      %s162 = smul.addr %s161, 8
      %s163 = scalar_lea.vmem %s3, %s162
      %s164 = smul.u32 3, %s14
      %p165 = scmp.lt.s32.totalorder %s164, 5
      %s166 = scalar_select %p165, %s164, 5
      %s167 = smul.addr %s166, 3
      %s168 = smul.addr %s167, 4
      %s169 = scalar_lea.vmem %s0, %s168
      %s170 = smul.u32 3, %s14
      %s171 = smul.u32 3, %s14
      %p172 = scmp.lt.s32.totalorder %s171, 5
      %s173 = scalar_select %p172, %s171, 5
      %s174 = smul.addr %s173, 8
      %s175 = scalar_lea.vmem %s3, %s174
      %s176 = smul.u32 3, %s14
      %v178 = vld [vmem:[%s169] sm:$0xff]
      %v179 = vld [vmem:[%s169 + $0x8] sm:$0xf]
      %v180 = vld [vmem:[%s169 + $0xc] sm:$0xff]
      %v181 = vld [vmem:[%s169 + $0x14] sm:$0xf]
      %v182 = vld [vmem:[%s169 + $0x18] sm:$0xff]
      %v183 = vld [vmem:[%s169 + $0x20] sm:$0xf]
      %v184 = vld [vmem:[%s1] sm:$0xf]
      %v185 = vld [vmem:[%s1 + $0x4] sm:$0xf]
      %v186 = vld [vmem:[%s1 + $0x8] sm:$0xf]
      %v187 = vld [vmem:[%s1 + $0xc] sm:$0xf]
      %v188 = vld [vmem:[%s1 + $0x10] sm:$0xf]
      %v189 = vld [vmem:[%s1 + $0x14] sm:$0xf]
      %v190 = vld [vmem:[%s1 + $0x18] sm:$0xf]
      %v191 = vld [vmem:[%s1 + $0x1c] sm:$0xf]
      %v192 = vld [vmem:[%s1 + $0x20] sm:$0xf]
      %v193 = vld [vmem:[%s1 + $0x24] sm:$0xf]
      %v194 = vld [vmem:[%s1 + $0x28] sm:$0xf]
      %v195 = vld [vmem:[%s1 + $0x2c] sm:$0xf]
      %v196 = vld [vmem:[%s1 + $0x30] sm:$0xf]
      %v197 = vld [vmem:[%s1 + $0x34] sm:$0xf]
      %v198 = vld [vmem:[%s1 + $0x38] sm:$0xf]
      %v199 = vld [vmem:[%s1 + $0x3c] sm:$0xf]
      %v200 = vld [vmem:[%s1 + $0x40] sm:$0xf]
      %v201 = vld [vmem:[%s1 + $0x44] sm:$0xf]
      %v202 = vld [vmem:[%s1 + $0x48] sm:$0xf]
      %v203 = vld [vmem:[%s1 + $0x4c] sm:$0xf]
      %v204 = vld [vmem:[%s1 + $0x50] sm:$0xf]
      %v205 = vld [vmem:[%s1 + $0x54] sm:$0xf]
      %v206 = vld [vmem:[%s1 + $0x58] sm:$0xf]
      %v207 = vld [vmem:[%s1 + $0x5c] sm:$0xf]
      %v208 = vld [vmem:[%s1 + $0x60] sm:$0xf]
      %v209 = vld [vmem:[%s1 + $0x64] sm:$0xf]
      %v210 = vld [vmem:[%s1 + $0x68] sm:$0xf]
      %v211 = vld [vmem:[%s1 + $0x6c] sm:$0xf]
      %v212 = vld [vmem:[%s1 + $0x70] sm:$0xf]
      %v213 = vld [vmem:[%s1 + $0x74] sm:$0xf]
      %v214 = vld [vmem:[%s1 + $0x78] sm:$0xf]
      %v215 = vld [vmem:[%s1 + $0x7c] sm:$0xf]
      %v216 = vld [vmem:[%s1 + $0x80] sm:$0xf]
      %v217 = vld [vmem:[%s1 + $0x84] sm:$0xf]
      %v218 = vld [vmem:[%s1 + $0x88] sm:$0xf]
      %v219 = vld [vmem:[%s1 + $0x8c] sm:$0xf]
      %v220 = vld [vmem:[%s1 + $0x90] sm:$0xf]
      %v221 = vld [vmem:[%s1 + $0x94] sm:$0xf]
      %v222 = vld [vmem:[%s1 + $0x98] sm:$0xf]
      %v223 = vld [vmem:[%s1 + $0x9c] sm:$0xf]
      %v224 = vld [vmem:[%s2] sm:$0x1]
      %v226 = vlaneseq
      %v227 = vshrl.u32 %v226, 7
      %v228 = vsub.s32 0, %v227
      %v229 = vrot.slane %v224, %v228
      %v237 = vunpack.c.l.b16 %v178
      %v238 = vunpack.c.h.b16 %v178
      %v239 = vunpack.c.l.b16 %v179
      %v240 = vunpack.c.l.b16 %v180
      %v241 = vunpack.c.h.b16 %v180
      %v242 = vunpack.c.l.b16 %v181
      %v243 = vunpack.c.l.b16 %v182
      %v244 = vunpack.c.h.b16 %v182
      %v245 = vunpack.c.l.b16 %v183
      %v246 = vpack.c.b16 %v240, %v237
      %v247 = vpack.c.b16 %v241, %v238
      %v248 = vpack.c.b16 %v242, %v239
      %v249 = vpack.c.b16 %v243, %v243
      %v250 = vpack.c.b16 %v244, %v244
      %v251 = vpack.c.b16 %v245, %v245
      %v296 = vunpack.c.l.b16 %v184
      %v297 = vunpack.c.l.b16 %v185
      %v298 = vunpack.c.l.b16 %v186
      %v299 = vunpack.c.l.b16 %v187
      %v300 = vunpack.c.l.b16 %v188
      %v301 = vunpack.c.l.b16 %v189
      %v302 = vunpack.c.l.b16 %v190
      %v303 = vunpack.c.l.b16 %v191
      %v304 = vunpack.c.l.b16 %v192
      %v305 = vunpack.c.l.b16 %v193
      %v306 = vunpack.c.l.b16 %v194
      %v307 = vunpack.c.l.b16 %v195
      %v308 = vunpack.c.l.b16 %v196
      %v309 = vunpack.c.l.b16 %v197
      %v310 = vunpack.c.l.b16 %v198
      %v311 = vunpack.c.l.b16 %v199
      %v312 = vunpack.c.l.b16 %v200
      %v313 = vunpack.c.l.b16 %v201
      %v314 = vunpack.c.l.b16 %v202
      %v315 = vunpack.c.l.b16 %v203
      %v316 = vunpack.c.l.b16 %v204
      %v317 = vunpack.c.l.b16 %v205
      %v318 = vunpack.c.l.b16 %v206
      %v319 = vunpack.c.l.b16 %v207
      %v320 = vunpack.c.l.b16 %v208
      %v321 = vunpack.c.l.b16 %v209
      %v322 = vunpack.c.l.b16 %v210
      %v323 = vunpack.c.l.b16 %v211
      %v324 = vunpack.c.l.b16 %v212
      %v325 = vunpack.c.l.b16 %v213
      %v326 = vunpack.c.l.b16 %v214
      %v327 = vunpack.c.l.b16 %v215
      %v328 = vunpack.c.l.b16 %v216
      %v329 = vunpack.c.l.b16 %v217
      %v330 = vunpack.c.l.b16 %v218
      %v331 = vunpack.c.l.b16 %v219
      %v332 = vunpack.c.l.b16 %v220
      %v333 = vunpack.c.l.b16 %v221
      %v334 = vunpack.c.l.b16 %v222
      %v335 = vunpack.c.l.b16 %v223
      %v336 = vpack.c.b16 %v297, %v296
      %v337 = vpack.c.b16 %v299, %v298
      %v338 = vpack.c.b16 %v301, %v300
      %v339 = vpack.c.b16 %v303, %v302
      %v340 = vpack.c.b16 %v305, %v304
      %v341 = vpack.c.b16 %v307, %v306
      %v342 = vpack.c.b16 %v309, %v308
      %v343 = vpack.c.b16 %v311, %v310
      %v344 = vpack.c.b16 %v313, %v312
      %v345 = vpack.c.b16 %v315, %v314
      %v346 = vpack.c.b16 %v317, %v316
      %v347 = vpack.c.b16 %v319, %v318
      %v348 = vpack.c.b16 %v321, %v320
      %v349 = vpack.c.b16 %v323, %v322
      %v350 = vpack.c.b16 %v325, %v324
      %v351 = vpack.c.b16 %v327, %v326
      %v352 = vpack.c.b16 %v329, %v328
      %v353 = vpack.c.b16 %v331, %v330
      %v354 = vpack.c.b16 %v333, %v332
      %v355 = vpack.c.b16 %v335, %v334
      %vm376 = vcmask 523264
      %v378 = vsel %vm376, %v248, 0
      %v381 = vsel %vm376, %v251, 0
      %383 = vmatprep.subr.bf16.mxu0 0
      %384 = vmatpush1.bf16.msra.mxu0 %v336
      %385 = vmatprep.subr.bf16.mxu0 0
      %386 = vmatpush1.bf16.msra.mxu0 %v337
      %387 = vmatprep.subr.bf16.mxu0 0
      %388 = vmatpush1.bf16.msra.mxu0 %v338
      %389 = vmatprep.subr.bf16.mxu0 0
      %390 = vmatpush1.bf16.msra.mxu0 %v339
      %391 = vmatprep.subr.bf16.mxu0 0
      %392 = vmatpush1.bf16.msra.mxu0 %v340
      %393 = vmatprep.subr.bf16.mxu0 0
      %394 = vmatpush1.bf16.msra.mxu0 %v341
      %395 = vmatprep.subr.bf16.mxu0 0
      %396 = vmatpush1.bf16.msra.mxu0 %v342
      %397 = vmatprep.subr.bf16.mxu0 0
      %398 = vmatpush1.bf16.msra.mxu0 %v343
      %399 = vmatprep.subr.bf16.mxu0 0
      %400 = vmatpush1.bf16.msra.mxu0 %v344
      %401 = vmatprep.subr.bf16.mxu0 0
      %402 = vmatpush1.bf16.msra.mxu0 %v345
      %403 = vmatprep.subr.bf16.mxu0 0
      %404 = vmatpush1.bf16.msra.mxu0 %v346
      %405 = vmatprep.subr.bf16.mxu0 0
      %406 = vmatpush1.bf16.msra.mxu0 %v347
      %407 = vmatprep.subr.bf16.mxu0 0
      %408 = vmatpush1.bf16.msra.mxu0 %v348
      %409 = vmatprep.subr.bf16.mxu0 0
      %410 = vmatpush1.bf16.msra.mxu0 %v349
      %411 = vmatprep.subr.bf16.mxu0 0
      %412 = vmatpush1.bf16.msra.mxu0 %v350
      %413 = vmatprep.subr.bf16.mxu0 0
      %414 = vmatpush1.bf16.msra.mxu0 %v351
      %415 = vmatprep.mubr.bf16.mxu0 %v247
      %416 = vmatmul.mubr.bf16.gmra.mrb[0].mxu0 %v246
      %v417 = vpop.f32.mrb[0].mxu0
      %v418 = vadd.f32 %v229, %v417
      %v419 = vpop.f32.mrb[0].mxu0
      %v420 = vpop.f32.mrb[0].mxu0
      %v421 = vadd.f32 %v229, %v420
      %v422 = vpop.f32.mrb[0].mxu0
      %423 = vmatprep.mubr.bf16.mxu0 %v250
      %424 = vmatmul.mubr.bf16.gmra.mrb[0].mxu0 %v249
      %v425 = vpop.f32.mrb[0].mxu0
      %v426 = vadd.f32 %v229, %v425
      %v427 = vpop.f32.mrb[0].mxu0
      %v428 = vpop.f32.mrb[0].mxu0
      %v429 = vpop.f32.mrb[0].mxu0
      %430 = vdwg.mxu0
      %431 = vmatprep.subr.bf16.mxu0 0
      %432 = vmatpush1.bf16.msra.mxu0 %v352
      %433 = vmatprep.subr.bf16.mxu0 0
      %434 = vmatpush1.bf16.msra.mxu0 %v353
      %435 = vmatprep.subr.bf16.mxu0 0
      %436 = vmatpush1.bf16.msra.mxu0 %v354
      %437 = vmatprep.subr.bf16.mxu0 0
      %438 = vmatpush1.bf16.msra.mxu0 %v355
      %439 = vmatprep.subr.bf16.mxu0 0
      %440 = vmatpush1.bf16.msra.mxu0 0
      %441 = vmatprep.subr.bf16.mxu0 0
      %442 = vmatpush1.bf16.msra.mxu0 0
      %443 = vmatprep.subr.bf16.mxu0 0
      %444 = vmatpush1.bf16.msra.mxu0 0
      %445 = vmatprep.subr.bf16.mxu0 0
      %446 = vmatpush1.bf16.msra.mxu0 0
      %447 = vmatprep.subr.bf16.mxu0 0
      %448 = vmatpush1.bf16.msra.mxu0 0
      %449 = vmatprep.subr.bf16.mxu0 0
      %450 = vmatpush1.bf16.msra.mxu0 0
      %451 = vmatprep.subr.bf16.mxu0 0
      %452 = vmatpush1.bf16.msra.mxu0 0
      %453 = vmatprep.subr.bf16.mxu0 0
      %454 = vmatpush1.bf16.msra.mxu0 0
      %455 = vmatprep.subr.bf16.mxu0 0
      %456 = vmatpush1.bf16.msra.mxu0 0
      %457 = vmatprep.subr.bf16.mxu0 0
      %458 = vmatpush1.bf16.msra.mxu0 0
      %459 = vmatprep.subr.bf16.mxu0 0
      %460 = vmatpush1.bf16.msra.mxu0 0
      %461 = vmatprep.subr.bf16.mxu0 0
      %462 = vmatpush1.bf16.msra.mxu0 0
      %463 = vmatprep.mubr.bf16.mxu0 0
      %464 = vmatmul.mubr.bf16.gmra.mrb[0].mxu0 %v378
      %v465 = vpop.f32.mrb[0].mxu0
      %v466 = vadd.f32 %v418, %v465
      %v467 = vpop.f32.mrb[0].mxu0
      %v468 = vpop.f32.mrb[0].mxu0
      %v469 = vadd.f32 %v421, %v468
      %v470 = vpop.f32.mrb[0].mxu0
      %471 = vmatprep.mubr.bf16.mxu0 0
      %472 = vmatmul.mubr.bf16.gmra.mrb[0].mxu0 %v381
      %v473 = vpop.f32.mrb[0].mxu0
      %v474 = vadd.f32 %v426, %v473
      %v475 = vpop.f32.mrb[0].mxu0
      %v476 = vpop.f32.mrb[0].mxu0
      %v477 = vpop.f32.mrb[0].mxu0
      %478 = vdwg.mxu0
      %479 = vst.msk [vmem:[%s175] sm:$0xff] %vm376, %v466
      %480 = vst.msk [vmem:[%s175 + $0x8] sm:$0xff] %vm376, %v469
      %481 = vst.msk [vmem:[%s175 + $0x10] sm:$0xff] %vm376, %v474
      %s482 = smul.u32 3, %s14
      %p483 = scmp.lt.s32.totalorder %s482, 5
      %s484 = scalar_select %p483, %s482, 5
      %s485 = smul.addr %s484, 8
      %s486 = scalar_lea.vmem %s3, %s485
      // Predicated region
      $region33: #{_lambda_.9} parent=31 // pred_check
        %p487 = pneg %p100
      $region34: #{_lambda_.9} parent=31 // pred_check_branch
        %489 = sbr.rel (%p487) target = $region36
      $region35: #{_lambda_.9} parent=31 // pred_region
        %s490 = smul.u32 3, %s14
      $region36: #{_lambda_.9} parent=31 // pred_fallthru
        _
    $region32: #{_lambda_.9} parent=5 // pred_fallthru
      _
    %p491 = scmp.le.s32.totalorder 2, %s9
    // Predicated region
    $region37: #{_lambda_.9} parent=5 // pred_check
      %p492 = pneg %p491
    $region38: #{_lambda_.9} parent=5 // pred_check_branch
      %494 = sbr.rel (%p492) target = $region40
    $region39: #{_lambda_.9} parent=5 // pred_region
      %s495 = ssub.s32 %s9, 2
      // Predicated region
      $region41: #{_lambda_.9} parent=39 // pred_check
        %p496 = pneg %p106
      $region42: #{_lambda_.9} parent=39 // pred_check_branch
        %498 = sbr.rel (%p496) target = $region44
      $region43: #{_lambda_.9} parent=39 // pred_region
        %s499 = smul.u32 3, %s15
        %p500 = scmp.lt.s32.totalorder %s499, 5
        %s501 = scalar_select %p500, %s499, 5
        %s502 = smul.addr %s501, 8
        %s503 = scalar_lea.vmem %s3, %s502
      $region44: #{_lambda_.9} parent=39 // pred_fallthru
        _
    $region40: #{_lambda_.9} parent=5 // pred_fallthru
      _
  $region6: #{_lambda_.9} parent=0 // loop_footer
    %s13 = sadd.s32 1, %s9
  $region7: #{_lambda_.9} parent=0 // loop_footer_branch
    %8 = sbr.rel target = $region3
  $region8: #{_lambda_.9} parent=0 // loop_exit
    _

// kernel: tile.83
$region0: #{tile.83}
  %s0 = inlined_call_operand.vmem [shape: bf16[22,2,64], index: 0, kind: input, shape index: {}]
  %s1 = inlined_call_operand.vmem [shape: bf16[22,128], index: 1, kind: output, shape index: {}]
  $region1: #{tile.83} parent=0
    #allocation0 [shape = 'u8[12288]{0}', space=vmem, size = 0x3000, scoped, tag = 'scoped mem for output reshape']
    #allocation1 [shape = 'u8[90112]{0}', space=vmem, size = 0x16000, scoped, tag = 'scoped mem for input reshape']
    %s3 = smul.u32 1, 2
    %s4 = sshllo.u32 0, %s3
    %s5 = smul.addr 1, 21
    %s6 = scalar_lea.vmem %s0, %s5
    %s7 = sshrl.u32 %s4, 1
    %s8 = sor.u32 %s4, %s7
    %s9 = sand.u32 %s8, 85
    %s10 = sshrl.u32 %s9, 1
    %s11 = sor.u32 %s9, %s10
    %s12 = sand.u32 51, %s11
    %s13 = sshrl.u32 %s12, 2
    %s14 = sor.u32 %s12, %s13
    %s15 = sand.u32 15, %s14
    %v16 = vld [vmem:[%s6] sm:%s15]
    %v17 = vunpack.c.l.bf16 %v16
    %v18 = vunpack.c.h.bf16 %v16
    %s19 = scalar_lea.vmem [#allocation1], 168
    %20 = vst [vmem:[%s19] sm:%s4] %v17
    %s21 = smul.addr 1, 20
    %s22 = scalar_lea.vmem %s0, %s21
    %s23 = sshrl.u32 %s4, 1
    %s24 = sor.u32 %s4, %s23
    %s25 = sand.u32 %s24, 85
    %s26 = sshrl.u32 %s25, 1
    %s27 = sor.u32 %s25, %s26
    %s28 = sand.u32 51, %s27
    %s29 = sshrl.u32 %s28, 2
    %s30 = sor.u32 %s28, %s29
    %s31 = sand.u32 15, %s30
    %v32 = vld [vmem:[%s22] sm:%s31]
    %v33 = vunpack.c.l.bf16 %v32
    %v34 = vunpack.c.h.bf16 %v32
    %s35 = scalar_lea.vmem [#allocation1], 160
    %36 = vst [vmem:[%s35] sm:%s4] %v33
    %s37 = smul.addr 1, 19
    %s38 = scalar_lea.vmem %s0, %s37
    %s39 = sshrl.u32 %s4, 1
    %s40 = sor.u32 %s4, %s39
    %s41 = sand.u32 %s40, 85
    %s42 = sshrl.u32 %s41, 1
    %s43 = sor.u32 %s41, %s42
    %s44 = sand.u32 51, %s43
    %s45 = sshrl.u32 %s44, 2
    %s46 = sor.u32 %s44, %s45
    %s47 = sand.u32 15, %s46
    %v48 = vld [vmem:[%s38] sm:%s47]
    %v49 = vunpack.c.l.bf16 %v48
    %v50 = vunpack.c.h.bf16 %v48
    %s51 = scalar_lea.vmem [#allocation1], 152
    %52 = vst [vmem:[%s51] sm:%s4] %v49
    %s53 = smul.addr 1, 18
    %s54 = scalar_lea.vmem %s0, %s53
    %s55 = sshrl.u32 %s4, 1
    %s56 = sor.u32 %s4, %s55
    %s57 = sand.u32 %s56, 85
    %s58 = sshrl.u32 %s57, 1
    %s59 = sor.u32 %s57, %s58
    %s60 = sand.u32 51, %s59
    %s61 = sshrl.u32 %s60, 2
    %s62 = sor.u32 %s60, %s61
    %s63 = sand.u32 15, %s62
    %v64 = vld [vmem:[%s54] sm:%s63]
    %v65 = vunpack.c.l.bf16 %v64
    %v66 = vunpack.c.h.bf16 %v64
    %s67 = scalar_lea.vmem [#allocation1], 144
    %68 = vst [vmem:[%s67] sm:%s4] %v65
    %s69 = smul.addr 1, 17
    %s70 = scalar_lea.vmem %s0, %s69
    %s71 = sshrl.u32 %s4, 1
    %s72 = sor.u32 %s4, %s71
    %s73 = sand.u32 %s72, 85
    %s74 = sshrl.u32 %s73, 1
    %s75 = sor.u32 %s73, %s74
    %s76 = sand.u32 51, %s75
    %s77 = sshrl.u32 %s76, 2
    %s78 = sor.u32 %s76, %s77
    %s79 = sand.u32 15, %s78
    %v80 = vld [vmem:[%s70] sm:%s79]
    %v81 = vunpack.c.l.bf16 %v80
    %v82 = vunpack.c.h.bf16 %v80
    %s83 = scalar_lea.vmem [#allocation1], 136
    %84 = vst [vmem:[%s83] sm:%s4] %v81
    %s85 = smul.addr 1, 16
    %s86 = scalar_lea.vmem %s0, %s85
    %s87 = sshrl.u32 %s4, 1
    %s88 = sor.u32 %s4, %s87
    %s89 = sand.u32 %s88, 85
    %s90 = sshrl.u32 %s89, 1
    %s91 = sor.u32 %s89, %s90
    %s92 = sand.u32 51, %s91
    %s93 = sshrl.u32 %s92, 2
    %s94 = sor.u32 %s92, %s93
    %s95 = sand.u32 15, %s94
    %v96 = vld [vmem:[%s86] sm:%s95]
    %v97 = vunpack.c.l.bf16 %v96
    %v98 = vunpack.c.h.bf16 %v96
    %s99 = scalar_lea.vmem [#allocation1], 128
    %100 = vst [vmem:[%s99] sm:%s4] %v97
    %s101 = smul.addr 1, 15
    %s102 = scalar_lea.vmem %s0, %s101
    %s103 = sshrl.u32 %s4, 1
    %s104 = sor.u32 %s4, %s103
    %s105 = sand.u32 %s104, 85
    %s106 = sshrl.u32 %s105, 1
    %s107 = sor.u32 %s105, %s106
    %s108 = sand.u32 51, %s107
    %s109 = sshrl.u32 %s108, 2
    %s110 = sor.u32 %s108, %s109
    %s111 = sand.u32 15, %s110
    %v112 = vld [vmem:[%s102] sm:%s111]
    %v113 = vunpack.c.l.bf16 %v112
    %v114 = vunpack.c.h.bf16 %v112
    %s115 = scalar_lea.vmem [#allocation1], 120
    %116 = vst [vmem:[%s115] sm:%s4] %v113
    %s117 = smul.addr 1, 14
    %s118 = scalar_lea.vmem %s0, %s117
    %s119 = sshrl.u32 %s4, 1
    %s120 = sor.u32 %s4, %s119
    %s121 = sand.u32 %s120, 85
    %s122 = sshrl.u32 %s121, 1
    %s123 = sor.u32 %s121, %s122
    %s124 = sand.u32 51, %s123
    %s125 = sshrl.u32 %s124, 2
    %s126 = sor.u32 %s124, %s125
    %s127 = sand.u32 15, %s126
    %v128 = vld [vmem:[%s118] sm:%s127]
    %v129 = vunpack.c.l.bf16 %v128
    %v130 = vunpack.c.h.bf16 %v128
    %s131 = scalar_lea.vmem [#allocation1], 112
    %132 = vst [vmem:[%s131] sm:%s4] %v129
    %s133 = smul.addr 1, 13
    %s134 = scalar_lea.vmem %s0, %s133
    %s135 = sshrl.u32 %s4, 1
    %s136 = sor.u32 %s4, %s135
    %s137 = sand.u32 %s136, 85
    %s138 = sshrl.u32 %s137, 1
    %s139 = sor.u32 %s137, %s138
    %s140 = sand.u32 51, %s139
    %s141 = sshrl.u32 %s140, 2
    %s142 = sor.u32 %s140, %s141
    %s143 = sand.u32 15, %s142
    %v144 = vld [vmem:[%s134] sm:%s143]
    %v145 = vunpack.c.l.bf16 %v144
    %v146 = vunpack.c.h.bf16 %v144
    %s147 = scalar_lea.vmem [#allocation1], 104
    %148 = vst [vmem:[%s147] sm:%s4] %v145
    %s149 = smul.addr 1, 12
    %s150 = scalar_lea.vmem %s0, %s149
    %s151 = sshrl.u32 %s4, 1
    %s152 = sor.u32 %s4, %s151
    %s153 = sand.u32 %s152, 85
    %s154 = sshrl.u32 %s153, 1
    %s155 = sor.u32 %s153, %s154
    %s156 = sand.u32 51, %s155
    %s157 = sshrl.u32 %s156, 2
    %s158 = sor.u32 %s156, %s157
    %s159 = sand.u32 15, %s158
    %v160 = vld [vmem:[%s150] sm:%s159]
    %v161 = vunpack.c.l.bf16 %v160
    %v162 = vunpack.c.h.bf16 %v160
    %s163 = scalar_lea.vmem [#allocation1], 96
    %164 = vst [vmem:[%s163] sm:%s4] %v161
    %s165 = smul.addr 1, 11
    %s166 = scalar_lea.vmem %s0, %s165
    %s167 = sshrl.u32 %s4, 1
    %s168 = sor.u32 %s4, %s167
    %s169 = sand.u32 %s168, 85
    %s170 = sshrl.u32 %s169, 1
    %s171 = sor.u32 %s169, %s170
    %s172 = sand.u32 51, %s171
    %s173 = sshrl.u32 %s172, 2
    %s174 = sor.u32 %s172, %s173
    %s175 = sand.u32 15, %s174
    %v176 = vld [vmem:[%s166] sm:%s175]
    %v177 = vunpack.c.l.bf16 %v176
    %v178 = vunpack.c.h.bf16 %v176
    %s179 = scalar_lea.vmem [#allocation1], 88
    %180 = vst [vmem:[%s179] sm:%s4] %v177
    %s181 = smul.addr 1, 10
    %s182 = scalar_lea.vmem %s0, %s181
    %s183 = sshrl.u32 %s4, 1
    %s184 = sor.u32 %s4, %s183
    %s185 = sand.u32 %s184, 85
    %s186 = sshrl.u32 %s185, 1
    %s187 = sor.u32 %s185, %s186
    %s188 = sand.u32 51, %s187
    %s189 = sshrl.u32 %s188, 2
    %s190 = sor.u32 %s188, %s189
    %s191 = sand.u32 15, %s190
    %v192 = vld [vmem:[%s182] sm:%s191]
    %v193 = vunpack.c.l.bf16 %v192
    %v194 = vunpack.c.h.bf16 %v192
    %s195 = scalar_lea.vmem [#allocation1], 80
    %196 = vst [vmem:[%s195] sm:%s4] %v193
    %s197 = smul.addr 1, 9
    %s198 = scalar_lea.vmem %s0, %s197
    %s199 = sshrl.u32 %s4, 1
    %s200 = sor.u32 %s4, %s199
    %s201 = sand.u32 %s200, 85
    %s202 = sshrl.u32 %s201, 1
    %s203 = sor.u32 %s201, %s202
    %s204 = sand.u32 51, %s203
    %s205 = sshrl.u32 %s204, 2
    %s206 = sor.u32 %s204, %s205
    %s207 = sand.u32 15, %s206
    %v208 = vld [vmem:[%s198] sm:%s207]
    %v209 = vunpack.c.l.bf16 %v208
    %v210 = vunpack.c.h.bf16 %v208
    %s211 = scalar_lea.vmem [#allocation1], 72
    %212 = vst [vmem:[%s211] sm:%s4] %v209
    %s213 = smul.addr 1, 8
    %s214 = scalar_lea.vmem %s0, %s213
    %s215 = sshrl.u32 %s4, 1
    %s216 = sor.u32 %s4, %s215
    %s217 = sand.u32 %s216, 85
    %s218 = sshrl.u32 %s217, 1
    %s219 = sor.u32 %s217, %s218
    %s220 = sand.u32 51, %s219
    %s221 = sshrl.u32 %s220, 2
    %s222 = sor.u32 %s220, %s221
    %s223 = sand.u32 15, %s222
    %v224 = vld [vmem:[%s214] sm:%s223]
    %v225 = vunpack.c.l.bf16 %v224
    %v226 = vunpack.c.h.bf16 %v224
    %s227 = scalar_lea.vmem [#allocation1], 64
    %228 = vst [vmem:[%s227] sm:%s4] %v225
    %s229 = smul.addr 1, 7
    %s230 = scalar_lea.vmem %s0, %s229
    %s231 = sshrl.u32 %s4, 1
    %s232 = sor.u32 %s4, %s231
    %s233 = sand.u32 %s232, 85
    %s234 = sshrl.u32 %s233, 1
    %s235 = sor.u32 %s233, %s234
    %s236 = sand.u32 51, %s235
    %s237 = sshrl.u32 %s236, 2
    %s238 = sor.u32 %s236, %s237
    %s239 = sand.u32 15, %s238
    %v240 = vld [vmem:[%s230] sm:%s239]
    %v241 = vunpack.c.l.bf16 %v240
    %v242 = vunpack.c.h.bf16 %v240
    %s243 = scalar_lea.vmem [#allocation1], 56
    %244 = vst [vmem:[%s243] sm:%s4] %v241
    %s245 = smul.addr 1, 6
    %s246 = scalar_lea.vmem %s0, %s245
    %s247 = sshrl.u32 %s4, 1
    %s248 = sor.u32 %s4, %s247
    %s249 = sand.u32 %s248, 85
    %s250 = sshrl.u32 %s249, 1
    %s251 = sor.u32 %s249, %s250
    %s252 = sand.u32 51, %s251
    %s253 = sshrl.u32 %s252, 2
    %s254 = sor.u32 %s252, %s253
    %s255 = sand.u32 15, %s254
    %v256 = vld [vmem:[%s246] sm:%s255]
    %v257 = vunpack.c.l.bf16 %v256
    %v258 = vunpack.c.h.bf16 %v256
    %s259 = scalar_lea.vmem [#allocation1], 48
    %260 = vst [vmem:[%s259] sm:%s4] %v257
    %s261 = smul.addr 1, 5
    %s262 = scalar_lea.vmem %s0, %s261
    %s263 = sshrl.u32 %s4, 1
    %s264 = sor.u32 %s4, %s263
    %s265 = sand.u32 %s264, 85
    %s266 = sshrl.u32 %s265, 1
    %s267 = sor.u32 %s265, %s266
    %s268 = sand.u32 51, %s267
    %s269 = sshrl.u32 %s268, 2
    %s270 = sor.u32 %s268, %s269
    %s271 = sand.u32 15, %s270
    %v272 = vld [vmem:[%s262] sm:%s271]
    %v273 = vunpack.c.l.bf16 %v272
    %v274 = vunpack.c.h.bf16 %v272
    %s275 = scalar_lea.vmem [#allocation1], 40
    %276 = vst [vmem:[%s275] sm:%s4] %v273
    %s277 = smul.addr 1, 4
    %s278 = scalar_lea.vmem %s0, %s277
    %s279 = sshrl.u32 %s4, 1
    %s280 = sor.u32 %s4, %s279
    %s281 = sand.u32 %s280, 85
    %s282 = sshrl.u32 %s281, 1
    %s283 = sor.u32 %s281, %s282
    %s284 = sand.u32 51, %s283
    %s285 = sshrl.u32 %s284, 2
    %s286 = sor.u32 %s284, %s285
    %s287 = sand.u32 15, %s286
    %v288 = vld [vmem:[%s278] sm:%s287]
    %v289 = vunpack.c.l.bf16 %v288
    %v290 = vunpack.c.h.bf16 %v288
    %s291 = scalar_lea.vmem [#allocation1], 32
    %292 = vst [vmem:[%s291] sm:%s4] %v289
    %s293 = smul.addr 1, 3
    %s294 = scalar_lea.vmem %s0, %s293
    %s295 = sshrl.u32 %s4, 1
    %s296 = sor.u32 %s4, %s295
    %s297 = sand.u32 %s296, 85
    %s298 = sshrl.u32 %s297, 1
    %s299 = sor.u32 %s297, %s298
    %s300 = sand.u32 51, %s299
    %s301 = sshrl.u32 %s300, 2
    %s302 = sor.u32 %s300, %s301
    %s303 = sand.u32 15, %s302
    %v304 = vld [vmem:[%s294] sm:%s303]
    %v305 = vunpack.c.l.bf16 %v304
    %v306 = vunpack.c.h.bf16 %v304
    %s307 = scalar_lea.vmem [#allocation1], 24
    %308 = vst [vmem:[%s307] sm:%s4] %v305
    %s309 = smul.addr 1, 2
    %s310 = scalar_lea.vmem %s0, %s309
    %s311 = sshrl.u32 %s4, 1
    %s312 = sor.u32 %s4, %s311
    %s313 = sand.u32 %s312, 85
    %s314 = sshrl.u32 %s313, 1
    %s315 = sor.u32 %s313, %s314
    %s316 = sand.u32 51, %s315
    %s317 = sshrl.u32 %s316, 2
    %s318 = sor.u32 %s316, %s317
    %s319 = sand.u32 15, %s318
    %v320 = vld [vmem:[%s310] sm:%s319]
    %v321 = vunpack.c.l.bf16 %v320
    %v322 = vunpack.c.h.bf16 %v320
    %s323 = scalar_lea.vmem [#allocation1], 16
    %324 = vst [vmem:[%s323] sm:%s4] %v321
    %s325 = scalar_lea.vmem %s0, 1
    %s326 = sshrl.u32 %s4, 1
    %s327 = sor.u32 %s4, %s326
    %s328 = sand.u32 %s327, 85
    %s329 = sshrl.u32 %s328, 1
    %s330 = sor.u32 %s328, %s329
    %s331 = sand.u32 51, %s330
    %s332 = sshrl.u32 %s331, 2
    %s333 = sor.u32 %s331, %s332
    %s334 = sand.u32 15, %s333
    %v335 = vld [vmem:[%s325] sm:%s334]
    %v336 = vunpack.c.l.bf16 %v335
    %v337 = vunpack.c.h.bf16 %v335
    %s338 = scalar_lea.vmem [#allocation1], 8
    %339 = vst [vmem:[%s338] sm:%s4] %v336
    %s340 = sshrl.u32 %s4, 1
    %s341 = sor.u32 %s4, %s340
    %s342 = sand.u32 %s341, 85
    %s343 = sshrl.u32 %s342, 1
    %s344 = sor.u32 %s342, %s343
    %s345 = sand.u32 51, %s344
    %s346 = sshrl.u32 %s345, 2
    %s347 = sor.u32 %s345, %s346
    %s348 = sand.u32 15, %s347
    %v349 = vld [vmem:[%s0] sm:%s348]
    %v350 = vunpack.c.l.bf16 %v349
    %v351 = vunpack.c.h.bf16 %v349
    %352 = vst [vmem:[#allocation1] sm:%s4] %v350
    %v353 = vld [vmem:[#allocation1] ss:$8 sm:$0xf]
    %v354 = vld [vmem:[#allocation1] ss:$8 sm:$0xf0]
    %vm355 = vcmask 1047556
    %v356 = vsel %vm355, %v354, %v353
    %vm357 = vcmask 523264
    %358 = vst.msk [vmem:[#allocation0] sm:$0xff] %vm357, %v356
    %s359 = scalar_lea.vmem [#allocation1], 64
    %v360 = vld [vmem:[%s359] ss:$8 sm:$0xf]
    %s361 = scalar_lea.vmem [#allocation1], 64
    %v362 = vld [vmem:[%s361] ss:$8 sm:$0xf0]
    %vm363 = vcmask 1047556
    %v364 = vsel %vm363, %v362, %v360
    %vm365 = vcmask 523264
    %s366 = scalar_lea.vmem [#allocation0], 8
    %367 = vst.msk [vmem:[%s366] sm:$0xff] %vm365, %v364
    %s368 = scalar_lea.vmem [#allocation1], 128
    %v369 = vld [vmem:[%s368] ss:$8 sm:$0xf]
    %s370 = scalar_lea.vmem [#allocation1], 128
    %s371 = smov 48
    %v372 = vld [vmem:[%s370] ss:$8 sm:%s371]
    %vm373 = vcmask 1045508
    %v374 = vsel %vm373, %v372, %v369
    %vm375 = vcmask 523264
    %s376 = scalar_lea.vmem [#allocation0], 16
    %377 = vst.msk [vmem:[%s376] sm:$0x3f] %vm375, %v374
    %s378 = scalar_lea.vmem [#allocation1], 1
    %v379 = vld [vmem:[%s378] ss:$8 sm:$0xf]
    %s380 = scalar_lea.vmem [#allocation1], 1
    %v381 = vld [vmem:[%s380] ss:$8 sm:$0xf0]
    %vm382 = vcmask 1047556
    %v383 = vsel %vm382, %v381, %v379
    %384 = vrot.lane.b32.xlu0 %v383, 64
    %v385 = vpop.permute.xlu0 %384
    %vm386 = vcmask 1048064
    %387 = vst.msk [vmem:[#allocation0] sm:$0xff] %vm386, %v385
    %s388 = scalar_lea.vmem [#allocation1], 65
    %v389 = vld [vmem:[%s388] ss:$8 sm:$0xf]
    %s390 = scalar_lea.vmem [#allocation1], 65
    %v391 = vld [vmem:[%s390] ss:$8 sm:$0xf0]
    %vm392 = vcmask 1047556
    %v393 = vsel %vm392, %v391, %v389
    %394 = vrot.lane.b32.xlu0 %v393, 64
    %v395 = vpop.permute.xlu0 %394
    %vm396 = vcmask 1048064
    %s397 = scalar_lea.vmem [#allocation0], 8
    %398 = vst.msk [vmem:[%s397] sm:$0xff] %vm396, %v395
    %s399 = scalar_lea.vmem [#allocation1], 129
    %v400 = vld [vmem:[%s399] ss:$8 sm:$0xf]
    %s401 = scalar_lea.vmem [#allocation1], 129
    %s402 = smov 48
    %v403 = vld [vmem:[%s401] ss:$8 sm:%s402]
    %vm404 = vcmask 1045508
    %v405 = vsel %vm404, %v403, %v400
    %406 = vrot.lane.b32.xlu0 %v405, 64
    %v407 = vpop.permute.xlu0 %406
    %vm408 = vcmask 1048064
    %s409 = scalar_lea.vmem [#allocation0], 16
    %410 = vst.msk [vmem:[%s409] sm:$0x3f] %vm408, %v407
    %s412 = smul.u32 4, 2
    %s413 = sshllo.u32 0, %s412
    %s414 = sshrl.u32 %s412, 1
    %v415 = vld [vmem:[#allocation0] sm:%s413]
    %v416 = vpack.c.bf16 0.0, %v415
    %s417 = sshllo.u32 0, %s414
    %418 = vst [vmem:[%s1] sm:%s417] %v416
    %s419 = scalar_lea.vmem [#allocation0], 8
    %v420 = vld [vmem:[%s419] sm:%s413]
    %v421 = vpack.c.bf16 0.0, %v420
    %s422 = sshllo.u32 0, %s414
    %s423 = scalar_lea.vmem %s1, 4
    %424 = vst [vmem:[%s423] sm:%s422] %v421
    %s425 = scalar_lea.vmem [#allocation0], 16
    %v426 = vld [vmem:[%s425] sm:%s413]
    %v427 = vpack.c.bf16 0.0, %v426
    %s428 = sshllo.u32 0, %s414
    %s429 = smul.addr 4, 2
    %s430 = scalar_lea.vmem %s1, %s429
    %431 = vst [vmem:[%s430] sm:%s428] %v427

// kernel: _lambda_.12
$region0: #{_lambda_.12}
  #allocation0 [shape = 'u32[]', space=smem, size = 0x4, offset = 0x4, fixed_abs, tag = 'smem constant byte address 0x4 - core index']
  #allocation1 [shape = 'u32[144,128]{1,0:T(1,128)}', space=vmem, size = 0x12000, scoped, tag = 'internal scratch']
  %s0 = inlined_call_operand.vmem [shape: bf16[24,128], index: 0, kind: input, shape index: {}]
  %s1 = inlined_call_operand.vmem [shape: bf16[128,128], index: 1, kind: input, shape index: {}]
  %s2 = inlined_call_operand.vmem [shape: bf16[3,128,64], index: 2, kind: input, shape index: {}]
  %s3 = inlined_call_operand.vmem [shape: f32[1,64], index: 3, kind: input, shape index: {}]
  %s4 = inlined_call_operand.vmem [shape: f32[24,64], index: 4, kind: output, shape index: {}]
  %s5 = sld [smem:[#allocation0]]
  $region26: #{_lambda_.12} parent=0
    _
  %s7 = ssub.s32 1, %s5
  %s8 = scalar_select 0, %s7, %s5
  // Predicated region
  $region2: #{_lambda_.12} parent=0 // pred_check
    _
  $region3: #{_lambda_.12} parent=0 // pred_check_branch
    %10 = sbr.rel (0) target = $region5
  $region4: #{_lambda_.12} parent=0 // pred_region
    _
  $region5: #{_lambda_.12} parent=0 // pred_fallthru
    _
  // Predicated region
  $region6: #{_lambda_.12} parent=0 // pred_check
    _
  $region7: #{_lambda_.12} parent=0 // pred_check_branch
    %12 = sbr.rel (0) target = $region9
  $region8: #{_lambda_.12} parent=0 // pred_region
    _
  $region9: #{_lambda_.12} parent=0 // pred_fallthru
    _
  // Predicated region
  $region10: #{_lambda_.12} parent=0 // pred_check
    _
  $region11: #{_lambda_.12} parent=0 // pred_check_branch
    %14 = sbr.rel (0) target = $region13
  $region12: #{_lambda_.12} parent=0 // pred_region
    _
  $region13: #{_lambda_.12} parent=0 // pred_fallthru
    _
  // Predicated region
  $region14: #{_lambda_.12} parent=0 // pred_check
    _
  $region15: #{_lambda_.12} parent=0 // pred_check_branch
    %16 = sbr.rel (0) target = $region17
  $region16: #{_lambda_.12} parent=0 // pred_region
    _
  $region17: #{_lambda_.12} parent=0 // pred_fallthru
    _
  %v18 = vld [vmem:[%s0] sm:$0xf]
  %v19 = vld [vmem:[%s0 + $0x4] sm:$0xf]
  %v20 = vld [vmem:[%s0 + $0x8] sm:$0xf]
  %v21 = vunpack.c.l.bf16 %v18
  %v22 = vunpack.c.l.bf16 %v19
  %v23 = vunpack.c.l.bf16 %v20
  %v24 = vld [vmem:[%s2] sm:$0xf]
  %v25 = vld [vmem:[%s2 + $0x4] sm:$0xf]
  %v26 = vld [vmem:[%s2 + $0x8] sm:$0xf]
  %v27 = vld [vmem:[%s2 + $0xc] sm:$0xf]
  %v28 = vld [vmem:[%s2 + $0x10] sm:$0xf]
  %v29 = vld [vmem:[%s2 + $0x14] sm:$0xf]
  %v30 = vld [vmem:[%s2 + $0x18] sm:$0xf]
  %v31 = vld [vmem:[%s2 + $0x1c] sm:$0xf]
  %v32 = vld [vmem:[%s2 + $0x20] sm:$0xf]
  %v33 = vld [vmem:[%s2 + $0x24] sm:$0xf]
  %v34 = vld [vmem:[%s2 + $0x28] sm:$0xf]
  %v35 = vld [vmem:[%s2 + $0x2c] sm:$0xf]
  %v36 = vld [vmem:[%s2 + $0x30] sm:$0xf]
  %v37 = vld [vmem:[%s2 + $0x34] sm:$0xf]
  %v38 = vld [vmem:[%s2 + $0x38] sm:$0xf]
  %v39 = vld [vmem:[%s2 + $0x3c] sm:$0xf]
  %v40 = vld [vmem:[%s1] sm:$0xf]
  %v41 = vld [vmem:[%s1 + $0x4] sm:$0xf]
  %v42 = vld [vmem:[%s1 + $0x8] sm:$0xf]
  %v43 = vld [vmem:[%s1 + $0xc] sm:$0xf]
  %v44 = vld [vmem:[%s1 + $0x10] sm:$0xf]
  %v45 = vld [vmem:[%s1 + $0x14] sm:$0xf]
  %v46 = vld [vmem:[%s1 + $0x18] sm:$0xf]
  %v47 = vld [vmem:[%s1 + $0x1c] sm:$0xf]
  %v48 = vld [vmem:[%s1 + $0x20] sm:$0xf]
  %v49 = vld [vmem:[%s1 + $0x24] sm:$0xf]
  %v50 = vld [vmem:[%s1 + $0x28] sm:$0xf]
  %v51 = vld [vmem:[%s1 + $0x2c] sm:$0xf]
  %v52 = vld [vmem:[%s1 + $0x30] sm:$0xf]
  %v53 = vld [vmem:[%s1 + $0x34] sm:$0xf]
  %v54 = vld [vmem:[%s1 + $0x38] sm:$0xf]
  %v55 = vld [vmem:[%s1 + $0x3c] sm:$0xf]
  %v56 = vmul.f32 %v21, 0.05
  %v57 = vmul.f32 %v22, 0.05
  %v58 = vmul.f32 %v23, 0.05
  %v62 = vunpack.c.l.b16 %v18
  %v63 = vunpack.c.l.b16 %v19
  %v64 = vunpack.c.l.b16 %v20
  %v65 = vpack.c.b16 %v63, %v62
  %v66 = vpack.c.b16 %v64, %v64
  %v85 = vunpack.c.l.b16 %v40
  %v86 = vunpack.c.l.b16 %v41
  %v87 = vunpack.c.l.b16 %v42
  %v88 = vunpack.c.l.b16 %v43
  %v89 = vunpack.c.l.b16 %v44
  %v90 = vunpack.c.l.b16 %v45
  %v91 = vunpack.c.l.b16 %v46
  %v92 = vunpack.c.l.b16 %v47
  %v93 = vunpack.c.l.b16 %v48
  %v94 = vunpack.c.l.b16 %v49
  %v95 = vunpack.c.l.b16 %v50
  %v96 = vunpack.c.l.b16 %v51
  %v97 = vunpack.c.l.b16 %v52
  %v98 = vunpack.c.l.b16 %v53
  %v99 = vunpack.c.l.b16 %v54
  %v100 = vunpack.c.l.b16 %v55
  %v101 = vpack.c.b16 %v86, %v85
  %v102 = vpack.c.b16 %v88, %v87
  %v103 = vpack.c.b16 %v90, %v89
  %v104 = vpack.c.b16 %v92, %v91
  %v105 = vpack.c.b16 %v94, %v93
  %v106 = vpack.c.b16 %v96, %v95
  %v107 = vpack.c.b16 %v98, %v97
  %v108 = vpack.c.b16 %v100, %v99
  %117 = vmatprep.subr.bf16.mxu0 0
  %118 = vmatpush1.bf16.msra.mxu0 %v101
  %119 = vmatprep.subr.bf16.mxu0 0
  %120 = vmatpush1.bf16.msra.mxu0 %v102
  %121 = vmatprep.subr.bf16.mxu0 0
  %122 = vmatpush1.bf16.msra.mxu0 %v103
  %123 = vmatprep.subr.bf16.mxu0 0
  %124 = vmatpush1.bf16.msra.mxu0 %v104
  %125 = vmatprep.subr.bf16.mxu0 0
  %126 = vmatpush1.bf16.msra.mxu0 %v105
  %127 = vmatprep.subr.bf16.mxu0 0
  %128 = vmatpush1.bf16.msra.mxu0 %v106
  %129 = vmatprep.subr.bf16.mxu0 0
  %130 = vmatpush1.bf16.msra.mxu0 %v107
  %131 = vmatprep.subr.bf16.mxu0 0
  %132 = vmatpush1.bf16.msra.mxu0 %v108
  %133 = vmatprep.subr.bf16.mxu0 0
  %134 = vmatpush1.bf16.msra.mxu0 0
  %135 = vmatprep.subr.bf16.mxu0 0
  %136 = vmatpush1.bf16.msra.mxu0 0
  %137 = vmatprep.subr.bf16.mxu0 0
  %138 = vmatpush1.bf16.msra.mxu0 0
  %139 = vmatprep.subr.bf16.mxu0 0
  %140 = vmatpush1.bf16.msra.mxu0 0
  %141 = vmatprep.subr.bf16.mxu0 0
  %142 = vmatpush1.bf16.msra.mxu0 0
  %143 = vmatprep.subr.bf16.mxu0 0
  %144 = vmatpush1.bf16.msra.mxu0 0
  %145 = vmatprep.subr.bf16.mxu0 0
  %146 = vmatpush1.bf16.msra.mxu0 0
  %147 = vmatprep.subr.bf16.mxu0 0
  %148 = vmatpush1.bf16.msra.mxu0 0
  %149 = vmatprep.mubr.bf16.mxu0 0
  %150 = vmatmul.mubr.bf16.gmra.mrb[0].mxu0 %v65
  %v151 = vpop.f32.mrb[0].mxu0
  %v152 = vadd.f32 0.0, %v151
  %v153 = vpop.f32.mrb[0].mxu0
  %v154 = vpop.f32.mrb[0].mxu0
  %v155 = vadd.f32 0.0, %v154
  %v156 = vpop.f32.mrb[0].mxu0
  %157 = vmatprep.mubr.bf16.mxu0 0
  %158 = vmatmul.mubr.bf16.gmra.mrb[0].mxu0 %v66
  %v159 = vpop.f32.mrb[0].mxu0
  %v160 = vadd.f32 0.0, %v159
  %v161 = vpop.f32.mrb[0].mxu0
  %v162 = vpop.f32.mrb[0].mxu0
  %v163 = vpop.f32.mrb[0].mxu0
  %164 = vdwg.mxu0
  %v165 = vmul.f32 %v152, 0.95
  %v166 = vmul.f32 %v155, 0.95
  %v167 = vmul.f32 %v160, 0.95
  %v168 = vadd.f32 %v56, %v165
  %v169 = vadd.f32 %v57, %v166
  %v170 = vadd.f32 %v58, %v167
  %v171 = vpack.c.bf16 %v169, %v168
  %v172 = vpack.c.bf16 %v170, %v170
  %s173 = scalar_lea.vmem %s2, 64
  %v174 = vld [vmem:[%s173] sm:$0xf]
  %v175 = vld [vmem:[%s173 + $0x4] sm:$0xf]
  %v176 = vld [vmem:[%s173 + $0x8] sm:$0xf]
  %v177 = vld [vmem:[%s173 + $0xc] sm:$0xf]
  %v178 = vld [vmem:[%s173 + $0x10] sm:$0xf]
  %v179 = vld [vmem:[%s173 + $0x14] sm:$0xf]
  %v180 = vld [vmem:[%s173 + $0x18] sm:$0xf]
  %v181 = vld [vmem:[%s173 + $0x1c] sm:$0xf]
  %v182 = vld [vmem:[%s173 + $0x20] sm:$0xf]
  %v183 = vld [vmem:[%s173 + $0x24] sm:$0xf]
  %v184 = vld [vmem:[%s173 + $0x28] sm:$0xf]
  %v185 = vld [vmem:[%s173 + $0x2c] sm:$0xf]
  %v186 = vld [vmem:[%s173 + $0x30] sm:$0xf]
  %v187 = vld [vmem:[%s173 + $0x34] sm:$0xf]
  %v188 = vld [vmem:[%s173 + $0x38] sm:$0xf]
  %v189 = vld [vmem:[%s173 + $0x3c] sm:$0xf]
  %v206 = vunpack.c.l.b16 %v174
  %v207 = vunpack.c.l.b16 %v175
  %v208 = vunpack.c.l.b16 %v176
  %v209 = vunpack.c.l.b16 %v177
  %v210 = vunpack.c.l.b16 %v178
  %v211 = vunpack.c.l.b16 %v179
  %v212 = vunpack.c.l.b16 %v180
  %v213 = vunpack.c.l.b16 %v181
  %v214 = vunpack.c.l.b16 %v182
  %v215 = vunpack.c.l.b16 %v183
  %v216 = vunpack.c.l.b16 %v184
  %v217 = vunpack.c.l.b16 %v185
  %v218 = vunpack.c.l.b16 %v186
  %v219 = vunpack.c.l.b16 %v187
  %v220 = vunpack.c.l.b16 %v188
  %v221 = vunpack.c.l.b16 %v189
  %v222 = vpack.c.b16 %v207, %v206
  %v223 = vpack.c.b16 %v209, %v208
  %v224 = vpack.c.b16 %v211, %v210
  %v225 = vpack.c.b16 %v213, %v212
  %v226 = vpack.c.b16 %v215, %v214
  %v227 = vpack.c.b16 %v217, %v216
  %v228 = vpack.c.b16 %v219, %v218
  %v229 = vpack.c.b16 %v221, %v220
  %238 = vmatprep.subr.bf16.mxu0 0
  %239 = vmatpush1.bf16.msra.mxu0 %v222
  %240 = vmatprep.subr.bf16.mxu0 0
  %241 = vmatpush1.bf16.msra.mxu0 %v223
  %242 = vmatprep.subr.bf16.mxu0 0
  %243 = vmatpush1.bf16.msra.mxu0 %v224
  %244 = vmatprep.subr.bf16.mxu0 0
  %245 = vmatpush1.bf16.msra.mxu0 %v225
  %246 = vmatprep.subr.bf16.mxu0 0
  %247 = vmatpush1.bf16.msra.mxu0 %v226
  %248 = vmatprep.subr.bf16.mxu0 0
  %249 = vmatpush1.bf16.msra.mxu0 %v227
  %250 = vmatprep.subr.bf16.mxu0 0
  %251 = vmatpush1.bf16.msra.mxu0 %v228
  %252 = vmatprep.subr.bf16.mxu0 0
  %253 = vmatpush1.bf16.msra.mxu0 %v229
  %254 = vmatprep.subr.bf16.mxu0 0
  %255 = vmatpush1.bf16.msra.mxu0 0
  %256 = vmatprep.subr.bf16.mxu0 0
  %257 = vmatpush1.bf16.msra.mxu0 0
  %258 = vmatprep.subr.bf16.mxu0 0
  %259 = vmatpush1.bf16.msra.mxu0 0
  %260 = vmatprep.subr.bf16.mxu0 0
  %261 = vmatpush1.bf16.msra.mxu0 0
  %262 = vmatprep.subr.bf16.mxu0 0
  %263 = vmatpush1.bf16.msra.mxu0 0
  %264 = vmatprep.subr.bf16.mxu0 0
  %265 = vmatpush1.bf16.msra.mxu0 0
  %266 = vmatprep.subr.bf16.mxu0 0
  %267 = vmatpush1.bf16.msra.mxu0 0
  %268 = vmatprep.subr.bf16.mxu0 0
  %269 = vmatpush1.bf16.msra.mxu0 0
  %270 = vmatprep.mubr.bf16.mxu0 0
  %271 = vmatmul.mubr.bf16.gmra.mrb[0].mxu0 %v171
  %v272 = vpop.f32.mrb[0].mxu0
  %v273 = vadd.f32 0.0, %v272
  %v274 = vpop.f32.mrb[0].mxu0
  %v275 = vpop.f32.mrb[0].mxu0
  %v276 = vadd.f32 0.0, %v275
  %v277 = vpop.f32.mrb[0].mxu0
  %278 = vmatprep.mubr.bf16.mxu0 0
  %279 = vmatmul.mubr.bf16.gmra.mrb[0].mxu0 %v172
  %v280 = vpop.f32.mrb[0].mxu0
  %v281 = vadd.f32 0.0, %v280
  %v282 = vpop.f32.mrb[0].mxu0
  %v283 = vpop.f32.mrb[0].mxu0
  %v284 = vpop.f32.mrb[0].mxu0
  %285 = vdwg.mxu0
  %v302 = vunpack.c.l.b16 %v24
  %v303 = vunpack.c.l.b16 %v25
  %v304 = vunpack.c.l.b16 %v26
  %v305 = vunpack.c.l.b16 %v27
  %v306 = vunpack.c.l.b16 %v28
  %v307 = vunpack.c.l.b16 %v29
  %v308 = vunpack.c.l.b16 %v30
  %v309 = vunpack.c.l.b16 %v31
  %v310 = vunpack.c.l.b16 %v32
  %v311 = vunpack.c.l.b16 %v33
  %v312 = vunpack.c.l.b16 %v34
  %v313 = vunpack.c.l.b16 %v35
  %v314 = vunpack.c.l.b16 %v36
  %v315 = vunpack.c.l.b16 %v37
  %v316 = vunpack.c.l.b16 %v38
  %v317 = vunpack.c.l.b16 %v39
  %v318 = vpack.c.b16 %v303, %v302
  %v319 = vpack.c.b16 %v305, %v304
  %v320 = vpack.c.b16 %v307, %v306
  %v321 = vpack.c.b16 %v309, %v308
  %v322 = vpack.c.b16 %v311, %v310
  %v323 = vpack.c.b16 %v313, %v312
  %v324 = vpack.c.b16 %v315, %v314
  %v325 = vpack.c.b16 %v317, %v316
  %334 = vmatprep.subr.bf16.mxu0 0
  %335 = vmatpush1.bf16.msra.mxu0 %v318
  %336 = vmatprep.subr.bf16.mxu0 0
  %337 = vmatpush1.bf16.msra.mxu0 %v319
  %338 = vmatprep.subr.bf16.mxu0 0
  %339 = vmatpush1.bf16.msra.mxu0 %v320
  %340 = vmatprep.subr.bf16.mxu0 0
  %341 = vmatpush1.bf16.msra.mxu0 %v321
  %342 = vmatprep.subr.bf16.mxu0 0
  %343 = vmatpush1.bf16.msra.mxu0 %v322
  %344 = vmatprep.subr.bf16.mxu0 0
  %345 = vmatpush1.bf16.msra.mxu0 %v323
  %346 = vmatprep.subr.bf16.mxu0 0
  %347 = vmatpush1.bf16.msra.mxu0 %v324
  %348 = vmatprep.subr.bf16.mxu0 0
  %349 = vmatpush1.bf16.msra.mxu0 %v325
  %350 = vmatprep.subr.bf16.mxu0 0
  %351 = vmatpush1.bf16.msra.mxu0 0
  %352 = vmatprep.subr.bf16.mxu0 0
  %353 = vmatpush1.bf16.msra.mxu0 0
  %354 = vmatprep.subr.bf16.mxu0 0
  %355 = vmatpush1.bf16.msra.mxu0 0
  %356 = vmatprep.subr.bf16.mxu0 0
  %357 = vmatpush1.bf16.msra.mxu0 0
  %358 = vmatprep.subr.bf16.mxu0 0
  %359 = vmatpush1.bf16.msra.mxu0 0
  %360 = vmatprep.subr.bf16.mxu0 0
  %361 = vmatpush1.bf16.msra.mxu0 0
  %362 = vmatprep.subr.bf16.mxu0 0
  %363 = vmatpush1.bf16.msra.mxu0 0
  %364 = vmatprep.subr.bf16.mxu0 0
  %365 = vmatpush1.bf16.msra.mxu0 0
  %366 = vmatprep.mubr.bf16.mxu0 0
  %367 = vmatmul.mubr.bf16.gmra.mrb[0].mxu0 %v65
  %v368 = vpop.f32.mrb[0].mxu0
  %v369 = vadd.f32 %v273, %v368
  %v370 = vpop.f32.mrb[0].mxu0
  %v371 = vpop.f32.mrb[0].mxu0
  %v372 = vadd.f32 %v276, %v371
  %v373 = vpop.f32.mrb[0].mxu0
  %374 = vmatprep.mubr.bf16.mxu0 0
  %375 = vmatmul.mubr.bf16.gmra.mrb[0].mxu0 %v66
  %v376 = vpop.f32.mrb[0].mxu0
  %v377 = vadd.f32 %v281, %v376
  %v378 = vpop.f32.mrb[0].mxu0
  %v379 = vpop.f32.mrb[0].mxu0
  %v380 = vpop.f32.mrb[0].mxu0
  %381 = vdwg.mxu0
  %382 = vmatprep.subr.bf16.mxu0 0
  %383 = vmatpush1.bf16.msra.mxu0 %v101
  %384 = vmatprep.subr.bf16.mxu0 0
  %385 = vmatpush1.bf16.msra.mxu0 %v102
  %386 = vmatprep.subr.bf16.mxu0 0
  %387 = vmatpush1.bf16.msra.mxu0 %v103
  %388 = vmatprep.subr.bf16.mxu0 0
  %389 = vmatpush1.bf16.msra.mxu0 %v104
  %390 = vmatprep.subr.bf16.mxu0 0
  %391 = vmatpush1.bf16.msra.mxu0 %v105
  %392 = vmatprep.subr.bf16.mxu0 0
  %393 = vmatpush1.bf16.msra.mxu0 %v106
  %394 = vmatprep.subr.bf16.mxu0 0
  %395 = vmatpush1.bf16.msra.mxu0 %v107
  %396 = vmatprep.subr.bf16.mxu0 0
  %397 = vmatpush1.bf16.msra.mxu0 %v108
  %398 = vmatprep.subr.bf16.mxu0 0
  %399 = vmatpush1.bf16.msra.mxu0 0
  %400 = vmatprep.subr.bf16.mxu0 0
  %401 = vmatpush1.bf16.msra.mxu0 0
  %402 = vmatprep.subr.bf16.mxu0 0
  %403 = vmatpush1.bf16.msra.mxu0 0
  %404 = vmatprep.subr.bf16.mxu0 0
  %405 = vmatpush1.bf16.msra.mxu0 0
  %406 = vmatprep.subr.bf16.mxu0 0
  %407 = vmatpush1.bf16.msra.mxu0 0
  %408 = vmatprep.subr.bf16.mxu0 0
  %409 = vmatpush1.bf16.msra.mxu0 0
  %410 = vmatprep.subr.bf16.mxu0 0
  %411 = vmatpush1.bf16.msra.mxu0 0
  %412 = vmatprep.subr.bf16.mxu0 0
  %413 = vmatpush1.bf16.msra.mxu0 0
  %414 = vmatprep.mubr.bf16.mxu0 0
  %415 = vmatmul.mubr.bf16.gmra.mrb[0].mxu0 %v171
  %v416 = vpop.f32.mrb[0].mxu0
  %v417 = vadd.f32 0.0, %v416
  %v418 = vpop.f32.mrb[0].mxu0
  %v419 = vpop.f32.mrb[0].mxu0
  %v420 = vadd.f32 0.0, %v419
  %v421 = vpop.f32.mrb[0].mxu0
  %422 = vmatprep.mubr.bf16.mxu0 0
  %423 = vmatmul.mubr.bf16.gmra.mrb[0].mxu0 %v172
  %v424 = vpop.f32.mrb[0].mxu0
  %v425 = vadd.f32 0.0, %v424
  %v426 = vpop.f32.mrb[0].mxu0
  %v427 = vpop.f32.mrb[0].mxu0
  %v428 = vpop.f32.mrb[0].mxu0
  %429 = vdwg.mxu0
  %v430 = vmul.f32 %v417, 0.95
  %v431 = vmul.f32 %v420, 0.95
  %v432 = vmul.f32 %v425, 0.95
  %v433 = vadd.f32 %v56, %v430
  %v434 = vadd.f32 %v57, %v431
  %v435 = vadd.f32 %v58, %v432
  %v436 = vpack.c.bf16 %v434, %v433
  %v437 = vpack.c.bf16 %v435, %v435
  %s438 = scalar_lea.vmem %s2, 128
  %v439 = vld [vmem:[%s438] sm:$0xf]
  %v440 = vld [vmem:[%s438 + $0x4] sm:$0xf]
  %v441 = vld [vmem:[%s438 + $0x8] sm:$0xf]
  %v442 = vld [vmem:[%s438 + $0xc] sm:$0xf]
  %v443 = vld [vmem:[%s438 + $0x10] sm:$0xf]
  %v444 = vld [vmem:[%s438 + $0x14] sm:$0xf]
  %v445 = vld [vmem:[%s438 + $0x18] sm:$0xf]
  %v446 = vld [vmem:[%s438 + $0x1c] sm:$0xf]
  %v447 = vld [vmem:[%s438 + $0x20] sm:$0xf]
  %v448 = vld [vmem:[%s438 + $0x24] sm:$0xf]
  %v449 = vld [vmem:[%s438 + $0x28] sm:$0xf]
  %v450 = vld [vmem:[%s438 + $0x2c] sm:$0xf]
  %v451 = vld [vmem:[%s438 + $0x30] sm:$0xf]
  %v452 = vld [vmem:[%s438 + $0x34] sm:$0xf]
  %v453 = vld [vmem:[%s438 + $0x38] sm:$0xf]
  %v454 = vld [vmem:[%s438 + $0x3c] sm:$0xf]
  %v471 = vunpack.c.l.b16 %v439
  %v472 = vunpack.c.l.b16 %v440
  %v473 = vunpack.c.l.b16 %v441
  %v474 = vunpack.c.l.b16 %v442
  %v475 = vunpack.c.l.b16 %v443
  %v476 = vunpack.c.l.b16 %v444
  %v477 = vunpack.c.l.b16 %v445
  %v478 = vunpack.c.l.b16 %v446
  %v479 = vunpack.c.l.b16 %v447
  %v480 = vunpack.c.l.b16 %v448
  %v481 = vunpack.c.l.b16 %v449
  %v482 = vunpack.c.l.b16 %v450
  %v483 = vunpack.c.l.b16 %v451
  %v484 = vunpack.c.l.b16 %v452
  %v485 = vunpack.c.l.b16 %v453
  %v486 = vunpack.c.l.b16 %v454
  %v487 = vpack.c.b16 %v472, %v471
  %v488 = vpack.c.b16 %v474, %v473
  %v489 = vpack.c.b16 %v476, %v475
  %v490 = vpack.c.b16 %v478, %v477
  %v491 = vpack.c.b16 %v480, %v479
  %v492 = vpack.c.b16 %v482, %v481
  %v493 = vpack.c.b16 %v484, %v483
  %v494 = vpack.c.b16 %v486, %v485
  %503 = vmatprep.subr.bf16.mxu0 0
  %504 = vmatpush1.bf16.msra.mxu0 %v487
  %505 = vmatprep.subr.bf16.mxu0 0
  %506 = vmatpush1.bf16.msra.mxu0 %v488
  %507 = vmatprep.subr.bf16.mxu0 0
  %508 = vmatpush1.bf16.msra.mxu0 %v489
  %509 = vmatprep.subr.bf16.mxu0 0
  %510 = vmatpush1.bf16.msra.mxu0 %v490
  %511 = vmatprep.subr.bf16.mxu0 0
  %512 = vmatpush1.bf16.msra.mxu0 %v491
  %513 = vmatprep.subr.bf16.mxu0 0
  %514 = vmatpush1.bf16.msra.mxu0 %v492
  %515 = vmatprep.subr.bf16.mxu0 0
  %516 = vmatpush1.bf16.msra.mxu0 %v493
  %517 = vmatprep.subr.bf16.mxu0 0
  %518 = vmatpush1.bf16.msra.mxu0 %v494
  %519 = vmatprep.subr.bf16.mxu0 0
  %520 = vmatpush1.bf16.msra.mxu0 0
  %521 = vmatprep.subr.bf16.mxu0 0
  %522 = vmatpush1.bf16.msra.mxu0 0
  %523 = vmatprep.subr.bf16.mxu0 0
  %524 = vmatpush1.bf16.msra.mxu0 0
  %525 = vmatprep.subr.bf16.mxu0 0
  %526 = vmatpush1.bf16.msra.mxu0 0
  %527 = vmatprep.subr.bf16.mxu0 0
  %528 = vmatpush1.bf16.msra.mxu0 0
  %529 = vmatprep.subr.bf16.mxu0 0
  %530 = vmatpush1.bf16.msra.mxu0 0
  %531 = vmatprep.subr.bf16.mxu0 0
  %532 = vmatpush1.bf16.msra.mxu0 0
  %533 = vmatprep.subr.bf16.mxu0 0
  %534 = vmatpush1.bf16.msra.mxu0 0
  %535 = vmatprep.mubr.bf16.mxu0 0
  %536 = vmatmul.mubr.bf16.gmra.mrb[0].mxu0 %v436
  %v537 = vpop.f32.mrb[0].mxu0
  %v538 = vadd.f32 0.0, %v537
  %v539 = vpop.f32.mrb[0].mxu0
  %v540 = vpop.f32.mrb[0].mxu0
  %v541 = vadd.f32 0.0, %v540
  %v542 = vpop.f32.mrb[0].mxu0
  %543 = vmatprep.mubr.bf16.mxu0 0
  %544 = vmatmul.mubr.bf16.gmra.mrb[0].mxu0 %v437
  %v545 = vpop.f32.mrb[0].mxu0
  %v546 = vadd.f32 0.0, %v545
  %v547 = vpop.f32.mrb[0].mxu0
  %v548 = vpop.f32.mrb[0].mxu0
  %v549 = vpop.f32.mrb[0].mxu0
  %550 = vdwg.mxu0
  %v551 = vadd.f32 %v369, %v538
  %v552 = vadd.f32 %v372, %v541
  %v553 = vadd.f32 %v377, %v546
  %v554 = vld [vmem:[%s3] sm:$0x1]
  %v556 = vlaneseq
  %v557 = vshrl.u32 %v556, 7
  %v558 = vsub.s32 0, %v557
  %v559 = vrot.slane %v554, %v558
  %v561 = vadd.f32 %v551, %v559
  %v562 = vadd.f32 %v552, %v559
  %v563 = vadd.f32 %v553, %v559
  %vm564 = vcmask 523264
  %565 = vst.msk [vmem:[%s4] sm:$0xff] %vm564, %v561
  %566 = vst.msk [vmem:[%s4 + $0x8] sm:$0xff] %vm564, %v562
  %567 = vst.msk [vmem:[%s4 + $0x10] sm:$0xff] %vm564, %v563
  // Predicated region
  $region18: #{_lambda_.12} parent=0 // pred_check
    _
  $region19: #{_lambda_.12} parent=0 // pred_check_branch
    %569 = sbr.rel (0) target = $region21
  $region20: #{_lambda_.12} parent=0 // pred_region
    _
  $region21: #{_lambda_.12} parent=0 // pred_fallthru
    _
  // Predicated region
  $region22: #{_lambda_.12} parent=0 // pred_check
    _
  $region23: #{_lambda_.12} parent=0 // pred_check_branch
    %571 = sbr.rel (0) target = $region25
  $region24: #{_lambda_.12} parent=0 // pred_region
    _
  $region25: #{_lambda_.12} parent=0 // pred_fallthru
    _

// kernel: _lambda_.13
$region0: #{_lambda_.13}
  #allocation0 [shape = 'u32[]', space=smem, size = 0x4, offset = 0x4, fixed_abs, tag = 'smem constant byte address 0x4 - core index']
  #allocation1 [shape = 'u32[144,128]{1,0:T(1,128)}', space=vmem, size = 0x12000, scoped, tag = 'internal scratch']
  %s0 = inlined_call_operand.vmem [shape: bf16[24,192], index: 0, kind: input, shape index: {}]
  %s1 = inlined_call_operand.vmem [shape: bf16[192,32], index: 1, kind: input, shape index: {}]
  %s2 = inlined_call_operand.vmem [shape: f32[1,32], index: 2, kind: input, shape index: {}]
  %s3 = inlined_call_operand.vmem [shape: f32[24,32], index: 3, kind: output, shape index: {}]
  %s4 = sld [smem:[#allocation0]]
  $region22: #{_lambda_.13} parent=0
    _
  %s6 = ssub.s32 1, %s4
  %s7 = scalar_select 0, %s6, %s4
  // Predicated region
  $region2: #{_lambda_.13} parent=0 // pred_check
    _
  $region3: #{_lambda_.13} parent=0 // pred_check_branch
    %9 = sbr.rel (0) target = $region5
  $region4: #{_lambda_.13} parent=0 // pred_region
    _
  $region5: #{_lambda_.13} parent=0 // pred_fallthru
    _
  // Predicated region
  $region6: #{_lambda_.13} parent=0 // pred_check
    _
  $region7: #{_lambda_.13} parent=0 // pred_check_branch
    %11 = sbr.rel (0) target = $region9
  $region8: #{_lambda_.13} parent=0 // pred_region
    _
  $region9: #{_lambda_.13} parent=0 // pred_fallthru
    _
  // Predicated region
  $region10: #{_lambda_.13} parent=0 // pred_check
    _
  $region11: #{_lambda_.13} parent=0 // pred_check_branch
    %13 = sbr.rel (0) target = $region13
  $region12: #{_lambda_.13} parent=0 // pred_region
    _
  $region13: #{_lambda_.13} parent=0 // pred_fallthru
    _
  %v15 = vld [vmem:[%s0] sm:$0xff]
  %v16 = vld [vmem:[%s0 + $0x8] sm:$0xff]
  %v17 = vld [vmem:[%s0 + $0x10] sm:$0xff]
  %v18 = vld [vmem:[%s1] sm:$0xf]
  %v19 = vld [vmem:[%s1 + $0x4] sm:$0xf]
  %v20 = vld [vmem:[%s1 + $0x8] sm:$0xf]
  %v21 = vld [vmem:[%s1 + $0xc] sm:$0xf]
  %v22 = vld [vmem:[%s1 + $0x10] sm:$0xf]
  %v23 = vld [vmem:[%s1 + $0x14] sm:$0xf]
  %v24 = vld [vmem:[%s1 + $0x18] sm:$0xf]
  %v25 = vld [vmem:[%s1 + $0x1c] sm:$0xf]
  %v26 = vld [vmem:[%s1 + $0x20] sm:$0xf]
  %v27 = vld [vmem:[%s1 + $0x24] sm:$0xf]
  %v28 = vld [vmem:[%s1 + $0x28] sm:$0xf]
  %v29 = vld [vmem:[%s1 + $0x2c] sm:$0xf]
  %v30 = vld [vmem:[%s1 + $0x30] sm:$0xf]
  %v31 = vld [vmem:[%s1 + $0x34] sm:$0xf]
  %v32 = vld [vmem:[%s1 + $0x38] sm:$0xf]
  %v33 = vld [vmem:[%s1 + $0x3c] sm:$0xf]
  %v34 = vld [vmem:[%s1 + $0x40] sm:$0xf]
  %v35 = vld [vmem:[%s1 + $0x44] sm:$0xf]
  %v36 = vld [vmem:[%s1 + $0x48] sm:$0xf]
  %v37 = vld [vmem:[%s1 + $0x4c] sm:$0xf]
  %v38 = vld [vmem:[%s1 + $0x50] sm:$0xf]
  %v39 = vld [vmem:[%s1 + $0x54] sm:$0xf]
  %v40 = vld [vmem:[%s1 + $0x58] sm:$0xf]
  %v41 = vld [vmem:[%s1 + $0x5c] sm:$0xf]
  %v42 = vld [vmem:[%s2] sm:$0x1]
  %v44 = vlaneseq
  %v45 = vshrl.u32 %v44, 7
  %v46 = vsub.s32 0, %v45
  %v47 = vrot.slane %v42, %v46
  %v52 = vunpack.c.l.b16 %v15
  %v53 = vunpack.c.h.b16 %v15
  %v54 = vunpack.c.l.b16 %v16
  %v55 = vunpack.c.h.b16 %v16
  %v56 = vunpack.c.l.b16 %v17
  %v57 = vunpack.c.h.b16 %v17
  %v58 = vpack.c.b16 %v54, %v52
  %v59 = vpack.c.b16 %v55, %v53
  %v60 = vpack.c.b16 %v56, %v56
  %v61 = vpack.c.b16 %v57, %v57
  %v88 = vunpack.c.l.b16 %v18
  %v89 = vunpack.c.l.b16 %v19
  %v90 = vunpack.c.l.b16 %v20
  %v91 = vunpack.c.l.b16 %v21
  %v92 = vunpack.c.l.b16 %v22
  %v93 = vunpack.c.l.b16 %v23
  %v94 = vunpack.c.l.b16 %v24
  %v95 = vunpack.c.l.b16 %v25
  %v96 = vunpack.c.l.b16 %v26
  %v97 = vunpack.c.l.b16 %v27
  %v98 = vunpack.c.l.b16 %v28
  %v99 = vunpack.c.l.b16 %v29
  %v100 = vunpack.c.l.b16 %v30
  %v101 = vunpack.c.l.b16 %v31
  %v102 = vunpack.c.l.b16 %v32
  %v103 = vunpack.c.l.b16 %v33
  %v104 = vunpack.c.l.b16 %v34
  %v105 = vunpack.c.l.b16 %v35
  %v106 = vunpack.c.l.b16 %v36
  %v107 = vunpack.c.l.b16 %v37
  %v108 = vunpack.c.l.b16 %v38
  %v109 = vunpack.c.l.b16 %v39
  %v110 = vunpack.c.l.b16 %v40
  %v111 = vunpack.c.l.b16 %v41
  %v112 = vpack.c.b16 %v89, %v88
  %v113 = vpack.c.b16 %v91, %v90
  %v114 = vpack.c.b16 %v93, %v92
  %v115 = vpack.c.b16 %v95, %v94
  %v116 = vpack.c.b16 %v97, %v96
  %v117 = vpack.c.b16 %v99, %v98
  %v118 = vpack.c.b16 %v101, %v100
  %v119 = vpack.c.b16 %v103, %v102
  %v120 = vpack.c.b16 %v105, %v104
  %v121 = vpack.c.b16 %v107, %v106
  %v122 = vpack.c.b16 %v109, %v108
  %v123 = vpack.c.b16 %v111, %v110
  %vm136 = vcmask 523264
  %v138 = vsel %vm136, %v59, 0
  %v141 = vsel %vm136, %v61, 0
  %143 = vmatprep.subr.bf16.mxu0 0
  %144 = vmatpush1.bf16.msra.mxu0 %v112
  %145 = vmatprep.subr.bf16.mxu0 0
  %146 = vmatpush1.bf16.msra.mxu0 %v113
  %147 = vmatprep.subr.bf16.mxu0 0
  %148 = vmatpush1.bf16.msra.mxu0 %v114
  %149 = vmatprep.subr.bf16.mxu0 0
  %150 = vmatpush1.bf16.msra.mxu0 %v115
  %151 = vmatprep.subr.bf16.mxu0 0
  %152 = vmatpush1.bf16.msra.mxu0 %v116
  %153 = vmatprep.subr.bf16.mxu0 0
  %154 = vmatpush1.bf16.msra.mxu0 %v117
  %155 = vmatprep.subr.bf16.mxu0 0
  %156 = vmatpush1.bf16.msra.mxu0 %v118
  %157 = vmatprep.subr.bf16.mxu0 0
  %158 = vmatpush1.bf16.msra.mxu0 %v119
  %159 = vmatprep.subr.bf16.mxu0 0
  %160 = vmatpush1.bf16.msra.mxu0 %v120
  %161 = vmatprep.subr.bf16.mxu0 0
  %162 = vmatpush1.bf16.msra.mxu0 %v121
  %163 = vmatprep.subr.bf16.mxu0 0
  %164 = vmatpush1.bf16.msra.mxu0 %v122
  %165 = vmatprep.subr.bf16.mxu0 0
  %166 = vmatpush1.bf16.msra.mxu0 %v123
  %167 = vmatprep.subr.bf16.mxu0 0
  %168 = vmatpush1.bf16.msra.mxu0 0
  %169 = vmatprep.subr.bf16.mxu0 0
  %170 = vmatpush1.bf16.msra.mxu0 0
  %171 = vmatprep.subr.bf16.mxu0 0
  %172 = vmatpush1.bf16.msra.mxu0 0
  %173 = vmatprep.subr.bf16.mxu0 0
  %174 = vmatpush1.bf16.msra.mxu0 0
  %175 = vmatprep.mubr.bf16.mxu0 %v138
  %176 = vmatmul.mubr.bf16.gmra.mrb[0].mxu0 %v58
  %v177 = vpop.f32.mrb[0].mxu0
  %v178 = vadd.f32 %v47, %v177
  %v179 = vpop.f32.mrb[0].mxu0
  %v180 = vpop.f32.mrb[0].mxu0
  %v181 = vadd.f32 %v47, %v180
  %v182 = vpop.f32.mrb[0].mxu0
  %183 = vmatprep.mubr.bf16.mxu0 %v141
  %184 = vmatmul.mubr.bf16.gmra.mrb[0].mxu0 %v60
  %v185 = vpop.f32.mrb[0].mxu0
  %v186 = vadd.f32 %v47, %v185
  %v187 = vpop.f32.mrb[0].mxu0
  %v188 = vpop.f32.mrb[0].mxu0
  %v189 = vpop.f32.mrb[0].mxu0
  %190 = vdwg.mxu0
  %vm191 = vcmask 261120
  %192 = vst.msk [vmem:[%s3] sm:$0xff] %vm191, %v178
  %193 = vst.msk [vmem:[%s3 + $0x8] sm:$0xff] %vm191, %v181
  %194 = vst.msk [vmem:[%s3 + $0x10] sm:$0xff] %vm191, %v186
  // Predicated region
  $region14: #{_lambda_.13} parent=0 // pred_check
    _
  $region15: #{_lambda_.13} parent=0 // pred_check_branch
    %196 = sbr.rel (0) target = $region17
  $region16: #{_lambda_.13} parent=0 // pred_region
    _
  $region17: #{_lambda_.13} parent=0 // pred_fallthru
    _
  // Predicated region
  $region18: #{_lambda_.13} parent=0 // pred_check
    _
  $region19: #{_lambda_.13} parent=0 // pred_check_branch
    %198 = sbr.rel (0) target = $region21
  $region20: #{_lambda_.13} parent=0 // pred_region
    _
  $region21: #{_lambda_.13} parent=0 // pred_fallthru
    _

</llo_original>
